<compile_context>
chip_gen: v5e
topology: v5e:2x2
jax: 0.10.0
libtpu: 0.0.40
codegen_flags: <defaults>
</compile_context>

<pallas_src>
import functools
from typing import NamedTuple

import numpy as np

import jax
import jax.numpy as jnp
from jax.experimental import pallas as pl
from jax.experimental.pallas import tpu as pltpu

KW = 4            # conv kernel size
PADW = 1          # conv padding
NEG_SLOPE = 0.2   # LeakyReLU slope
BN_EPS = 1e-5
# bf16 MXU inputs (f32 accumulate) on all generations; jnp.float32 -> PyTorch parity.
MATMUL_DTYPE = jnp.bfloat16


class LayerMeta(NamedTuple):
    use_bn: bool
    use_act: bool
    count: int     # N * Ho * Wo (BatchNorm population size)
    ho: int
    wo: int
    cout: int


# ----------------------------------------------------------------------------
# In-kernel helpers
# ----------------------------------------------------------------------------
def _mm(a, b):
    """Conv matmul: bf16 inputs + f32 accumulation (or full-f32 parity mode)."""
    if MATMUL_DTYPE == jnp.float32:
        return jnp.dot(a.astype(jnp.float32), b.astype(jnp.float32),
                       preferred_element_type=jnp.float32,
                       precision=jax.lax.Precision.HIGHEST)
    return jnp.dot(a.astype(MATMUL_DTYPE), b.astype(MATMUL_DTYPE),
                   preferred_element_type=jnp.float32)


def _stat_mm(a, b):
    """BatchNorm statistic fold/expand matmuls: exact 0/1 matrices, kept in f32."""
    return jnp.dot(a, b, preferred_element_type=jnp.float32)


# ----------------------------------------------------------------------------
# Single fused kernel: the whole discriminator forward pass
# ----------------------------------------------------------------------------
def _discriminator_kernel(*refs, meta):
    """refs = [x2d, <per-layer constants...>, out2d].

    Activations are carried as 2-D values of shape (N*H, W*C): channels on lanes,
    flattened (batch, row) on sublanes.  Each conv layer:
        acc = sum_kh (sel[kh] @ a) @ bigw[kh]
    where sel[kh] is a 0/1 row-selection matrix (stride + zero-padding along H,
    block-diagonal over batch) and bigw[kh] is a block-banded expansion of the
    PyTorch weights (kw taps + stride + zero-padding along W + Cin->Cout).
    The result layout (N*Ho, Wo*Cout) is exactly the next layer's input layout.
    """
    x_ref, out_ref = refs[0], refs[-1]
    idx = 1
    a = x_ref[...].astype(jnp.float32)                    # (N*H0, W0*C0)

    for m in meta:
        if m.use_bn:
            (sel_ref, bigw_ref, fold_ref, expand_ref,
             gamma_ref, beta_ref) = refs[idx:idx + 6]
            idx += 6
        else:
            sel_ref, bigw_ref, brow_ref = refs[idx:idx + 3]
            idx += 3

        # --- conv: 4 row-tap matmuls (stride / padding / kw baked into constants) ---
        acc = None
        for kh in range(KW):
            rows = _mm(sel_ref[kh], a)                     # (N*Ho, W*Cin)   row gather
            part = _mm(rows, bigw_ref[kh])                 # (N*Ho, Wo*Cout)
            acc = part if acc is None else acc + part

        if m.use_bn:
            # Training-mode BatchNorm with batch statistics (biased variance), f32.
            inv_cnt = 1.0 / float(m.count)
            rsum = jnp.sum(acc, axis=0, keepdims=True)               # (1, Wo*Cout)
            mean_c = _stat_mm(rsum, fold_ref[...]) * inv_cnt         # (1, Cout)
            mean_r = _stat_mm(mean_c, expand_ref[...])               # (1, Wo*Cout)
            d = acc - mean_r
            var_c = _stat_mm(jnp.sum(d * d, axis=0, keepdims=True),
                             fold_ref[...]) * inv_cnt                # (1, Cout) biased
            scale_c = gamma_ref[...] * jax.lax.rsqrt(var_c + BN_EPS)
            shift_c = beta_ref[...] - mean_c * scale_c
            y = acc * _stat_mm(scale_c, expand_ref[...]) \
                + _stat_mm(shift_c, expand_ref[...])
        else:
            y = acc + brow_ref[...]                                   # conv bias

        if m.use_act:
            y = jnp.where(y >= 0.0, y, NEG_SLOPE * y)                 # LeakyReLU(0.2)
        a = y

    out_ref[...] = a.astype(out_ref.dtype)


# ----------------------------------------------------------------------------
# Host-side construction of the static constants (the "im2col baked into matmuls")
# ----------------------------------------------------------------------------
def make_layer_cfg(input_nc, ndf, n_layers):
    """(cin, cout, stride, use_bn, use_act) per layer; mirrors Discriminator.__init__."""
    cfg = [(input_nc, ndf, 2, False, True)]
    nf_mult = 1
    for n in range(1, n_layers):
        nf_prev, nf_mult = nf_mult, min(2 ** n, 8)
        cfg.append((ndf * nf_prev, ndf * nf_mult, 2, True, True))
    nf_prev, nf_mult = nf_mult, min(2 ** n_layers, 8)
    cfg.append((ndf * nf_prev, ndf * nf_mult, 1, True, True))
    cfg.append((ndf * nf_mult, 1, 1, False, False))
    return cfg


def build_discriminator(key, *, input_nc=1, ndf=8, n_layers=3,
                        batch=2, height=32, width=32):
    """Synthetic parameters + static kernel constants for a given (static) input size."""
    cfg = make_layer_cfg(input_nc, ndf, n_layers)
    consts, metas = [], []
    N, H, W = batch, height, width

    for (cin, cout, stride, use_bn, use_act) in cfg:
        key, k_w, k_b = jax.random.split(key, 3)
        wt = np.asarray(jax.random.normal(k_w, (cout, cin, KW, KW), jnp.float32)) * 0.05
        bias = np.asarray(jax.random.normal(k_b, (cout,), jnp.float32)) * 0.01

        ho = (H - 2) // stride + 1
        wo = (W - 2) // stride + 1

        # Row-selection matrices: sel[kh, n*ho+r, n*H+h] = 1 iff h == stride*r + kh - pad.
        # Out-of-range rows (spatial zero padding) are simply all-zero rows.
        sel = np.zeros((KW, N * ho, N * H), np.float32)
        for kh in range(KW):
            for r in range(ho):
                h = stride * r + kh - PADW
                if 0 <= h < H:
                    for n in range(N):
                        sel[kh, n * ho + r, n * H + h] = 1.0

        # Block-banded weight: bigw[kh, w*cin+ci, c*cout+co] = W_torch[co, ci, kh, kw]
        # with kw = w - stride*c + pad; folds kw taps, W-stride and W-padding into one matmul.
        bigw = np.zeros((KW, W * cin, wo * cout), np.float32)
        for kh in range(KW):
            for c in range(wo):
                for kw2 in range(KW):
                    w = stride * c + kw2 - PADW
                    if 0 <= w < W:
                        bigw[kh, w * cin:(w + 1) * cin,
                             c * cout:(c + 1) * cout] = wt[:, :, kh, kw2].T

        sel_j = jnp.asarray(sel, MATMUL_DTYPE)
        bigw_j = jnp.asarray(bigw, MATMUL_DTYPE)

        if use_bn:
            # Per-channel fold / expand between the (Wo*Cout) lane layout and (Cout).
            fold = np.tile(np.eye(cout, dtype=np.float32), (wo, 1))      # (wo*cout, cout)
            expand = np.ascontiguousarray(fold.T)                        # (cout, wo*cout)
            gamma = jnp.ones((1, cout), jnp.float32)                     # BN weight init
            beta = jnp.zeros((1, cout), jnp.float32)                     # BN bias init
            # Conv bias before BatchNorm cancels after mean subtraction -> dropped.
            consts += [sel_j, bigw_j, jnp.asarray(fold), jnp.asarray(expand), gamma, beta]
        else:
            brow = jnp.asarray(np.tile(bias, wo)[None, :], jnp.float32)  # (1, wo*cout)
            consts += [sel_j, bigw_j, brow]

        metas.append(LayerMeta(use_bn, use_act, N * ho * wo, ho, wo, cout))
        H, W = ho, wo

    return tuple(consts), tuple(metas)


# ----------------------------------------------------------------------------
# Forward wrapper: one pallas_call for the whole network
# ----------------------------------------------------------------------------
def _forward(x_nchw, consts, meta):
    N, C, H, W = x_nchw.shape
    # Boundary layout change only (tiny): NCHW -> (N*H, W*C), channels on lanes.
    x2d = jnp.transpose(x_nchw, (0, 2, 3, 1)).reshape(N * H, W * C).astype(jnp.float32)
    last = meta[-1]
    out2d = pl.pallas_call(
        functools.partial(_discriminator_kernel, meta=meta),
        out_shape=jax.ShapeDtypeStruct((N * last.ho, last.wo * last.cout), jnp.float32),
        in_specs=[pl.BlockSpec(memory_space=pltpu.MemorySpace.VMEM)] * (1 + len(consts)),
        out_specs=pl.BlockSpec(memory_space=pltpu.MemorySpace.VMEM),
    )(x2d, *consts)
    out = out2d.reshape(N, last.ho, last.wo, last.cout)
    return jnp.transpose(out, (0, 3, 1, 2))            # back to NCHW


discriminator_forward = jax.jit(_forward, static_argnums=(2,))


if __name__ == "__main__":
    key = jax.random.PRNGKey(0)
    kp, kx = jax.random.split(key)
    # Small Discriminator: input_nc=1, ndf=8, n_layers=3 (same topology as the PyTorch
    # module, scaled down), input (N=2, C=1, H=32, W=32) -> output (2, 1, 2, 2).
    consts, meta = build_discriminator(kp, input_nc=1, ndf=8, n_layers=3,
                                       batch=2, height=32, width=32)
    x = jax.random.normal(kx, (2, 1, 32, 32), jnp.float32)
    out = discriminator_forward(x, consts, meta)
    jax.block_until_ready(out)
    assert out.shape == (2, 1, 2, 2), out.shape
    assert bool(jnp.all(jnp.isfinite(out))), "non-finite output"
    print("KERNEL_OK")
</pallas_src>

<mosaic_0001>
module attributes {stable_mosaic.version = 11 : i64} {
  func.func @_discriminator_kernel(%arg0: memref<64x32xf32, #tpu.memory_space<vmem>>, %arg1: memref<4x32x64xbf16, #tpu.memory_space<vmem>>, %arg2: memref<4x32x128xbf16, #tpu.memory_space<vmem>>, %arg3: memref<1x128xf32, #tpu.memory_space<vmem>>, %arg4: memref<4x16x32xbf16, #tpu.memory_space<vmem>>, %arg5: memref<4x128x128xbf16, #tpu.memory_space<vmem>>, %arg6: memref<128x16xf32, #tpu.memory_space<vmem>>, %arg7: memref<16x128xf32, #tpu.memory_space<vmem>>, %arg8: memref<1x16xf32, #tpu.memory_space<vmem>>, %arg9: memref<1x16xf32, #tpu.memory_space<vmem>>, %arg10: memref<4x8x16xbf16, #tpu.memory_space<vmem>>, %arg11: memref<4x128x128xbf16, #tpu.memory_space<vmem>>, %arg12: memref<128x32xf32, #tpu.memory_space<vmem>>, %arg13: memref<32x128xf32, #tpu.memory_space<vmem>>, %arg14: memref<1x32xf32, #tpu.memory_space<vmem>>, %arg15: memref<1x32xf32, #tpu.memory_space<vmem>>, %arg16: memref<4x6x8xbf16, #tpu.memory_space<vmem>>, %arg17: memref<4x128x192xbf16, #tpu.memory_space<vmem>>, %arg18: memref<192x64xf32, #tpu.memory_space<vmem>>, %arg19: memref<64x192xf32, #tpu.memory_space<vmem>>, %arg20: memref<1x64xf32, #tpu.memory_space<vmem>>, %arg21: memref<1x64xf32, #tpu.memory_space<vmem>>, %arg22: memref<4x4x6xbf16, #tpu.memory_space<vmem>>, %arg23: memref<4x192x2xbf16, #tpu.memory_space<vmem>>, %arg24: memref<1x2xf32, #tpu.memory_space<vmem>>, %arg25: memref<4x2xf32, #tpu.memory_space<vmem>>) attributes {dimension_semantics = [], scalar_prefetch = 0 : i64, scratch_operands = 0 : i64, tpu.core_type = #tpu.core_type<tc>} {
    %c0 = arith.constant 0 : index
    %c0_0 = arith.constant 0 : index
    %0 = vector.load %arg0[%c0, %c0_0] : memref<64x32xf32, #tpu.memory_space<vmem>>, vector<64x32xf32>
    %c0_1 = arith.constant 0 : index
    %c0_2 = arith.constant 0 : index
    %c0_3 = arith.constant 0 : index
    %1 = vector.load %arg1[%c0_1, %c0_2, %c0_3] : memref<4x32x64xbf16, #tpu.memory_space<vmem>>, vector<1x32x64xbf16>
    %2 = vector.shape_cast %1 : vector<1x32x64xbf16> to vector<32x64xbf16>
    %3 = arith.truncf %0 : vector<64x32xf32> to vector<64x32xbf16>
    %cst = arith.constant dense<0.000000e+00> : vector<32x32xf32>
    %4 = tpu.matmul %2, %3, %cst {dimension_numbers = #tpu.dot_dimension_numbers<[1], [0], [0], [1], [0, 0, 1, 1], [], []>} : vector<32x64xbf16>, vector<64x32xbf16>, vector<32x32xf32> -> vector<32x32xf32>
    %c0_4 = arith.constant 0 : index
    %c0_5 = arith.constant 0 : index
    %c0_6 = arith.constant 0 : index
    %5 = vector.load %arg2[%c0_4, %c0_5, %c0_6] : memref<4x32x128xbf16, #tpu.memory_space<vmem>>, vector<1x32x128xbf16>
    %6 = vector.shape_cast %5 : vector<1x32x128xbf16> to vector<32x128xbf16>
    %7 = arith.truncf %4 : vector<32x32xf32> to vector<32x32xbf16>
    %cst_7 = arith.constant dense<0.000000e+00> : vector<32x128xf32>
    %8 = tpu.matmul %7, %6, %cst_7 {dimension_numbers = #tpu.dot_dimension_numbers<[1], [0], [0], [1], [0, 0, 1, 1], [], []>} : vector<32x32xbf16>, vector<32x128xbf16>, vector<32x128xf32> -> vector<32x128xf32>
    %c1 = arith.constant 1 : index
    %c0_8 = arith.constant 0 : index
    %c0_9 = arith.constant 0 : index
    %9 = vector.load %arg1[%c1, %c0_8, %c0_9] : memref<4x32x64xbf16, #tpu.memory_space<vmem>>, vector<1x32x64xbf16>
    %10 = vector.shape_cast %9 : vector<1x32x64xbf16> to vector<32x64xbf16>
    %11 = arith.truncf %0 : vector<64x32xf32> to vector<64x32xbf16>
    %cst_10 = arith.constant dense<0.000000e+00> : vector<32x32xf32>
    %12 = tpu.matmul %10, %11, %cst_10 {dimension_numbers = #tpu.dot_dimension_numbers<[1], [0], [0], [1], [0, 0, 1, 1], [], []>} : vector<32x64xbf16>, vector<64x32xbf16>, vector<32x32xf32> -> vector<32x32xf32>
    %c1_11 = arith.constant 1 : index
    %c0_12 = arith.constant 0 : index
    %c0_13 = arith.constant 0 : index
    %13 = vector.load %arg2[%c1_11, %c0_12, %c0_13] : memref<4x32x128xbf16, #tpu.memory_space<vmem>>, vector<1x32x128xbf16>
    %14 = vector.shape_cast %13 : vector<1x32x128xbf16> to vector<32x128xbf16>
    %15 = arith.truncf %12 : vector<32x32xf32> to vector<32x32xbf16>
    %cst_14 = arith.constant dense<0.000000e+00> : vector<32x128xf32>
    %16 = tpu.matmul %15, %14, %cst_14 {dimension_numbers = #tpu.dot_dimension_numbers<[1], [0], [0], [1], [0, 0, 1, 1], [], []>} : vector<32x32xbf16>, vector<32x128xbf16>, vector<32x128xf32> -> vector<32x128xf32>
    %17 = arith.addf %8, %16 : vector<32x128xf32>
    %c2 = arith.constant 2 : index
    %c0_15 = arith.constant 0 : index
    %c0_16 = arith.constant 0 : index
    %18 = vector.load %arg1[%c2, %c0_15, %c0_16] : memref<4x32x64xbf16, #tpu.memory_space<vmem>>, vector<1x32x64xbf16>
    %19 = vector.shape_cast %18 : vector<1x32x64xbf16> to vector<32x64xbf16>
    %20 = arith.truncf %0 : vector<64x32xf32> to vector<64x32xbf16>
    %cst_17 = arith.constant dense<0.000000e+00> : vector<32x32xf32>
    %21 = tpu.matmul %19, %20, %cst_17 {dimension_numbers = #tpu.dot_dimension_numbers<[1], [0], [0], [1], [0, 0, 1, 1], [], []>} : vector<32x64xbf16>, vector<64x32xbf16>, vector<32x32xf32> -> vector<32x32xf32>
    %c2_18 = arith.constant 2 : index
    %c0_19 = arith.constant 0 : index
    %c0_20 = arith.constant 0 : index
    %22 = vector.load %arg2[%c2_18, %c0_19, %c0_20] : memref<4x32x128xbf16, #tpu.memory_space<vmem>>, vector<1x32x128xbf16>
    %23 = vector.shape_cast %22 : vector<1x32x128xbf16> to vector<32x128xbf16>
    %24 = arith.truncf %21 : vector<32x32xf32> to vector<32x32xbf16>
    %cst_21 = arith.constant dense<0.000000e+00> : vector<32x128xf32>
    %25 = tpu.matmul %24, %23, %cst_21 {dimension_numbers = #tpu.dot_dimension_numbers<[1], [0], [0], [1], [0, 0, 1, 1], [], []>} : vector<32x32xbf16>, vector<32x128xbf16>, vector<32x128xf32> -> vector<32x128xf32>
    %26 = arith.addf %17, %25 : vector<32x128xf32>
    %c3 = arith.constant 3 : index
    %c0_22 = arith.constant 0 : index
    %c0_23 = arith.constant 0 : index
    %27 = vector.load %arg1[%c3, %c0_22, %c0_23] : memref<4x32x64xbf16, #tpu.memory_space<vmem>>, vector<1x32x64xbf16>
    %28 = vector.shape_cast %27 : vector<1x32x64xbf16> to vector<32x64xbf16>
    %29 = arith.truncf %0 : vector<64x32xf32> to vector<64x32xbf16>
    %cst_24 = arith.constant dense<0.000000e+00> : vector<32x32xf32>
    %30 = tpu.matmul %28, %29, %cst_24 {dimension_numbers = #tpu.dot_dimension_numbers<[1], [0], [0], [1], [0, 0, 1, 1], [], []>} : vector<32x64xbf16>, vector<64x32xbf16>, vector<32x32xf32> -> vector<32x32xf32>
    %c3_25 = arith.constant 3 : index
    %c0_26 = arith.constant 0 : index
    %c0_27 = arith.constant 0 : index
    %31 = vector.load %arg2[%c3_25, %c0_26, %c0_27] : memref<4x32x128xbf16, #tpu.memory_space<vmem>>, vector<1x32x128xbf16>
    %32 = vector.shape_cast %31 : vector<1x32x128xbf16> to vector<32x128xbf16>
    %33 = arith.truncf %30 : vector<32x32xf32> to vector<32x32xbf16>
    %cst_28 = arith.constant dense<0.000000e+00> : vector<32x128xf32>
    %34 = tpu.matmul %33, %32, %cst_28 {dimension_numbers = #tpu.dot_dimension_numbers<[1], [0], [0], [1], [0, 0, 1, 1], [], []>} : vector<32x32xbf16>, vector<32x128xbf16>, vector<32x128xf32> -> vector<32x128xf32>
    %35 = arith.addf %26, %34 : vector<32x128xf32>
    %c0_29 = arith.constant 0 : index
    %c0_30 = arith.constant 0 : index
    %36 = vector.load %arg3[%c0_29, %c0_30] : memref<1x128xf32, #tpu.memory_space<vmem>>, vector<1x128xf32>
    %37 = vector.broadcast %36 : vector<1x128xf32> to vector<32x128xf32>
    %38 = arith.addf %35, %37 : vector<32x128xf32>
    %cst_31 = arith.constant 0.000000e+00 : f32
    %39 = vector.broadcast %cst_31 : f32 to vector<32x128xf32>
    %40 = arith.cmpf oge, %38, %39 : vector<32x128xf32>
    %cst_32 = arith.constant 2.000000e-01 : f32
    %41 = vector.broadcast %cst_32 : f32 to vector<32x128xf32>
    %42 = arith.mulf %41, %38 : vector<32x128xf32>
    %43 = arith.select %40, %38, %42 : vector<32x128xi1>, vector<32x128xf32>
    %c0_33 = arith.constant 0 : index
    %c0_34 = arith.constant 0 : index
    %c0_35 = arith.constant 0 : index
    %44 = vector.load %arg4[%c0_33, %c0_34, %c0_35] : memref<4x16x32xbf16, #tpu.memory_space<vmem>>, vector<1x16x32xbf16>
    %45 = vector.shape_cast %44 : vector<1x16x32xbf16> to vector<16x32xbf16>
    %46 = arith.truncf %43 : vector<32x128xf32> to vector<32x128xbf16>
    %cst_36 = arith.constant dense<0.000000e+00> : vector<16x128xf32>
    %47 = tpu.matmul %45, %46, %cst_36 {dimension_numbers = #tpu.dot_dimension_numbers<[1], [0], [0], [1], [0, 0, 1, 1], [], []>} : vector<16x32xbf16>, vector<32x128xbf16>, vector<16x128xf32> -> vector<16x128xf32>
    %c0_37 = arith.constant 0 : index
    %c0_38 = arith.constant 0 : index
    %c0_39 = arith.constant 0 : index
    %48 = vector.load %arg5[%c0_37, %c0_38, %c0_39] : memref<4x128x128xbf16, #tpu.memory_space<vmem>>, vector<1x128x128xbf16>
    %49 = vector.shape_cast %48 : vector<1x128x128xbf16> to vector<128x128xbf16>
    %50 = arith.truncf %47 : vector<16x128xf32> to vector<16x128xbf16>
    %cst_40 = arith.constant dense<0.000000e+00> : vector<16x128xf32>
    %51 = tpu.matmul %50, %49, %cst_40 {dimension_numbers = #tpu.dot_dimension_numbers<[1], [0], [0], [1], [0, 0, 1, 1], [], []>} : vector<16x128xbf16>, vector<128x128xbf16>, vector<16x128xf32> -> vector<16x128xf32>
    %c1_41 = arith.constant 1 : index
    %c0_42 = arith.constant 0 : index
    %c0_43 = arith.constant 0 : index
    %52 = vector.load %arg4[%c1_41, %c0_42, %c0_43] : memref<4x16x32xbf16, #tpu.memory_space<vmem>>, vector<1x16x32xbf16>
    %53 = vector.shape_cast %52 : vector<1x16x32xbf16> to vector<16x32xbf16>
    %54 = arith.truncf %43 : vector<32x128xf32> to vector<32x128xbf16>
    %cst_44 = arith.constant dense<0.000000e+00> : vector<16x128xf32>
    %55 = tpu.matmul %53, %54, %cst_44 {dimension_numbers = #tpu.dot_dimension_numbers<[1], [0], [0], [1], [0, 0, 1, 1], [], []>} : vector<16x32xbf16>, vector<32x128xbf16>, vector<16x128xf32> -> vector<16x128xf32>
    %c1_45 = arith.constant 1 : index
    %c0_46 = arith.constant 0 : index
    %c0_47 = arith.constant 0 : index
    %56 = vector.load %arg5[%c1_45, %c0_46, %c0_47] : memref<4x128x128xbf16, #tpu.memory_space<vmem>>, vector<1x128x128xbf16>
    %57 = vector.shape_cast %56 : vector<1x128x128xbf16> to vector<128x128xbf16>
    %58 = arith.truncf %55 : vector<16x128xf32> to vector<16x128xbf16>
    %cst_48 = arith.constant dense<0.000000e+00> : vector<16x128xf32>
    %59 = tpu.matmul %58, %57, %cst_48 {dimension_numbers = #tpu.dot_dimension_numbers<[1], [0], [0], [1], [0, 0, 1, 1], [], []>} : vector<16x128xbf16>, vector<128x128xbf16>, vector<16x128xf32> -> vector<16x128xf32>
    %60 = arith.addf %51, %59 : vector<16x128xf32>
    %c2_49 = arith.constant 2 : index
    %c0_50 = arith.constant 0 : index
    %c0_51 = arith.constant 0 : index
    %61 = vector.load %arg4[%c2_49, %c0_50, %c0_51] : memref<4x16x32xbf16, #tpu.memory_space<vmem>>, vector<1x16x32xbf16>
    %62 = vector.shape_cast %61 : vector<1x16x32xbf16> to vector<16x32xbf16>
    %63 = arith.truncf %43 : vector<32x128xf32> to vector<32x128xbf16>
    %cst_52 = arith.constant dense<0.000000e+00> : vector<16x128xf32>
    %64 = tpu.matmul %62, %63, %cst_52 {dimension_numbers = #tpu.dot_dimension_numbers<[1], [0], [0], [1], [0, 0, 1, 1], [], []>} : vector<16x32xbf16>, vector<32x128xbf16>, vector<16x128xf32> -> vector<16x128xf32>
    %c2_53 = arith.constant 2 : index
    %c0_54 = arith.constant 0 : index
    %c0_55 = arith.constant 0 : index
    %65 = vector.load %arg5[%c2_53, %c0_54, %c0_55] : memref<4x128x128xbf16, #tpu.memory_space<vmem>>, vector<1x128x128xbf16>
    %66 = vector.shape_cast %65 : vector<1x128x128xbf16> to vector<128x128xbf16>
    %67 = arith.truncf %64 : vector<16x128xf32> to vector<16x128xbf16>
    %cst_56 = arith.constant dense<0.000000e+00> : vector<16x128xf32>
    %68 = tpu.matmul %67, %66, %cst_56 {dimension_numbers = #tpu.dot_dimension_numbers<[1], [0], [0], [1], [0, 0, 1, 1], [], []>} : vector<16x128xbf16>, vector<128x128xbf16>, vector<16x128xf32> -> vector<16x128xf32>
    %69 = arith.addf %60, %68 : vector<16x128xf32>
    %c3_57 = arith.constant 3 : index
    %c0_58 = arith.constant 0 : index
    %c0_59 = arith.constant 0 : index
    %70 = vector.load %arg4[%c3_57, %c0_58, %c0_59] : memref<4x16x32xbf16, #tpu.memory_space<vmem>>, vector<1x16x32xbf16>
    %71 = vector.shape_cast %70 : vector<1x16x32xbf16> to vector<16x32xbf16>
    %72 = arith.truncf %43 : vector<32x128xf32> to vector<32x128xbf16>
    %cst_60 = arith.constant dense<0.000000e+00> : vector<16x128xf32>
    %73 = tpu.matmul %71, %72, %cst_60 {dimension_numbers = #tpu.dot_dimension_numbers<[1], [0], [0], [1], [0, 0, 1, 1], [], []>} : vector<16x32xbf16>, vector<32x128xbf16>, vector<16x128xf32> -> vector<16x128xf32>
    %c3_61 = arith.constant 3 : index
    %c0_62 = arith.constant 0 : index
    %c0_63 = arith.constant 0 : index
    %74 = vector.load %arg5[%c3_61, %c0_62, %c0_63] : memref<4x128x128xbf16, #tpu.memory_space<vmem>>, vector<1x128x128xbf16>
    %75 = vector.shape_cast %74 : vector<1x128x128xbf16> to vector<128x128xbf16>
    %76 = arith.truncf %73 : vector<16x128xf32> to vector<16x128xbf16>
    %cst_64 = arith.constant dense<0.000000e+00> : vector<16x128xf32>
    %77 = tpu.matmul %76, %75, %cst_64 {dimension_numbers = #tpu.dot_dimension_numbers<[1], [0], [0], [1], [0, 0, 1, 1], [], []>} : vector<16x128xbf16>, vector<128x128xbf16>, vector<16x128xf32> -> vector<16x128xf32>
    %78 = arith.addf %69, %77 : vector<16x128xf32>
    %cst_65 = arith.constant dense<0.000000e+00> : vector<128xf32>
    %79 = vector.multi_reduction <add>, %78, %cst_65 [0] : vector<16x128xf32> to vector<128xf32>
    %80 = vector.shape_cast %79 : vector<128xf32> to vector<1x128xf32>
    %c0_66 = arith.constant 0 : index
    %c0_67 = arith.constant 0 : index
    %81 = vector.load %arg6[%c0_66, %c0_67] : memref<128x16xf32, #tpu.memory_space<vmem>>, vector<128x16xf32>
    %cst_68 = arith.constant dense<0.000000e+00> : vector<1x16xf32>
    %82 = tpu.matmul %80, %81, %cst_68 {dimension_numbers = #tpu.dot_dimension_numbers<[1], [0], [0], [1], [0, 0, 1, 1], [], []>} : vector<1x128xf32>, vector<128x16xf32>, vector<1x16xf32> -> vector<1x16xf32>
    %cst_69 = arith.constant 7.812500e-03 : f32
    %83 = vector.broadcast %cst_69 : f32 to vector<1x16xf32>
    %84 = arith.mulf %82, %83 : vector<1x16xf32>
    %c0_70 = arith.constant 0 : index
    %c0_71 = arith.constant 0 : index
    %85 = vector.load %arg7[%c0_70, %c0_71] : memref<16x128xf32, #tpu.memory_space<vmem>>, vector<16x128xf32>
    %cst_72 = arith.constant dense<0.000000e+00> : vector<1x128xf32>
    %86 = tpu.matmul %84, %85, %cst_72 {dimension_numbers = #tpu.dot_dimension_numbers<[1], [0], [0], [1], [0, 0, 1, 1], [], []>} : vector<1x16xf32>, vector<16x128xf32>, vector<1x128xf32> -> vector<1x128xf32>
    %87 = vector.broadcast %86 : vector<1x128xf32> to vector<16x128xf32>
    %88 = arith.subf %78, %87 : vector<16x128xf32>
    %89 = arith.mulf %88, %88 : vector<16x128xf32>
    %cst_73 = arith.constant dense<0.000000e+00> : vector<128xf32>
    %90 = vector.multi_reduction <add>, %89, %cst_73 [0] : vector<16x128xf32> to vector<128xf32>
    %91 = vector.shape_cast %90 : vector<128xf32> to vector<1x128xf32>
    %c0_74 = arith.constant 0 : index
    %c0_75 = arith.constant 0 : index
    %92 = vector.load %arg6[%c0_74, %c0_75] : memref<128x16xf32, #tpu.memory_space<vmem>>, vector<128x16xf32>
    %cst_76 = arith.constant dense<0.000000e+00> : vector<1x16xf32>
    %93 = tpu.matmul %91, %92, %cst_76 {dimension_numbers = #tpu.dot_dimension_numbers<[1], [0], [0], [1], [0, 0, 1, 1], [], []>} : vector<1x128xf32>, vector<128x16xf32>, vector<1x16xf32> -> vector<1x16xf32>
    %cst_77 = arith.constant 7.812500e-03 : f32
    %94 = vector.broadcast %cst_77 : f32 to vector<1x16xf32>
    %95 = arith.mulf %93, %94 : vector<1x16xf32>
    %c0_78 = arith.constant 0 : index
    %c0_79 = arith.constant 0 : index
    %96 = vector.load %arg8[%c0_78, %c0_79] : memref<1x16xf32, #tpu.memory_space<vmem>>, vector<1x16xf32>
    %cst_80 = arith.constant 9.99999974E-6 : f32
    %97 = vector.broadcast %cst_80 : f32 to vector<1x16xf32>
    %98 = arith.addf %95, %97 : vector<1x16xf32>
    %99 = math.rsqrt %98 : vector<1x16xf32>
    %100 = arith.mulf %96, %99 : vector<1x16xf32>
    %c0_81 = arith.constant 0 : index
    %c0_82 = arith.constant 0 : index
    %101 = vector.load %arg9[%c0_81, %c0_82] : memref<1x16xf32, #tpu.memory_space<vmem>>, vector<1x16xf32>
    %102 = arith.mulf %84, %100 : vector<1x16xf32>
    %103 = arith.subf %101, %102 : vector<1x16xf32>
    %c0_83 = arith.constant 0 : index
    %c0_84 = arith.constant 0 : index
    %104 = vector.load %arg7[%c0_83, %c0_84] : memref<16x128xf32, #tpu.memory_space<vmem>>, vector<16x128xf32>
    %cst_85 = arith.constant dense<0.000000e+00> : vector<1x128xf32>
    %105 = tpu.matmul %100, %104, %cst_85 {dimension_numbers = #tpu.dot_dimension_numbers<[1], [0], [0], [1], [0, 0, 1, 1], [], []>} : vector<1x16xf32>, vector<16x128xf32>, vector<1x128xf32> -> vector<1x128xf32>
    %106 = vector.broadcast %105 : vector<1x128xf32> to vector<16x128xf32>
    %107 = arith.mulf %78, %106 : vector<16x128xf32>
    %c0_86 = arith.constant 0 : index
    %c0_87 = arith.constant 0 : index
    %108 = vector.load %arg7[%c0_86, %c0_87] : memref<16x128xf32, #tpu.memory_space<vmem>>, vector<16x128xf32>
    %cst_88 = arith.constant dense<0.000000e+00> : vector<1x128xf32>
    %109 = tpu.matmul %103, %108, %cst_88 {dimension_numbers = #tpu.dot_dimension_numbers<[1], [0], [0], [1], [0, 0, 1, 1], [], []>} : vector<1x16xf32>, vector<16x128xf32>, vector<1x128xf32> -> vector<1x128xf32>
    %110 = vector.broadcast %109 : vector<1x128xf32> to vector<16x128xf32>
    %111 = arith.addf %107, %110 : vector<16x128xf32>
    %cst_89 = arith.constant 0.000000e+00 : f32
    %112 = vector.broadcast %cst_89 : f32 to vector<16x128xf32>
    %113 = arith.cmpf oge, %111, %112 : vector<16x128xf32>
    %cst_90 = arith.constant 2.000000e-01 : f32
    %114 = vector.broadcast %cst_90 : f32 to vector<16x128xf32>
    %115 = arith.mulf %114, %111 : vector<16x128xf32>
    %116 = arith.select %113, %111, %115 : vector<16x128xi1>, vector<16x128xf32>
    %c0_91 = arith.constant 0 : index
    %c0_92 = arith.constant 0 : index
    %c0_93 = arith.constant 0 : index
    %117 = vector.load %arg10[%c0_91, %c0_92, %c0_93] : memref<4x8x16xbf16, #tpu.memory_space<vmem>>, vector<1x8x16xbf16>
    %118 = vector.shape_cast %117 : vector<1x8x16xbf16> to vector<8x16xbf16>
    %119 = arith.truncf %116 : vector<16x128xf32> to vector<16x128xbf16>
    %cst_94 = arith.constant dense<0.000000e+00> : vector<8x128xf32>
    %120 = tpu.matmul %118, %119, %cst_94 {dimension_numbers = #tpu.dot_dimension_numbers<[1], [0], [0], [1], [0, 0, 1, 1], [], []>} : vector<8x16xbf16>, vector<16x128xbf16>, vector<8x128xf32> -> vector<8x128xf32>
    %c0_95 = arith.constant 0 : index
    %c0_96 = arith.constant 0 : index
    %c0_97 = arith.constant 0 : index
    %121 = vector.load %arg11[%c0_95, %c0_96, %c0_97] : memref<4x128x128xbf16, #tpu.memory_space<vmem>>, vector<1x128x128xbf16>
    %122 = vector.shape_cast %121 : vector<1x128x128xbf16> to vector<128x128xbf16>
    %123 = arith.truncf %120 : vector<8x128xf32> to vector<8x128xbf16>
    %cst_98 = arith.constant dense<0.000000e+00> : vector<8x128xf32>
    %124 = tpu.matmul %123, %122, %cst_98 {dimension_numbers = #tpu.dot_dimension_numbers<[1], [0], [0], [1], [0, 0, 1, 1], [], []>} : vector<8x128xbf16>, vector<128x128xbf16>, vector<8x128xf32> -> vector<8x128xf32>
    %c1_99 = arith.constant 1 : index
    %c0_100 = arith.constant 0 : index
    %c0_101 = arith.constant 0 : index
    %125 = vector.load %arg10[%c1_99, %c0_100, %c0_101] : memref<4x8x16xbf16, #tpu.memory_space<vmem>>, vector<1x8x16xbf16>
    %126 = vector.shape_cast %125 : vector<1x8x16xbf16> to vector<8x16xbf16>
    %127 = arith.truncf %116 : vector<16x128xf32> to vector<16x128xbf16>
    %cst_102 = arith.constant dense<0.000000e+00> : vector<8x128xf32>
    %128 = tpu.matmul %126, %127, %cst_102 {dimension_numbers = #tpu.dot_dimension_numbers<[1], [0], [0], [1], [0, 0, 1, 1], [], []>} : vector<8x16xbf16>, vector<16x128xbf16>, vector<8x128xf32> -> vector<8x128xf32>
    %c1_103 = arith.constant 1 : index
    %c0_104 = arith.constant 0 : index
    %c0_105 = arith.constant 0 : index
    %129 = vector.load %arg11[%c1_103, %c0_104, %c0_105] : memref<4x128x128xbf16, #tpu.memory_space<vmem>>, vector<1x128x128xbf16>
    %130 = vector.shape_cast %129 : vector<1x128x128xbf16> to vector<128x128xbf16>
    %131 = arith.truncf %128 : vector<8x128xf32> to vector<8x128xbf16>
    %cst_106 = arith.constant dense<0.000000e+00> : vector<8x128xf32>
    %132 = tpu.matmul %131, %130, %cst_106 {dimension_numbers = #tpu.dot_dimension_numbers<[1], [0], [0], [1], [0, 0, 1, 1], [], []>} : vector<8x128xbf16>, vector<128x128xbf16>, vector<8x128xf32> -> vector<8x128xf32>
    %133 = arith.addf %124, %132 : vector<8x128xf32>
    %c2_107 = arith.constant 2 : index
    %c0_108 = arith.constant 0 : index
    %c0_109 = arith.constant 0 : index
    %134 = vector.load %arg10[%c2_107, %c0_108, %c0_109] : memref<4x8x16xbf16, #tpu.memory_space<vmem>>, vector<1x8x16xbf16>
    %135 = vector.shape_cast %134 : vector<1x8x16xbf16> to vector<8x16xbf16>
    %136 = arith.truncf %116 : vector<16x128xf32> to vector<16x128xbf16>
    %cst_110 = arith.constant dense<0.000000e+00> : vector<8x128xf32>
    %137 = tpu.matmul %135, %136, %cst_110 {dimension_numbers = #tpu.dot_dimension_numbers<[1], [0], [0], [1], [0, 0, 1, 1], [], []>} : vector<8x16xbf16>, vector<16x128xbf16>, vector<8x128xf32> -> vector<8x128xf32>
    %c2_111 = arith.constant 2 : index
    %c0_112 = arith.constant 0 : index
    %c0_113 = arith.constant 0 : index
    %138 = vector.load %arg11[%c2_111, %c0_112, %c0_113] : memref<4x128x128xbf16, #tpu.memory_space<vmem>>, vector<1x128x128xbf16>
    %139 = vector.shape_cast %138 : vector<1x128x128xbf16> to vector<128x128xbf16>
    %140 = arith.truncf %137 : vector<8x128xf32> to vector<8x128xbf16>
    %cst_114 = arith.constant dense<0.000000e+00> : vector<8x128xf32>
    %141 = tpu.matmul %140, %139, %cst_114 {dimension_numbers = #tpu.dot_dimension_numbers<[1], [0], [0], [1], [0, 0, 1, 1], [], []>} : vector<8x128xbf16>, vector<128x128xbf16>, vector<8x128xf32> -> vector<8x128xf32>
    %142 = arith.addf %133, %141 : vector<8x128xf32>
    %c3_115 = arith.constant 3 : index
    %c0_116 = arith.constant 0 : index
    %c0_117 = arith.constant 0 : index
    %143 = vector.load %arg10[%c3_115, %c0_116, %c0_117] : memref<4x8x16xbf16, #tpu.memory_space<vmem>>, vector<1x8x16xbf16>
    %144 = vector.shape_cast %143 : vector<1x8x16xbf16> to vector<8x16xbf16>
    %145 = arith.truncf %116 : vector<16x128xf32> to vector<16x128xbf16>
    %cst_118 = arith.constant dense<0.000000e+00> : vector<8x128xf32>
    %146 = tpu.matmul %144, %145, %cst_118 {dimension_numbers = #tpu.dot_dimension_numbers<[1], [0], [0], [1], [0, 0, 1, 1], [], []>} : vector<8x16xbf16>, vector<16x128xbf16>, vector<8x128xf32> -> vector<8x128xf32>
    %c3_119 = arith.constant 3 : index
    %c0_120 = arith.constant 0 : index
    %c0_121 = arith.constant 0 : index
    %147 = vector.load %arg11[%c3_119, %c0_120, %c0_121] : memref<4x128x128xbf16, #tpu.memory_space<vmem>>, vector<1x128x128xbf16>
    %148 = vector.shape_cast %147 : vector<1x128x128xbf16> to vector<128x128xbf16>
    %149 = arith.truncf %146 : vector<8x128xf32> to vector<8x128xbf16>
    %cst_122 = arith.constant dense<0.000000e+00> : vector<8x128xf32>
    %150 = tpu.matmul %149, %148, %cst_122 {dimension_numbers = #tpu.dot_dimension_numbers<[1], [0], [0], [1], [0, 0, 1, 1], [], []>} : vector<8x128xbf16>, vector<128x128xbf16>, vector<8x128xf32> -> vector<8x128xf32>
    %151 = arith.addf %142, %150 : vector<8x128xf32>
    %cst_123 = arith.constant dense<0.000000e+00> : vector<128xf32>
    %152 = vector.multi_reduction <add>, %151, %cst_123 [0] : vector<8x128xf32> to vector<128xf32>
    %153 = vector.shape_cast %152 : vector<128xf32> to vector<1x128xf32>
    %c0_124 = arith.constant 0 : index
    %c0_125 = arith.constant 0 : index
    %154 = vector.load %arg12[%c0_124, %c0_125] : memref<128x32xf32, #tpu.memory_space<vmem>>, vector<128x32xf32>
    %cst_126 = arith.constant dense<0.000000e+00> : vector<1x32xf32>
    %155 = tpu.matmul %153, %154, %cst_126 {dimension_numbers = #tpu.dot_dimension_numbers<[1], [0], [0], [1], [0, 0, 1, 1], [], []>} : vector<1x128xf32>, vector<128x32xf32>, vector<1x32xf32> -> vector<1x32xf32>
    %cst_127 = arith.constant 3.125000e-02 : f32
    %156 = vector.broadcast %cst_127 : f32 to vector<1x32xf32>
    %157 = arith.mulf %155, %156 : vector<1x32xf32>
    %c0_128 = arith.constant 0 : index
    %c0_129 = arith.constant 0 : index
    %158 = vector.load %arg13[%c0_128, %c0_129] : memref<32x128xf32, #tpu.memory_space<vmem>>, vector<32x128xf32>
    %cst_130 = arith.constant dense<0.000000e+00> : vector<1x128xf32>
    %159 = tpu.matmul %157, %158, %cst_130 {dimension_numbers = #tpu.dot_dimension_numbers<[1], [0], [0], [1], [0, 0, 1, 1], [], []>} : vector<1x32xf32>, vector<32x128xf32>, vector<1x128xf32> -> vector<1x128xf32>
    %160 = vector.broadcast %159 : vector<1x128xf32> to vector<8x128xf32>
    %161 = arith.subf %151, %160 : vector<8x128xf32>
    %162 = arith.mulf %161, %161 : vector<8x128xf32>
    %cst_131 = arith.constant dense<0.000000e+00> : vector<128xf32>
    %163 = vector.multi_reduction <add>, %162, %cst_131 [0] : vector<8x128xf32> to vector<128xf32>
    %164 = vector.shape_cast %163 : vector<128xf32> to vector<1x128xf32>
    %c0_132 = arith.constant 0 : index
    %c0_133 = arith.constant 0 : index
    %165 = vector.load %arg12[%c0_132, %c0_133] : memref<128x32xf32, #tpu.memory_space<vmem>>, vector<128x32xf32>
    %cst_134 = arith.constant dense<0.000000e+00> : vector<1x32xf32>
    %166 = tpu.matmul %164, %165, %cst_134 {dimension_numbers = #tpu.dot_dimension_numbers<[1], [0], [0], [1], [0, 0, 1, 1], [], []>} : vector<1x128xf32>, vector<128x32xf32>, vector<1x32xf32> -> vector<1x32xf32>
    %cst_135 = arith.constant 3.125000e-02 : f32
    %167 = vector.broadcast %cst_135 : f32 to vector<1x32xf32>
    %168 = arith.mulf %166, %167 : vector<1x32xf32>
    %c0_136 = arith.constant 0 : index
    %c0_137 = arith.constant 0 : index
    %169 = vector.load %arg14[%c0_136, %c0_137] : memref<1x32xf32, #tpu.memory_space<vmem>>, vector<1x32xf32>
    %cst_138 = arith.constant 9.99999974E-6 : f32
    %170 = vector.broadcast %cst_138 : f32 to vector<1x32xf32>
    %171 = arith.addf %168, %170 : vector<1x32xf32>
    %172 = math.rsqrt %171 : vector<1x32xf32>
    %173 = arith.mulf %169, %172 : vector<1x32xf32>
    %c0_139 = arith.constant 0 : index
    %c0_140 = arith.constant 0 : index
    %174 = vector.load %arg15[%c0_139, %c0_140] : memref<1x32xf32, #tpu.memory_space<vmem>>, vector<1x32xf32>
    %175 = arith.mulf %157, %173 : vector<1x32xf32>
    %176 = arith.subf %174, %175 : vector<1x32xf32>
    %c0_141 = arith.constant 0 : index
    %c0_142 = arith.constant 0 : index
    %177 = vector.load %arg13[%c0_141, %c0_142] : memref<32x128xf32, #tpu.memory_space<vmem>>, vector<32x128xf32>
    %cst_143 = arith.constant dense<0.000000e+00> : vector<1x128xf32>
    %178 = tpu.matmul %173, %177, %cst_143 {dimension_numbers = #tpu.dot_dimension_numbers<[1], [0], [0], [1], [0, 0, 1, 1], [], []>} : vector<1x32xf32>, vector<32x128xf32>, vector<1x128xf32> -> vector<1x128xf32>
    %179 = vector.broadcast %178 : vector<1x128xf32> to vector<8x128xf32>
    %180 = arith.mulf %151, %179 : vector<8x128xf32>
    %c0_144 = arith.constant 0 : index
    %c0_145 = arith.constant 0 : index
    %181 = vector.load %arg13[%c0_144, %c0_145] : memref<32x128xf32, #tpu.memory_space<vmem>>, vector<32x128xf32>
    %cst_146 = arith.constant dense<0.000000e+00> : vector<1x128xf32>
    %182 = tpu.matmul %176, %181, %cst_146 {dimension_numbers = #tpu.dot_dimension_numbers<[1], [0], [0], [1], [0, 0, 1, 1], [], []>} : vector<1x32xf32>, vector<32x128xf32>, vector<1x128xf32> -> vector<1x128xf32>
    %183 = vector.broadcast %182 : vector<1x128xf32> to vector<8x128xf32>
    %184 = arith.addf %180, %183 : vector<8x128xf32>
    %cst_147 = arith.constant 0.000000e+00 : f32
    %185 = vector.broadcast %cst_147 : f32 to vector<8x128xf32>
    %186 = arith.cmpf oge, %184, %185 : vector<8x128xf32>
    %cst_148 = arith.constant 2.000000e-01 : f32
    %187 = vector.broadcast %cst_148 : f32 to vector<8x128xf32>
    %188 = arith.mulf %187, %184 : vector<8x128xf32>
    %189 = arith.select %186, %184, %188 : vector<8x128xi1>, vector<8x128xf32>
    %c0_149 = arith.constant 0 : index
    %c0_150 = arith.constant 0 : index
    %c0_151 = arith.constant 0 : index
    %190 = vector.load %arg16[%c0_149, %c0_150, %c0_151] : memref<4x6x8xbf16, #tpu.memory_space<vmem>>, vector<1x6x8xbf16>
    %191 = vector.shape_cast %190 : vector<1x6x8xbf16> to vector<6x8xbf16>
    %192 = arith.truncf %189 : vector<8x128xf32> to vector<8x128xbf16>
    %cst_152 = arith.constant dense<0.000000e+00> : vector<6x128xf32>
    %193 = tpu.matmul %191, %192, %cst_152 {dimension_numbers = #tpu.dot_dimension_numbers<[1], [0], [0], [1], [0, 0, 1, 1], [], []>} : vector<6x8xbf16>, vector<8x128xbf16>, vector<6x128xf32> -> vector<6x128xf32>
    %c0_153 = arith.constant 0 : index
    %c0_154 = arith.constant 0 : index
    %c0_155 = arith.constant 0 : index
    %194 = vector.load %arg17[%c0_153, %c0_154, %c0_155] : memref<4x128x192xbf16, #tpu.memory_space<vmem>>, vector<1x128x192xbf16>
    %195 = vector.shape_cast %194 : vector<1x128x192xbf16> to vector<128x192xbf16>
    %196 = arith.truncf %193 : vector<6x128xf32> to vector<6x128xbf16>
    %cst_156 = arith.constant dense<0.000000e+00> : vector<6x192xf32>
    %197 = tpu.matmul %196, %195, %cst_156 {dimension_numbers = #tpu.dot_dimension_numbers<[1], [0], [0], [1], [0, 0, 1, 1], [], []>} : vector<6x128xbf16>, vector<128x192xbf16>, vector<6x192xf32> -> vector<6x192xf32>
    %c1_157 = arith.constant 1 : index
    %c0_158 = arith.constant 0 : index
    %c0_159 = arith.constant 0 : index
    %198 = vector.load %arg16[%c1_157, %c0_158, %c0_159] : memref<4x6x8xbf16, #tpu.memory_space<vmem>>, vector<1x6x8xbf16>
    %199 = vector.shape_cast %198 : vector<1x6x8xbf16> to vector<6x8xbf16>
    %200 = arith.truncf %189 : vector<8x128xf32> to vector<8x128xbf16>
    %cst_160 = arith.constant dense<0.000000e+00> : vector<6x128xf32>
    %201 = tpu.matmul %199, %200, %cst_160 {dimension_numbers = #tpu.dot_dimension_numbers<[1], [0], [0], [1], [0, 0, 1, 1], [], []>} : vector<6x8xbf16>, vector<8x128xbf16>, vector<6x128xf32> -> vector<6x128xf32>
    %c1_161 = arith.constant 1 : index
    %c0_162 = arith.constant 0 : index
    %c0_163 = arith.constant 0 : index
    %202 = vector.load %arg17[%c1_161, %c0_162, %c0_163] : memref<4x128x192xbf16, #tpu.memory_space<vmem>>, vector<1x128x192xbf16>
    %203 = vector.shape_cast %202 : vector<1x128x192xbf16> to vector<128x192xbf16>
    %204 = arith.truncf %201 : vector<6x128xf32> to vector<6x128xbf16>
    %cst_164 = arith.constant dense<0.000000e+00> : vector<6x192xf32>
    %205 = tpu.matmul %204, %203, %cst_164 {dimension_numbers = #tpu.dot_dimension_numbers<[1], [0], [0], [1], [0, 0, 1, 1], [], []>} : vector<6x128xbf16>, vector<128x192xbf16>, vector<6x192xf32> -> vector<6x192xf32>
    %206 = arith.addf %197, %205 : vector<6x192xf32>
    %c2_165 = arith.constant 2 : index
    %c0_166 = arith.constant 0 : index
    %c0_167 = arith.constant 0 : index
    %207 = vector.load %arg16[%c2_165, %c0_166, %c0_167] : memref<4x6x8xbf16, #tpu.memory_space<vmem>>, vector<1x6x8xbf16>
    %208 = vector.shape_cast %207 : vector<1x6x8xbf16> to vector<6x8xbf16>
    %209 = arith.truncf %189 : vector<8x128xf32> to vector<8x128xbf16>
    %cst_168 = arith.constant dense<0.000000e+00> : vector<6x128xf32>
    %210 = tpu.matmul %208, %209, %cst_168 {dimension_numbers = #tpu.dot_dimension_numbers<[1], [0], [0], [1], [0, 0, 1, 1], [], []>} : vector<6x8xbf16>, vector<8x128xbf16>, vector<6x128xf32> -> vector<6x128xf32>
    %c2_169 = arith.constant 2 : index
    %c0_170 = arith.constant 0 : index
    %c0_171 = arith.constant 0 : index
    %211 = vector.load %arg17[%c2_169, %c0_170, %c0_171] : memref<4x128x192xbf16, #tpu.memory_space<vmem>>, vector<1x128x192xbf16>
    %212 = vector.shape_cast %211 : vector<1x128x192xbf16> to vector<128x192xbf16>
    %213 = arith.truncf %210 : vector<6x128xf32> to vector<6x128xbf16>
    %cst_172 = arith.constant dense<0.000000e+00> : vector<6x192xf32>
    %214 = tpu.matmul %213, %212, %cst_172 {dimension_numbers = #tpu.dot_dimension_numbers<[1], [0], [0], [1], [0, 0, 1, 1], [], []>} : vector<6x128xbf16>, vector<128x192xbf16>, vector<6x192xf32> -> vector<6x192xf32>
    %215 = arith.addf %206, %214 : vector<6x192xf32>
    %c3_173 = arith.constant 3 : index
    %c0_174 = arith.constant 0 : index
    %c0_175 = arith.constant 0 : index
    %216 = vector.load %arg16[%c3_173, %c0_174, %c0_175] : memref<4x6x8xbf16, #tpu.memory_space<vmem>>, vector<1x6x8xbf16>
    %217 = vector.shape_cast %216 : vector<1x6x8xbf16> to vector<6x8xbf16>
    %218 = arith.truncf %189 : vector<8x128xf32> to vector<8x128xbf16>
    %cst_176 = arith.constant dense<0.000000e+00> : vector<6x128xf32>
    %219 = tpu.matmul %217, %218, %cst_176 {dimension_numbers = #tpu.dot_dimension_numbers<[1], [0], [0], [1], [0, 0, 1, 1], [], []>} : vector<6x8xbf16>, vector<8x128xbf16>, vector<6x128xf32> -> vector<6x128xf32>
    %c3_177 = arith.constant 3 : index
    %c0_178 = arith.constant 0 : index
    %c0_179 = arith.constant 0 : index
    %220 = vector.load %arg17[%c3_177, %c0_178, %c0_179] : memref<4x128x192xbf16, #tpu.memory_space<vmem>>, vector<1x128x192xbf16>
    %221 = vector.shape_cast %220 : vector<1x128x192xbf16> to vector<128x192xbf16>
    %222 = arith.truncf %219 : vector<6x128xf32> to vector<6x128xbf16>
    %cst_180 = arith.constant dense<0.000000e+00> : vector<6x192xf32>
    %223 = tpu.matmul %222, %221, %cst_180 {dimension_numbers = #tpu.dot_dimension_numbers<[1], [0], [0], [1], [0, 0, 1, 1], [], []>} : vector<6x128xbf16>, vector<128x192xbf16>, vector<6x192xf32> -> vector<6x192xf32>
    %224 = arith.addf %215, %223 : vector<6x192xf32>
    %cst_181 = arith.constant dense<0.000000e+00> : vector<192xf32>
    %225 = vector.multi_reduction <add>, %224, %cst_181 [0] : vector<6x192xf32> to vector<192xf32>
    %226 = vector.shape_cast %225 : vector<192xf32> to vector<1x192xf32>
    %c0_182 = arith.constant 0 : index
    %c0_183 = arith.constant 0 : index
    %227 = vector.load %arg18[%c0_182, %c0_183] : memref<192x64xf32, #tpu.memory_space<vmem>>, vector<192x64xf32>
    %cst_184 = arith.constant dense<0.000000e+00> : vector<1x64xf32>
    %228 = tpu.matmul %226, %227, %cst_184 {dimension_numbers = #tpu.dot_dimension_numbers<[1], [0], [0], [1], [0, 0, 1, 1], [], []>} : vector<1x192xf32>, vector<192x64xf32>, vector<1x64xf32> -> vector<1x64xf32>
    %cst_185 = arith.constant 0.055555556 : f32
    %229 = vector.broadcast %cst_185 : f32 to vector<1x64xf32>
    %230 = arith.mulf %228, %229 : vector<1x64xf32>
    %c0_186 = arith.constant 0 : index
    %c0_187 = arith.constant 0 : index
    %231 = vector.load %arg19[%c0_186, %c0_187] : memref<64x192xf32, #tpu.memory_space<vmem>>, vector<64x192xf32>
    %cst_188 = arith.constant dense<0.000000e+00> : vector<1x192xf32>
    %232 = tpu.matmul %230, %231, %cst_188 {dimension_numbers = #tpu.dot_dimension_numbers<[1], [0], [0], [1], [0, 0, 1, 1], [], []>} : vector<1x64xf32>, vector<64x192xf32>, vector<1x192xf32> -> vector<1x192xf32>
    %233 = vector.broadcast %232 : vector<1x192xf32> to vector<6x192xf32>
    %234 = arith.subf %224, %233 : vector<6x192xf32>
    %235 = arith.mulf %234, %234 : vector<6x192xf32>
    %cst_189 = arith.constant dense<0.000000e+00> : vector<192xf32>
    %236 = vector.multi_reduction <add>, %235, %cst_189 [0] : vector<6x192xf32> to vector<192xf32>
    %237 = vector.shape_cast %236 : vector<192xf32> to vector<1x192xf32>
    %c0_190 = arith.constant 0 : index
    %c0_191 = arith.constant 0 : index
    %238 = vector.load %arg18[%c0_190, %c0_191] : memref<192x64xf32, #tpu.memory_space<vmem>>, vector<192x64xf32>
    %cst_192 = arith.constant dense<0.000000e+00> : vector<1x64xf32>
    %239 = tpu.matmul %237, %238, %cst_192 {dimension_numbers = #tpu.dot_dimension_numbers<[1], [0], [0], [1], [0, 0, 1, 1], [], []>} : vector<1x192xf32>, vector<192x64xf32>, vector<1x64xf32> -> vector<1x64xf32>
    %cst_193 = arith.constant 0.055555556 : f32
    %240 = vector.broadcast %cst_193 : f32 to vector<1x64xf32>
    %241 = arith.mulf %239, %240 : vector<1x64xf32>
    %c0_194 = arith.constant 0 : index
    %c0_195 = arith.constant 0 : index
    %242 = vector.load %arg20[%c0_194, %c0_195] : memref<1x64xf32, #tpu.memory_space<vmem>>, vector<1x64xf32>
    %cst_196 = arith.constant 9.99999974E-6 : f32
    %243 = vector.broadcast %cst_196 : f32 to vector<1x64xf32>
    %244 = arith.addf %241, %243 : vector<1x64xf32>
    %245 = math.rsqrt %244 : vector<1x64xf32>
    %246 = arith.mulf %242, %245 : vector<1x64xf32>
    %c0_197 = arith.constant 0 : index
    %c0_198 = arith.constant 0 : index
    %247 = vector.load %arg21[%c0_197, %c0_198] : memref<1x64xf32, #tpu.memory_space<vmem>>, vector<1x64xf32>
    %248 = arith.mulf %230, %246 : vector<1x64xf32>
    %249 = arith.subf %247, %248 : vector<1x64xf32>
    %c0_199 = arith.constant 0 : index
    %c0_200 = arith.constant 0 : index
    %250 = vector.load %arg19[%c0_199, %c0_200] : memref<64x192xf32, #tpu.memory_space<vmem>>, vector<64x192xf32>
    %cst_201 = arith.constant dense<0.000000e+00> : vector<1x192xf32>
    %251 = tpu.matmul %246, %250, %cst_201 {dimension_numbers = #tpu.dot_dimension_numbers<[1], [0], [0], [1], [0, 0, 1, 1], [], []>} : vector<1x64xf32>, vector<64x192xf32>, vector<1x192xf32> -> vector<1x192xf32>
    %252 = vector.broadcast %251 : vector<1x192xf32> to vector<6x192xf32>
    %253 = arith.mulf %224, %252 : vector<6x192xf32>
    %c0_202 = arith.constant 0 : index
    %c0_203 = arith.constant 0 : index
    %254 = vector.load %arg19[%c0_202, %c0_203] : memref<64x192xf32, #tpu.memory_space<vmem>>, vector<64x192xf32>
    %cst_204 = arith.constant dense<0.000000e+00> : vector<1x192xf32>
    %255 = tpu.matmul %249, %254, %cst_204 {dimension_numbers = #tpu.dot_dimension_numbers<[1], [0], [0], [1], [0, 0, 1, 1], [], []>} : vector<1x64xf32>, vector<64x192xf32>, vector<1x192xf32> -> vector<1x192xf32>
    %256 = vector.broadcast %255 : vector<1x192xf32> to vector<6x192xf32>
    %257 = arith.addf %253, %256 : vector<6x192xf32>
    %cst_205 = arith.constant 0.000000e+00 : f32
    %258 = vector.broadcast %cst_205 : f32 to vector<6x192xf32>
    %259 = arith.cmpf oge, %257, %258 : vector<6x192xf32>
    %cst_206 = arith.constant 2.000000e-01 : f32
    %260 = vector.broadcast %cst_206 : f32 to vector<6x192xf32>
    %261 = arith.mulf %260, %257 : vector<6x192xf32>
    %262 = arith.select %259, %257, %261 : vector<6x192xi1>, vector<6x192xf32>
    %c0_207 = arith.constant 0 : index
    %c0_208 = arith.constant 0 : index
    %c0_209 = arith.constant 0 : index
    %263 = vector.load %arg22[%c0_207, %c0_208, %c0_209] : memref<4x4x6xbf16, #tpu.memory_space<vmem>>, vector<1x4x6xbf16>
    %264 = vector.shape_cast %263 : vector<1x4x6xbf16> to vector<4x6xbf16>
    %265 = arith.truncf %262 : vector<6x192xf32> to vector<6x192xbf16>
    %cst_210 = arith.constant dense<0.000000e+00> : vector<4x192xf32>
    %266 = tpu.matmul %264, %265, %cst_210 {dimension_numbers = #tpu.dot_dimension_numbers<[1], [0], [0], [1], [0, 0, 1, 1], [], []>} : vector<4x6xbf16>, vector<6x192xbf16>, vector<4x192xf32> -> vector<4x192xf32>
    %c0_211 = arith.constant 0 : index
    %c0_212 = arith.constant 0 : index
    %c0_213 = arith.constant 0 : index
    %267 = vector.load %arg23[%c0_211, %c0_212, %c0_213] : memref<4x192x2xbf16, #tpu.memory_space<vmem>>, vector<1x192x2xbf16>
    %268 = vector.shape_cast %267 : vector<1x192x2xbf16> to vector<192x2xbf16>
    %269 = arith.truncf %266 : vector<4x192xf32> to vector<4x192xbf16>
    %cst_214 = arith.constant dense<0.000000e+00> : vector<4x2xf32>
    %270 = tpu.matmul %269, %268, %cst_214 {dimension_numbers = #tpu.dot_dimension_numbers<[1], [0], [0], [1], [0, 0, 1, 1], [], []>} : vector<4x192xbf16>, vector<192x2xbf16>, vector<4x2xf32> -> vector<4x2xf32>
    %c1_215 = arith.constant 1 : index
    %c0_216 = arith.constant 0 : index
    %c0_217 = arith.constant 0 : index
    %271 = vector.load %arg22[%c1_215, %c0_216, %c0_217] : memref<4x4x6xbf16, #tpu.memory_space<vmem>>, vector<1x4x6xbf16>
    %272 = vector.shape_cast %271 : vector<1x4x6xbf16> to vector<4x6xbf16>
    %273 = arith.truncf %262 : vector<6x192xf32> to vector<6x192xbf16>
    %cst_218 = arith.constant dense<0.000000e+00> : vector<4x192xf32>
    %274 = tpu.matmul %272, %273, %cst_218 {dimension_numbers = #tpu.dot_dimension_numbers<[1], [0], [0], [1], [0, 0, 1, 1], [], []>} : vector<4x6xbf16>, vector<6x192xbf16>, vector<4x192xf32> -> vector<4x192xf32>
    %c1_219 = arith.constant 1 : index
    %c0_220 = arith.constant 0 : index
    %c0_221 = arith.constant 0 : index
    %275 = vector.load %arg23[%c1_219, %c0_220, %c0_221] : memref<4x192x2xbf16, #tpu.memory_space<vmem>>, vector<1x192x2xbf16>
    %276 = vector.shape_cast %275 : vector<1x192x2xbf16> to vector<192x2xbf16>
    %277 = arith.truncf %274 : vector<4x192xf32> to vector<4x192xbf16>
    %cst_222 = arith.constant dense<0.000000e+00> : vector<4x2xf32>
    %278 = tpu.matmul %277, %276, %cst_222 {dimension_numbers = #tpu.dot_dimension_numbers<[1], [0], [0], [1], [0, 0, 1, 1], [], []>} : vector<4x192xbf16>, vector<192x2xbf16>, vector<4x2xf32> -> vector<4x2xf32>
    %279 = arith.addf %270, %278 : vector<4x2xf32>
    %c2_223 = arith.constant 2 : index
    %c0_224 = arith.constant 0 : index
    %c0_225 = arith.constant 0 : index
    %280 = vector.load %arg22[%c2_223, %c0_224, %c0_225] : memref<4x4x6xbf16, #tpu.memory_space<vmem>>, vector<1x4x6xbf16>
    %281 = vector.shape_cast %280 : vector<1x4x6xbf16> to vector<4x6xbf16>
    %282 = arith.truncf %262 : vector<6x192xf32> to vector<6x192xbf16>
    %cst_226 = arith.constant dense<0.000000e+00> : vector<4x192xf32>
    %283 = tpu.matmul %281, %282, %cst_226 {dimension_numbers = #tpu.dot_dimension_numbers<[1], [0], [0], [1], [0, 0, 1, 1], [], []>} : vector<4x6xbf16>, vector<6x192xbf16>, vector<4x192xf32> -> vector<4x192xf32>
    %c2_227 = arith.constant 2 : index
    %c0_228 = arith.constant 0 : index
    %c0_229 = arith.constant 0 : index
    %284 = vector.load %arg23[%c2_227, %c0_228, %c0_229] : memref<4x192x2xbf16, #tpu.memory_space<vmem>>, vector<1x192x2xbf16>
    %285 = vector.shape_cast %284 : vector<1x192x2xbf16> to vector<192x2xbf16>
    %286 = arith.truncf %283 : vector<4x192xf32> to vector<4x192xbf16>
    %cst_230 = arith.constant dense<0.000000e+00> : vector<4x2xf32>
    %287 = tpu.matmul %286, %285, %cst_230 {dimension_numbers = #tpu.dot_dimension_numbers<[1], [0], [0], [1], [0, 0, 1, 1], [], []>} : vector<4x192xbf16>, vector<192x2xbf16>, vector<4x2xf32> -> vector<4x2xf32>
    %288 = arith.addf %279, %287 : vector<4x2xf32>
    %c3_231 = arith.constant 3 : index
    %c0_232 = arith.constant 0 : index
    %c0_233 = arith.constant 0 : index
    %289 = vector.load %arg22[%c3_231, %c0_232, %c0_233] : memref<4x4x6xbf16, #tpu.memory_space<vmem>>, vector<1x4x6xbf16>
    %290 = vector.shape_cast %289 : vector<1x4x6xbf16> to vector<4x6xbf16>
    %291 = arith.truncf %262 : vector<6x192xf32> to vector<6x192xbf16>
    %cst_234 = arith.constant dense<0.000000e+00> : vector<4x192xf32>
    %292 = tpu.matmul %290, %291, %cst_234 {dimension_numbers = #tpu.dot_dimension_numbers<[1], [0], [0], [1], [0, 0, 1, 1], [], []>} : vector<4x6xbf16>, vector<6x192xbf16>, vector<4x192xf32> -> vector<4x192xf32>
    %c3_235 = arith.constant 3 : index
    %c0_236 = arith.constant 0 : index
    %c0_237 = arith.constant 0 : index
    %293 = vector.load %arg23[%c3_235, %c0_236, %c0_237] : memref<4x192x2xbf16, #tpu.memory_space<vmem>>, vector<1x192x2xbf16>
    %294 = vector.shape_cast %293 : vector<1x192x2xbf16> to vector<192x2xbf16>
    %295 = arith.truncf %292 : vector<4x192xf32> to vector<4x192xbf16>
    %cst_238 = arith.constant dense<0.000000e+00> : vector<4x2xf32>
    %296 = tpu.matmul %295, %294, %cst_238 {dimension_numbers = #tpu.dot_dimension_numbers<[1], [0], [0], [1], [0, 0, 1, 1], [], []>} : vector<4x192xbf16>, vector<192x2xbf16>, vector<4x2xf32> -> vector<4x2xf32>
    %297 = arith.addf %288, %296 : vector<4x2xf32>
    %c0_239 = arith.constant 0 : index
    %c0_240 = arith.constant 0 : index
    %298 = vector.load %arg24[%c0_239, %c0_240] : memref<1x2xf32, #tpu.memory_space<vmem>>, vector<1x2xf32>
    %299 = vector.broadcast %298 : vector<1x2xf32> to vector<4x2xf32>
    %300 = arith.addf %297, %299 : vector<4x2xf32>
    %c0_241 = arith.constant 0 : index
    %c0_242 = arith.constant 0 : index
    %301 = vector.load %arg25[%c0_241, %c0_242] : memref<4x2xf32, #tpu.memory_space<vmem>>, vector<4x2xf32>
    tpu.vector_store %arg25[%c0_241, %c0_242], %300 {strides = array<i32>} : memref<4x2xf32, #tpu.memory_space<vmem>>, vector<4x2xf32>,
    return
  }
}

</mosaic_0001>

<llo_original>
// kernel: _forward.1
$region0: #{_forward.1}
  #allocation0 [shape = 'u32[]', space=smem, size = 0x4, offset = 0x4, fixed_abs, tag = 'smem constant byte address 0x4 - core index']
  #allocation1 [shape = 'u32[72,128]{1,0:T(1,128)}', space=vmem, size = 0x9000, scoped, tag = 'internal scratch']
  %s0 = inlined_call_operand.vmem [shape: f32[64,32], index: 0, kind: input, shape index: {}]
  %s1 = inlined_call_operand.vmem [shape: bf16[4,32,64], index: 1, kind: input, shape index: {}]
  %s2 = inlined_call_operand.vmem [shape: bf16[4,32,128], index: 2, kind: input, shape index: {}]
  %s3 = inlined_call_operand.vmem [shape: f32[1,128], index: 3, kind: input, shape index: {}]
  %s4 = inlined_call_operand.vmem [shape: bf16[4,16,32], index: 4, kind: input, shape index: {}]
  %s5 = inlined_call_operand.vmem [shape: bf16[4,128,128], index: 5, kind: input, shape index: {}]
  %s6 = inlined_call_operand.vmem [shape: f32[128,16], index: 6, kind: input, shape index: {}]
  %s7 = inlined_call_operand.vmem [shape: f32[16,128], index: 7, kind: input, shape index: {}]
  %s8 = inlined_call_operand.vmem [shape: f32[1,16], index: 8, kind: input, shape index: {}]
  %s9 = inlined_call_operand.vmem [shape: f32[1,16], index: 9, kind: input, shape index: {}]
  %s10 = inlined_call_operand.vmem [shape: bf16[4,8,16], index: 10, kind: input, shape index: {}]
  %s11 = inlined_call_operand.vmem [shape: bf16[4,128,128], index: 11, kind: input, shape index: {}]
  %s12 = inlined_call_operand.vmem [shape: f32[128,32], index: 12, kind: input, shape index: {}]
  %s13 = inlined_call_operand.vmem [shape: f32[32,128], index: 13, kind: input, shape index: {}]
  %s14 = inlined_call_operand.vmem [shape: f32[1,32], index: 14, kind: input, shape index: {}]
  %s15 = inlined_call_operand.vmem [shape: f32[1,32], index: 15, kind: input, shape index: {}]
  %s16 = inlined_call_operand.vmem [shape: bf16[4,6,8], index: 16, kind: input, shape index: {}]
  %s17 = inlined_call_operand.vmem [shape: bf16[4,128,192], index: 17, kind: input, shape index: {}]
  %s18 = inlined_call_operand.vmem [shape: f32[192,64], index: 18, kind: input, shape index: {}]
  %s19 = inlined_call_operand.vmem [shape: f32[64,192], index: 19, kind: input, shape index: {}]
  %s20 = inlined_call_operand.vmem [shape: f32[1,64], index: 20, kind: input, shape index: {}]
  %s21 = inlined_call_operand.vmem [shape: f32[1,64], index: 21, kind: input, shape index: {}]
  %s22 = inlined_call_operand.vmem [shape: bf16[4,4,6], index: 22, kind: input, shape index: {}]
  %s23 = inlined_call_operand.vmem [shape: bf16[4,192,2], index: 23, kind: input, shape index: {}]
  %s24 = inlined_call_operand.vmem [shape: f32[1,2], index: 24, kind: input, shape index: {}]
  %s25 = inlined_call_operand.hbm [shape: f32[4,2], index: 25, kind: output, shape index: {}]
  %s26 = sld [smem:[#allocation0]]
  $region110: #{_forward.1} parent=0
    _
  %s28 = ssub.s32 1, %s26
  %s29 = scalar_select 0, %s28, %s26
  $region1: #{_forward.1} parent=0
    #allocation2 [shape = 'u8[2048]{0}', space=vmem, size = 0x800, scoped, tag = 'output window, operand 0, single buffered']
    #allocation3 [shape = 's32[1]{0}', space=sflag, size = 0x4, scoped, tag = 'scoped memory for _forward.1']
    %30 = vsyncpa [#allocation3], 0
    // Predicated region
    $region2: #{_forward.1} parent=1 // pred_check
      _
    $region3: #{_forward.1} parent=1 // pred_check_branch
      %32 = sbr.rel (0) target = $region5
    $region4: #{_forward.1} parent=1 // pred_region
      _
    $region5: #{_forward.1} parent=1 // pred_fallthru
      _
    // Predicated region
    $region6: #{_forward.1} parent=1 // pred_check
      _
    $region7: #{_forward.1} parent=1 // pred_check_branch
      %34 = sbr.rel (0) target = $region9
    $region8: #{_forward.1} parent=1 // pred_region
      _
    $region9: #{_forward.1} parent=1 // pred_fallthru
      _
    // Predicated region
    $region10: #{_forward.1} parent=1 // pred_check
      _
    $region11: #{_forward.1} parent=1 // pred_check_branch
      %36 = sbr.rel (0) target = $region13
    $region12: #{_forward.1} parent=1 // pred_region
      _
    $region13: #{_forward.1} parent=1 // pred_fallthru
      _
    // Predicated region
    $region14: #{_forward.1} parent=1 // pred_check
      _
    $region15: #{_forward.1} parent=1 // pred_check_branch
      %38 = sbr.rel (0) target = $region17
    $region16: #{_forward.1} parent=1 // pred_region
      _
    $region17: #{_forward.1} parent=1 // pred_fallthru
      _
    // Predicated region
    $region18: #{_forward.1} parent=1 // pred_check
      _
    $region19: #{_forward.1} parent=1 // pred_check_branch
      %40 = sbr.rel (0) target = $region21
    $region20: #{_forward.1} parent=1 // pred_region
      _
    $region21: #{_forward.1} parent=1 // pred_fallthru
      _
    // Predicated region
    $region22: #{_forward.1} parent=1 // pred_check
      _
    $region23: #{_forward.1} parent=1 // pred_check_branch
      %42 = sbr.rel (0) target = $region25
    $region24: #{_forward.1} parent=1 // pred_region
      _
    $region25: #{_forward.1} parent=1 // pred_fallthru
      _
    // Predicated region
    $region26: #{_forward.1} parent=1 // pred_check
      _
    $region27: #{_forward.1} parent=1 // pred_check_branch
      %44 = sbr.rel (0) target = $region29
    $region28: #{_forward.1} parent=1 // pred_region
      _
    $region29: #{_forward.1} parent=1 // pred_fallthru
      _
    // Predicated region
    $region30: #{_forward.1} parent=1 // pred_check
      _
    $region31: #{_forward.1} parent=1 // pred_check_branch
      %46 = sbr.rel (0) target = $region33
    $region32: #{_forward.1} parent=1 // pred_region
      _
    $region33: #{_forward.1} parent=1 // pred_fallthru
      _
    // Predicated region
    $region34: #{_forward.1} parent=1 // pred_check
      _
    $region35: #{_forward.1} parent=1 // pred_check_branch
      %48 = sbr.rel (0) target = $region37
    $region36: #{_forward.1} parent=1 // pred_region
      _
    $region37: #{_forward.1} parent=1 // pred_fallthru
      _
    // Predicated region
    $region38: #{_forward.1} parent=1 // pred_check
      _
    $region39: #{_forward.1} parent=1 // pred_check_branch
      %50 = sbr.rel (0) target = $region41
    $region40: #{_forward.1} parent=1 // pred_region
      _
    $region41: #{_forward.1} parent=1 // pred_fallthru
      _
    // Predicated region
    $region42: #{_forward.1} parent=1 // pred_check
      _
    $region43: #{_forward.1} parent=1 // pred_check_branch
      %52 = sbr.rel (0) target = $region45
    $region44: #{_forward.1} parent=1 // pred_region
      _
    $region45: #{_forward.1} parent=1 // pred_fallthru
      _
    // Predicated region
    $region46: #{_forward.1} parent=1 // pred_check
      _
    $region47: #{_forward.1} parent=1 // pred_check_branch
      %54 = sbr.rel (0) target = $region49
    $region48: #{_forward.1} parent=1 // pred_region
      _
    $region49: #{_forward.1} parent=1 // pred_fallthru
      _
    // Predicated region
    $region50: #{_forward.1} parent=1 // pred_check
      _
    $region51: #{_forward.1} parent=1 // pred_check_branch
      %56 = sbr.rel (0) target = $region53
    $region52: #{_forward.1} parent=1 // pred_region
      _
    $region53: #{_forward.1} parent=1 // pred_fallthru
      _
    // Predicated region
    $region54: #{_forward.1} parent=1 // pred_check
      _
    $region55: #{_forward.1} parent=1 // pred_check_branch
      %58 = sbr.rel (0) target = $region57
    $region56: #{_forward.1} parent=1 // pred_region
      _
    $region57: #{_forward.1} parent=1 // pred_fallthru
      _
    // Predicated region
    $region58: #{_forward.1} parent=1 // pred_check
      _
    $region59: #{_forward.1} parent=1 // pred_check_branch
      %60 = sbr.rel (0) target = $region61
    $region60: #{_forward.1} parent=1 // pred_region
      _
    $region61: #{_forward.1} parent=1 // pred_fallthru
      _
    // Predicated region
    $region62: #{_forward.1} parent=1 // pred_check
      _
    $region63: #{_forward.1} parent=1 // pred_check_branch
      %62 = sbr.rel (0) target = $region65
    $region64: #{_forward.1} parent=1 // pred_region
      _
    $region65: #{_forward.1} parent=1 // pred_fallthru
      _
    // Predicated region
    $region66: #{_forward.1} parent=1 // pred_check
      _
    $region67: #{_forward.1} parent=1 // pred_check_branch
      %64 = sbr.rel (0) target = $region69
    $region68: #{_forward.1} parent=1 // pred_region
      _
    $region69: #{_forward.1} parent=1 // pred_fallthru
      _
    // Predicated region
    $region70: #{_forward.1} parent=1 // pred_check
      _
    $region71: #{_forward.1} parent=1 // pred_check_branch
      %66 = sbr.rel (0) target = $region73
    $region72: #{_forward.1} parent=1 // pred_region
      _
    $region73: #{_forward.1} parent=1 // pred_fallthru
      _
    // Predicated region
    $region74: #{_forward.1} parent=1 // pred_check
      _
    $region75: #{_forward.1} parent=1 // pred_check_branch
      %68 = sbr.rel (0) target = $region77
    $region76: #{_forward.1} parent=1 // pred_region
      _
    $region77: #{_forward.1} parent=1 // pred_fallthru
      _
    // Predicated region
    $region78: #{_forward.1} parent=1 // pred_check
      _
    $region79: #{_forward.1} parent=1 // pred_check_branch
      %70 = sbr.rel (0) target = $region81
    $region80: #{_forward.1} parent=1 // pred_region
      _
    $region81: #{_forward.1} parent=1 // pred_fallthru
      _
    // Predicated region
    $region82: #{_forward.1} parent=1 // pred_check
      _
    $region83: #{_forward.1} parent=1 // pred_check_branch
      %72 = sbr.rel (0) target = $region85
    $region84: #{_forward.1} parent=1 // pred_region
      _
    $region85: #{_forward.1} parent=1 // pred_fallthru
      _
    // Predicated region
    $region86: #{_forward.1} parent=1 // pred_check
      _
    $region87: #{_forward.1} parent=1 // pred_check_branch
      %74 = sbr.rel (0) target = $region89
    $region88: #{_forward.1} parent=1 // pred_region
      _
    $region89: #{_forward.1} parent=1 // pred_fallthru
      _
    // Predicated region
    $region90: #{_forward.1} parent=1 // pred_check
      _
    $region91: #{_forward.1} parent=1 // pred_check_branch
      %76 = sbr.rel (0) target = $region93
    $region92: #{_forward.1} parent=1 // pred_region
      _
    $region93: #{_forward.1} parent=1 // pred_fallthru
      _
    // Predicated region
    $region94: #{_forward.1} parent=1 // pred_check
      _
    $region95: #{_forward.1} parent=1 // pred_check_branch
      %78 = sbr.rel (0) target = $region97
    $region96: #{_forward.1} parent=1 // pred_region
      _
    $region97: #{_forward.1} parent=1 // pred_fallthru
      _
    // Predicated region
    $region98: #{_forward.1} parent=1 // pred_check
      _
    $region99: #{_forward.1} parent=1 // pred_check_branch
      %80 = sbr.rel (0) target = $region101
    $region100: #{_forward.1} parent=1 // pred_region
      _
    $region101: #{_forward.1} parent=1 // pred_fallthru
      _
    %v82 = vld [vmem:[%s0] sm:$0xff]
    %v83 = vld [vmem:[%s0 + $0x8] sm:$0xff]
    %v84 = vld [vmem:[%s0 + $0x10] sm:$0xff]
    %v85 = vld [vmem:[%s0 + $0x18] sm:$0xff]
    %v86 = vld [vmem:[%s0 + $0x20] sm:$0xff]
    %v87 = vld [vmem:[%s0 + $0x28] sm:$0xff]
    %v88 = vld [vmem:[%s0 + $0x30] sm:$0xff]
    %v89 = vld [vmem:[%s0 + $0x38] sm:$0xff]
    %v90 = vld [vmem:[%s1] sm:$0xf]
    %v91 = vld [vmem:[%s1 + $0x4] sm:$0xf]
    %v92 = vld [vmem:[%s1 + $0x8] sm:$0xf]
    %v93 = vld [vmem:[%s1 + $0xc] sm:$0xf]
    %v94 = vpack.c.bf16 %v83, %v82
    %v95 = vpack.c.bf16 %v85, %v84
    %v96 = vpack.c.bf16 %v87, %v86
    %v97 = vpack.c.bf16 %v89, %v88
    %v102 = vunpack.c.l.b16 %v90
    %v103 = vunpack.c.l.b16 %v91
    %v104 = vunpack.c.l.b16 %v92
    %v105 = vunpack.c.l.b16 %v93
    %v106 = vpack.c.b16 %v103, %v102
    %v107 = vpack.c.b16 %v105, %v104
    %vm108 = vcmask 523264
    %v110 = vsel %vm108, %v106, 0
    %v113 = vsel %vm108, %v107, 0
    %115 = vmatpush.bf16.msra.mxu0 0
    %116 = vmatpush.bf16.msra.mxu0 0
    %117 = vmatpush.bf16.msra.mxu0 0
    %118 = vmatpush.bf16.msra.mxu0 0
    %119 = vmatpush.bf16.msra.mxu0 %v97
    %120 = vmatpush.bf16.msra.mxu0 %v96
    %121 = vmatpush.bf16.msra.mxu0 %v95
    %122 = vmatpush.bf16.msra.mxu0 %v94
    %123 = vmatmul.bf16.gmra.mxu0 %v110
    %v124 = vpop.f32.mrf.mxu0
    %v125 = vadd.f32 0.0, %v124
    %v126 = vpop.f32.mrf.mxu0
    %v127 = vadd.f32 0.0, %v126
    %128 = vmatmul.bf16.gmra.mxu0 %v113
    %v129 = vpop.f32.mrf.mxu0
    %v130 = vadd.f32 0.0, %v129
    %v131 = vpop.f32.mrf.mxu0
    %v132 = vadd.f32 0.0, %v131
    %133 = vdwg.mxu0
    %v134 = vld [vmem:[%s2] sm:$0xf]
    %v135 = vld [vmem:[%s2 + $0x4] sm:$0xf]
    %v136 = vld [vmem:[%s2 + $0x8] sm:$0xf]
    %v137 = vld [vmem:[%s2 + $0xc] sm:$0xf]
    %v138 = vpack.c.bf16 %v127, %v125
    %v139 = vpack.c.bf16 %v132, %v130
    %s140 = scalar_lea.vmem %s1, 16
    %v141 = vld [vmem:[%s140] sm:$0xf]
    %v142 = vld [vmem:[%s140 + $0x4] sm:$0xf]
    %v143 = vld [vmem:[%s140 + $0x8] sm:$0xf]
    %v144 = vld [vmem:[%s140 + $0xc] sm:$0xf]
    %v149 = vunpack.c.l.b16 %v141
    %v150 = vunpack.c.l.b16 %v142
    %v151 = vunpack.c.l.b16 %v143
    %v152 = vunpack.c.l.b16 %v144
    %v153 = vpack.c.b16 %v150, %v149
    %v154 = vpack.c.b16 %v152, %v151
    %v156 = vsel %vm108, %v153, 0
    %v159 = vsel %vm108, %v154, 0
    %161 = vmatpush.bf16.msra.mxu0 0
    %162 = vmatpush.bf16.msra.mxu0 0
    %163 = vmatpush.bf16.msra.mxu0 0
    %164 = vmatpush.bf16.msra.mxu0 0
    %165 = vmatpush.bf16.msra.mxu0 %v97
    %166 = vmatpush.bf16.msra.mxu0 %v96
    %167 = vmatpush.bf16.msra.mxu0 %v95
    %168 = vmatpush.bf16.msra.mxu0 %v94
    %169 = vmatmul.bf16.gmra.mxu0 %v156
    %v170 = vpop.f32.mrf.mxu0
    %v171 = vadd.f32 0.0, %v170
    %v172 = vpop.f32.mrf.mxu0
    %v173 = vadd.f32 0.0, %v172
    %174 = vmatmul.bf16.gmra.mxu0 %v159
    %v175 = vpop.f32.mrf.mxu0
    %v176 = vadd.f32 0.0, %v175
    %v177 = vpop.f32.mrf.mxu0
    %v178 = vadd.f32 0.0, %v177
    %179 = vdwg.mxu0
    %s180 = scalar_lea.vmem %s2, 16
    %v181 = vld [vmem:[%s180] sm:$0xf]
    %v182 = vld [vmem:[%s180 + $0x4] sm:$0xf]
    %v183 = vld [vmem:[%s180 + $0x8] sm:$0xf]
    %v184 = vld [vmem:[%s180 + $0xc] sm:$0xf]
    %v185 = vpack.c.bf16 %v173, %v171
    %v186 = vpack.c.bf16 %v178, %v176
    %v191 = vunpack.c.l.b16 %v181
    %v192 = vunpack.c.l.b16 %v182
    %v193 = vunpack.c.l.b16 %v183
    %v194 = vunpack.c.l.b16 %v184
    %v195 = vpack.c.b16 %v192, %v191
    %v196 = vpack.c.b16 %v194, %v193
    %vm199 = vcmask 261120
    %v201 = vsel %vm199, %v185, 0
    %v204 = vsel %vm199, %v186, 0
    %206 = vmatpush.bf16.msra.mxu0 0
    %207 = vmatpush.bf16.msra.mxu0 0
    %208 = vmatpush.bf16.msra.mxu0 0
    %209 = vmatpush.bf16.msra.mxu0 0
    %210 = vmatpush.bf16.msra.mxu0 0
    %211 = vmatpush.bf16.msra.mxu0 0
    %212 = vmatpush.bf16.msra.mxu0 %v196
    %213 = vmatpush.bf16.msra.mxu0 %v195
    %214 = vmatmul.bf16.gmra.mxu0 %v201
    %v215 = vpop.f32.mrf.mxu0
    %v216 = vadd.f32 0.0, %v215
    %v217 = vpop.f32.mrf.mxu0
    %v218 = vadd.f32 0.0, %v217
    %219 = vmatmul.bf16.gmra.mxu0 %v204
    %v220 = vpop.f32.mrf.mxu0
    %v221 = vadd.f32 0.0, %v220
    %v222 = vpop.f32.mrf.mxu0
    %v223 = vadd.f32 0.0, %v222
    %224 = vdwg.mxu0
    %v229 = vunpack.c.l.b16 %v134
    %v230 = vunpack.c.l.b16 %v135
    %v231 = vunpack.c.l.b16 %v136
    %v232 = vunpack.c.l.b16 %v137
    %v233 = vpack.c.b16 %v230, %v229
    %v234 = vpack.c.b16 %v232, %v231
    %v238 = vsel %vm199, %v138, 0
    %v241 = vsel %vm199, %v139, 0
    %243 = vmatpush.bf16.msra.mxu0 0
    %244 = vmatpush.bf16.msra.mxu0 0
    %245 = vmatpush.bf16.msra.mxu0 0
    %246 = vmatpush.bf16.msra.mxu0 0
    %247 = vmatpush.bf16.msra.mxu0 0
    %248 = vmatpush.bf16.msra.mxu0 0
    %249 = vmatpush.bf16.msra.mxu0 %v234
    %250 = vmatpush.bf16.msra.mxu0 %v233
    %251 = vmatmul.bf16.gmra.mxu0 %v238
    %v252 = vpop.f32.mrf.mxu0
    %v253 = vadd.f32 %v216, %v252
    %v254 = vpop.f32.mrf.mxu0
    %v255 = vadd.f32 %v218, %v254
    %256 = vmatmul.bf16.gmra.mxu0 %v241
    %v257 = vpop.f32.mrf.mxu0
    %v258 = vadd.f32 %v221, %v257
    %v259 = vpop.f32.mrf.mxu0
    %v260 = vadd.f32 %v223, %v259
    %261 = vdwg.mxu0
    %s262 = scalar_lea.vmem %s1, 32
    %v263 = vld [vmem:[%s262] sm:$0xf]
    %v264 = vld [vmem:[%s262 + $0x4] sm:$0xf]
    %v265 = vld [vmem:[%s262 + $0x8] sm:$0xf]
    %v266 = vld [vmem:[%s262 + $0xc] sm:$0xf]
    %v271 = vunpack.c.l.b16 %v263
    %v272 = vunpack.c.l.b16 %v264
    %v273 = vunpack.c.l.b16 %v265
    %v274 = vunpack.c.l.b16 %v266
    %v275 = vpack.c.b16 %v272, %v271
    %v276 = vpack.c.b16 %v274, %v273
    %v278 = vsel %vm108, %v275, 0
    %v281 = vsel %vm108, %v276, 0
    %283 = vmatpush.bf16.msra.mxu0 0
    %284 = vmatpush.bf16.msra.mxu0 0
    %285 = vmatpush.bf16.msra.mxu0 0
    %286 = vmatpush.bf16.msra.mxu0 0
    %287 = vmatpush.bf16.msra.mxu0 %v97
    %288 = vmatpush.bf16.msra.mxu0 %v96
    %289 = vmatpush.bf16.msra.mxu0 %v95
    %290 = vmatpush.bf16.msra.mxu0 %v94
    %291 = vmatmul.bf16.gmra.mxu0 %v278
    %v292 = vpop.f32.mrf.mxu0
    %v293 = vadd.f32 0.0, %v292
    %v294 = vpop.f32.mrf.mxu0
    %v295 = vadd.f32 0.0, %v294
    %296 = vmatmul.bf16.gmra.mxu0 %v281
    %v297 = vpop.f32.mrf.mxu0
    %v298 = vadd.f32 0.0, %v297
    %v299 = vpop.f32.mrf.mxu0
    %v300 = vadd.f32 0.0, %v299
    %301 = vdwg.mxu0
    %s302 = scalar_lea.vmem %s2, 32
    %v303 = vld [vmem:[%s302] sm:$0xf]
    %v304 = vld [vmem:[%s302 + $0x4] sm:$0xf]
    %v305 = vld [vmem:[%s302 + $0x8] sm:$0xf]
    %v306 = vld [vmem:[%s302 + $0xc] sm:$0xf]
    %v307 = vpack.c.bf16 %v295, %v293
    %v308 = vpack.c.bf16 %v300, %v298
    %v313 = vunpack.c.l.b16 %v303
    %v314 = vunpack.c.l.b16 %v304
    %v315 = vunpack.c.l.b16 %v305
    %v316 = vunpack.c.l.b16 %v306
    %v317 = vpack.c.b16 %v314, %v313
    %v318 = vpack.c.b16 %v316, %v315
    %v322 = vsel %vm199, %v307, 0
    %v325 = vsel %vm199, %v308, 0
    %327 = vmatpush.bf16.msra.mxu0 0
    %328 = vmatpush.bf16.msra.mxu0 0
    %329 = vmatpush.bf16.msra.mxu0 0
    %330 = vmatpush.bf16.msra.mxu0 0
    %331 = vmatpush.bf16.msra.mxu0 0
    %332 = vmatpush.bf16.msra.mxu0 0
    %333 = vmatpush.bf16.msra.mxu0 %v318
    %334 = vmatpush.bf16.msra.mxu0 %v317
    %335 = vmatmul.bf16.gmra.mxu0 %v322
    %v336 = vpop.f32.mrf.mxu0
    %v337 = vadd.f32 0.0, %v336
    %v338 = vpop.f32.mrf.mxu0
    %v339 = vadd.f32 0.0, %v338
    %340 = vmatmul.bf16.gmra.mxu0 %v325
    %v341 = vpop.f32.mrf.mxu0
    %v342 = vadd.f32 0.0, %v341
    %v343 = vpop.f32.mrf.mxu0
    %v344 = vadd.f32 0.0, %v343
    %345 = vdwg.mxu0
    %v346 = vadd.f32 %v253, %v337
    %v347 = vadd.f32 %v255, %v339
    %v348 = vadd.f32 %v258, %v342
    %v349 = vadd.f32 %v260, %v344
    %s350 = scalar_lea.vmem %s1, 48
    %v351 = vld [vmem:[%s350] sm:$0xf]
    %v352 = vld [vmem:[%s350 + $0x4] sm:$0xf]
    %v353 = vld [vmem:[%s350 + $0x8] sm:$0xf]
    %v354 = vld [vmem:[%s350 + $0xc] sm:$0xf]
    %v359 = vunpack.c.l.b16 %v351
    %v360 = vunpack.c.l.b16 %v352
    %v361 = vunpack.c.l.b16 %v353
    %v362 = vunpack.c.l.b16 %v354
    %v363 = vpack.c.b16 %v360, %v359
    %v364 = vpack.c.b16 %v362, %v361
    %v366 = vsel %vm108, %v363, 0
    %v369 = vsel %vm108, %v364, 0
    %371 = vmatpush.bf16.msra.mxu0 0
    %372 = vmatpush.bf16.msra.mxu0 0
    %373 = vmatpush.bf16.msra.mxu0 0
    %374 = vmatpush.bf16.msra.mxu0 0
    %375 = vmatpush.bf16.msra.mxu0 %v97
    %376 = vmatpush.bf16.msra.mxu0 %v96
    %377 = vmatpush.bf16.msra.mxu0 %v95
    %378 = vmatpush.bf16.msra.mxu0 %v94
    %379 = vmatmul.bf16.gmra.mxu0 %v366
    %v380 = vpop.f32.mrf.mxu0
    %v381 = vadd.f32 0.0, %v380
    %v382 = vpop.f32.mrf.mxu0
    %v383 = vadd.f32 0.0, %v382
    %384 = vmatmul.bf16.gmra.mxu0 %v369
    %v385 = vpop.f32.mrf.mxu0
    %v386 = vadd.f32 0.0, %v385
    %v387 = vpop.f32.mrf.mxu0
    %v388 = vadd.f32 0.0, %v387
    %389 = vdwg.mxu0
    %s390 = scalar_lea.vmem %s2, 48
    %v391 = vld [vmem:[%s390] sm:$0xf]
    %v392 = vld [vmem:[%s390 + $0x4] sm:$0xf]
    %v393 = vld [vmem:[%s390 + $0x8] sm:$0xf]
    %v394 = vld [vmem:[%s390 + $0xc] sm:$0xf]
    %v395 = vpack.c.bf16 %v383, %v381
    %v396 = vpack.c.bf16 %v388, %v386
    %v401 = vunpack.c.l.b16 %v391
    %v402 = vunpack.c.l.b16 %v392
    %v403 = vunpack.c.l.b16 %v393
    %v404 = vunpack.c.l.b16 %v394
    %v405 = vpack.c.b16 %v402, %v401
    %v406 = vpack.c.b16 %v404, %v403
    %v410 = vsel %vm199, %v395, 0
    %v413 = vsel %vm199, %v396, 0
    %415 = vmatpush.bf16.msra.mxu0 0
    %416 = vmatpush.bf16.msra.mxu0 0
    %417 = vmatpush.bf16.msra.mxu0 0
    %418 = vmatpush.bf16.msra.mxu0 0
    %419 = vmatpush.bf16.msra.mxu0 0
    %420 = vmatpush.bf16.msra.mxu0 0
    %421 = vmatpush.bf16.msra.mxu0 %v406
    %422 = vmatpush.bf16.msra.mxu0 %v405
    %423 = vmatmul.bf16.gmra.mxu0 %v410
    %v424 = vpop.f32.mrf.mxu0
    %v425 = vadd.f32 0.0, %v424
    %v426 = vpop.f32.mrf.mxu0
    %v427 = vadd.f32 0.0, %v426
    %428 = vmatmul.bf16.gmra.mxu0 %v413
    %v429 = vpop.f32.mrf.mxu0
    %v430 = vadd.f32 0.0, %v429
    %v431 = vpop.f32.mrf.mxu0
    %v432 = vadd.f32 0.0, %v431
    %433 = vdwg.mxu0
    %v434 = vadd.f32 %v346, %v425
    %v435 = vadd.f32 %v347, %v427
    %v436 = vadd.f32 %v348, %v430
    %v437 = vadd.f32 %v349, %v432
    %v438 = vld [vmem:[%s3] sm:$0x1]
    %v440 = vperm.slane %v438, 0
    %v442 = vadd.f32 %v434, %v440
    %v443 = vadd.f32 %v435, %v440
    %v444 = vadd.f32 %v436, %v440
    %v445 = vadd.f32 %v437, %v440
    %vm446 = vcmp.ge.f32.partialorder %v442, 0.0
    %vm447 = vcmp.ge.f32.partialorder %v443, 0.0
    %vm448 = vcmp.ge.f32.partialorder %v444, 0.0
    %vm449 = vcmp.ge.f32.partialorder %v445, 0.0
    %v450 = vmul.f32 %v442, 0.2
    %v451 = vmul.f32 %v443, 0.2
    %v452 = vmul.f32 %v444, 0.2
    %v453 = vmul.f32 %v445, 0.2
    %v454 = vsel %vm446, %v442, %v450
    %v455 = vsel %vm447, %v443, %v451
    %v456 = vsel %vm448, %v444, %v452
    %v457 = vsel %vm449, %v445, %v453
    %v458 = vld [vmem:[%s4] sm:$0xf]
    %v459 = vld [vmem:[%s4 + $0x4] sm:$0xf]
    %v460 = vpack.c.bf16 %v455, %v454
    %v461 = vpack.c.bf16 %v457, %v456
    %v464 = vunpack.c.l.b16 %v458
    %v465 = vunpack.c.l.b16 %v459
    %v466 = vpack.c.b16 %v465, %v464
    %v468 = vsel %vm199, %v466, 0
    %470 = vmatpush.bf16.msra.mxu0 0
    %471 = vmatpush.bf16.msra.mxu0 0
    %472 = vmatpush.bf16.msra.mxu0 0
    %473 = vmatpush.bf16.msra.mxu0 0
    %474 = vmatpush.bf16.msra.mxu0 0
    %475 = vmatpush.bf16.msra.mxu0 0
    %476 = vmatpush.bf16.msra.mxu0 %v461
    %477 = vmatpush.bf16.msra.mxu0 %v460
    %478 = vmatmul.bf16.gmra.mxu0 %v468
    %v479 = vpop.f32.mrf.mxu0
    %v480 = vadd.f32 0.0, %v479
    %v481 = vpop.f32.mrf.mxu0
    %v482 = vadd.f32 0.0, %v481
    %483 = vdwg.mxu0
    %v484 = vld [vmem:[%s5] sm:$0xf]
    %v485 = vld [vmem:[%s5 + $0x4] sm:$0xf]
    %v486 = vld [vmem:[%s5 + $0x8] sm:$0xf]
    %v487 = vld [vmem:[%s5 + $0xc] sm:$0xf]
    %v488 = vld [vmem:[%s5 + $0x10] sm:$0xf]
    %v489 = vld [vmem:[%s5 + $0x14] sm:$0xf]
    %v490 = vld [vmem:[%s5 + $0x18] sm:$0xf]
    %v491 = vld [vmem:[%s5 + $0x1c] sm:$0xf]
    %v492 = vld [vmem:[%s5 + $0x20] sm:$0xf]
    %v493 = vld [vmem:[%s5 + $0x24] sm:$0xf]
    %v494 = vld [vmem:[%s5 + $0x28] sm:$0xf]
    %v495 = vld [vmem:[%s5 + $0x2c] sm:$0xf]
    %v496 = vld [vmem:[%s5 + $0x30] sm:$0xf]
    %v497 = vld [vmem:[%s5 + $0x34] sm:$0xf]
    %v498 = vld [vmem:[%s5 + $0x38] sm:$0xf]
    %v499 = vld [vmem:[%s5 + $0x3c] sm:$0xf]
    %v500 = vpack.c.bf16 %v482, %v480
    %s501 = scalar_lea.vmem %s4, 8
    %v502 = vld [vmem:[%s501] sm:$0xf]
    %v503 = vld [vmem:[%s501 + $0x4] sm:$0xf]
    %v506 = vunpack.c.l.b16 %v502
    %v507 = vunpack.c.l.b16 %v503
    %v508 = vpack.c.b16 %v507, %v506
    %v510 = vsel %vm199, %v508, 0
    %512 = vmatpush.bf16.msra.mxu0 0
    %513 = vmatpush.bf16.msra.mxu0 0
    %514 = vmatpush.bf16.msra.mxu0 0
    %515 = vmatpush.bf16.msra.mxu0 0
    %516 = vmatpush.bf16.msra.mxu0 0
    %517 = vmatpush.bf16.msra.mxu0 0
    %518 = vmatpush.bf16.msra.mxu0 %v461
    %519 = vmatpush.bf16.msra.mxu0 %v460
    %520 = vmatmul.bf16.gmra.mxu0 %v510
    %v521 = vpop.f32.mrf.mxu0
    %v522 = vadd.f32 0.0, %v521
    %v523 = vpop.f32.mrf.mxu0
    %v524 = vadd.f32 0.0, %v523
    %525 = vdwg.mxu0
    %s526 = scalar_lea.vmem %s5, 64
    %v527 = vld [vmem:[%s526] sm:$0xf]
    %v528 = vld [vmem:[%s526 + $0x4] sm:$0xf]
    %v529 = vld [vmem:[%s526 + $0x8] sm:$0xf]
    %v530 = vld [vmem:[%s526 + $0xc] sm:$0xf]
    %v531 = vld [vmem:[%s526 + $0x10] sm:$0xf]
    %v532 = vld [vmem:[%s526 + $0x14] sm:$0xf]
    %v533 = vld [vmem:[%s526 + $0x18] sm:$0xf]
    %v534 = vld [vmem:[%s526 + $0x1c] sm:$0xf]
    %v535 = vld [vmem:[%s526 + $0x20] sm:$0xf]
    %v536 = vld [vmem:[%s526 + $0x24] sm:$0xf]
    %v537 = vld [vmem:[%s526 + $0x28] sm:$0xf]
    %v538 = vld [vmem:[%s526 + $0x2c] sm:$0xf]
    %v539 = vld [vmem:[%s526 + $0x30] sm:$0xf]
    %v540 = vld [vmem:[%s526 + $0x34] sm:$0xf]
    %v541 = vld [vmem:[%s526 + $0x38] sm:$0xf]
    %v542 = vld [vmem:[%s526 + $0x3c] sm:$0xf]
    %v543 = vpack.c.bf16 %v524, %v522
    %v560 = vunpack.c.l.b16 %v527
    %v561 = vunpack.c.l.b16 %v528
    %v562 = vunpack.c.l.b16 %v529
    %v563 = vunpack.c.l.b16 %v530
    %v564 = vunpack.c.l.b16 %v531
    %v565 = vunpack.c.l.b16 %v532
    %v566 = vunpack.c.l.b16 %v533
    %v567 = vunpack.c.l.b16 %v534
    %v568 = vunpack.c.l.b16 %v535
    %v569 = vunpack.c.l.b16 %v536
    %v570 = vunpack.c.l.b16 %v537
    %v571 = vunpack.c.l.b16 %v538
    %v572 = vunpack.c.l.b16 %v539
    %v573 = vunpack.c.l.b16 %v540
    %v574 = vunpack.c.l.b16 %v541
    %v575 = vunpack.c.l.b16 %v542
    %v576 = vpack.c.b16 %v561, %v560
    %v577 = vpack.c.b16 %v563, %v562
    %v578 = vpack.c.b16 %v565, %v564
    %v579 = vpack.c.b16 %v567, %v566
    %v580 = vpack.c.b16 %v569, %v568
    %v581 = vpack.c.b16 %v571, %v570
    %v582 = vpack.c.b16 %v573, %v572
    %v583 = vpack.c.b16 %v575, %v574
    %592 = vmatpush.bf16.msra.mxu0 %v583
    %593 = vmatpush.bf16.msra.mxu0 %v582
    %594 = vmatpush.bf16.msra.mxu0 %v581
    %595 = vmatpush.bf16.msra.mxu0 %v580
    %596 = vmatpush.bf16.msra.mxu0 %v579
    %597 = vmatpush.bf16.msra.mxu0 %v578
    %598 = vmatpush.bf16.msra.mxu0 %v577
    %599 = vmatpush.bf16.msra.mxu0 %v576
    %600 = vmatmul.bf16.gmra.mxu0 %v543
    %v601 = vpop.f32.mrf.mxu0
    %v602 = vadd.f32 0.0, %v601
    %v603 = vpop.f32.mrf.mxu0
    %v604 = vadd.f32 0.0, %v603
    %605 = vdwg.mxu0
    %v622 = vunpack.c.l.b16 %v484
    %v623 = vunpack.c.l.b16 %v485
    %v624 = vunpack.c.l.b16 %v486
    %v625 = vunpack.c.l.b16 %v487
    %v626 = vunpack.c.l.b16 %v488
    %v627 = vunpack.c.l.b16 %v489
    %v628 = vunpack.c.l.b16 %v490
    %v629 = vunpack.c.l.b16 %v491
    %v630 = vunpack.c.l.b16 %v492
    %v631 = vunpack.c.l.b16 %v493
    %v632 = vunpack.c.l.b16 %v494
    %v633 = vunpack.c.l.b16 %v495
    %v634 = vunpack.c.l.b16 %v496
    %v635 = vunpack.c.l.b16 %v497
    %v636 = vunpack.c.l.b16 %v498
    %v637 = vunpack.c.l.b16 %v499
    %v638 = vpack.c.b16 %v623, %v622
    %v639 = vpack.c.b16 %v625, %v624
    %v640 = vpack.c.b16 %v627, %v626
    %v641 = vpack.c.b16 %v629, %v628
    %v642 = vpack.c.b16 %v631, %v630
    %v643 = vpack.c.b16 %v633, %v632
    %v644 = vpack.c.b16 %v635, %v634
    %v645 = vpack.c.b16 %v637, %v636
    %654 = vmatpush.bf16.msra.mxu0 %v645
    %655 = vmatpush.bf16.msra.mxu0 %v644
    %656 = vmatpush.bf16.msra.mxu0 %v643
    %657 = vmatpush.bf16.msra.mxu0 %v642
    %658 = vmatpush.bf16.msra.mxu0 %v641
    %659 = vmatpush.bf16.msra.mxu0 %v640
    %660 = vmatpush.bf16.msra.mxu0 %v639
    %661 = vmatpush.bf16.msra.mxu0 %v638
    %662 = vmatmul.bf16.gmra.mxu0 %v500
    %v663 = vpop.f32.mrf.mxu0
    %v664 = vadd.f32 %v602, %v663
    %v665 = vpop.f32.mrf.mxu0
    %v666 = vadd.f32 %v604, %v665
    %667 = vdwg.mxu0
    %s668 = scalar_lea.vmem %s4, 16
    %v669 = vld [vmem:[%s668] sm:$0xf]
    %v670 = vld [vmem:[%s668 + $0x4] sm:$0xf]
    %v673 = vunpack.c.l.b16 %v669
    %v674 = vunpack.c.l.b16 %v670
    %v675 = vpack.c.b16 %v674, %v673
    %v677 = vsel %vm199, %v675, 0
    %679 = vmatpush.bf16.msra.mxu0 0
    %680 = vmatpush.bf16.msra.mxu0 0
    %681 = vmatpush.bf16.msra.mxu0 0
    %682 = vmatpush.bf16.msra.mxu0 0
    %683 = vmatpush.bf16.msra.mxu0 0
    %684 = vmatpush.bf16.msra.mxu0 0
    %685 = vmatpush.bf16.msra.mxu0 %v461
    %686 = vmatpush.bf16.msra.mxu0 %v460
    %687 = vmatmul.bf16.gmra.mxu0 %v677
    %v688 = vpop.f32.mrf.mxu0
    %v689 = vadd.f32 0.0, %v688
    %v690 = vpop.f32.mrf.mxu0
    %v691 = vadd.f32 0.0, %v690
    %692 = vdwg.mxu0
    %s693 = scalar_lea.vmem %s5, 128
    %v694 = vld [vmem:[%s693] sm:$0xf]
    %v695 = vld [vmem:[%s693 + $0x4] sm:$0xf]
    %v696 = vld [vmem:[%s693 + $0x8] sm:$0xf]
    %v697 = vld [vmem:[%s693 + $0xc] sm:$0xf]
    %v698 = vld [vmem:[%s693 + $0x10] sm:$0xf]
    %v699 = vld [vmem:[%s693 + $0x14] sm:$0xf]
    %v700 = vld [vmem:[%s693 + $0x18] sm:$0xf]
    %v701 = vld [vmem:[%s693 + $0x1c] sm:$0xf]
    %v702 = vld [vmem:[%s693 + $0x20] sm:$0xf]
    %v703 = vld [vmem:[%s693 + $0x24] sm:$0xf]
    %v704 = vld [vmem:[%s693 + $0x28] sm:$0xf]
    %v705 = vld [vmem:[%s693 + $0x2c] sm:$0xf]
    %v706 = vld [vmem:[%s693 + $0x30] sm:$0xf]
    %v707 = vld [vmem:[%s693 + $0x34] sm:$0xf]
    %v708 = vld [vmem:[%s693 + $0x38] sm:$0xf]
    %v709 = vld [vmem:[%s693 + $0x3c] sm:$0xf]
    %v710 = vpack.c.bf16 %v691, %v689
    %v727 = vunpack.c.l.b16 %v694
    %v728 = vunpack.c.l.b16 %v695
    %v729 = vunpack.c.l.b16 %v696
    %v730 = vunpack.c.l.b16 %v697
    %v731 = vunpack.c.l.b16 %v698
    %v732 = vunpack.c.l.b16 %v699
    %v733 = vunpack.c.l.b16 %v700
    %v734 = vunpack.c.l.b16 %v701
    %v735 = vunpack.c.l.b16 %v702
    %v736 = vunpack.c.l.b16 %v703
    %v737 = vunpack.c.l.b16 %v704
    %v738 = vunpack.c.l.b16 %v705
    %v739 = vunpack.c.l.b16 %v706
    %v740 = vunpack.c.l.b16 %v707
    %v741 = vunpack.c.l.b16 %v708
    %v742 = vunpack.c.l.b16 %v709
    %v743 = vpack.c.b16 %v728, %v727
    %v744 = vpack.c.b16 %v730, %v729
    %v745 = vpack.c.b16 %v732, %v731
    %v746 = vpack.c.b16 %v734, %v733
    %v747 = vpack.c.b16 %v736, %v735
    %v748 = vpack.c.b16 %v738, %v737
    %v749 = vpack.c.b16 %v740, %v739
    %v750 = vpack.c.b16 %v742, %v741
    %759 = vmatpush.bf16.msra.mxu0 %v750
    %760 = vmatpush.bf16.msra.mxu0 %v749
    %761 = vmatpush.bf16.msra.mxu0 %v748
    %762 = vmatpush.bf16.msra.mxu0 %v747
    %763 = vmatpush.bf16.msra.mxu0 %v746
    %764 = vmatpush.bf16.msra.mxu0 %v745
    %765 = vmatpush.bf16.msra.mxu0 %v744
    %766 = vmatpush.bf16.msra.mxu0 %v743
    %767 = vmatmul.bf16.gmra.mxu0 %v710
    %v768 = vpop.f32.mrf.mxu0
    %v769 = vadd.f32 0.0, %v768
    %v770 = vpop.f32.mrf.mxu0
    %v771 = vadd.f32 0.0, %v770
    %772 = vdwg.mxu0
    %v773 = vadd.f32 %v664, %v769
    %v774 = vadd.f32 %v666, %v771
    %s775 = scalar_lea.vmem %s4, 24
    %v776 = vld [vmem:[%s775] sm:$0xf]
    %v777 = vld [vmem:[%s775 + $0x4] sm:$0xf]
    %v780 = vunpack.c.l.b16 %v776
    %v781 = vunpack.c.l.b16 %v777
    %v782 = vpack.c.b16 %v781, %v780
    %v784 = vsel %vm199, %v782, 0
    %786 = vmatpush.bf16.msra.mxu0 0
    %787 = vmatpush.bf16.msra.mxu0 0
    %788 = vmatpush.bf16.msra.mxu0 0
    %789 = vmatpush.bf16.msra.mxu0 0
    %790 = vmatpush.bf16.msra.mxu0 0
    %791 = vmatpush.bf16.msra.mxu0 0
    %792 = vmatpush.bf16.msra.mxu0 %v461
    %793 = vmatpush.bf16.msra.mxu0 %v460
    %794 = vmatmul.bf16.gmra.mxu0 %v784
    %v795 = vpop.f32.mrf.mxu0
    %v796 = vadd.f32 0.0, %v795
    %v797 = vpop.f32.mrf.mxu0
    %v798 = vadd.f32 0.0, %v797
    %799 = vdwg.mxu0
    %s800 = scalar_lea.vmem %s5, 192
    %v801 = vld [vmem:[%s800] sm:$0xf]
    %v802 = vld [vmem:[%s800 + $0x4] sm:$0xf]
    %v803 = vld [vmem:[%s800 + $0x8] sm:$0xf]
    %v804 = vld [vmem:[%s800 + $0xc] sm:$0xf]
    %v805 = vld [vmem:[%s800 + $0x10] sm:$0xf]
    %v806 = vld [vmem:[%s800 + $0x14] sm:$0xf]
    %v807 = vld [vmem:[%s800 + $0x18] sm:$0xf]
    %v808 = vld [vmem:[%s800 + $0x1c] sm:$0xf]
    %v809 = vld [vmem:[%s800 + $0x20] sm:$0xf]
    %v810 = vld [vmem:[%s800 + $0x24] sm:$0xf]
    %v811 = vld [vmem:[%s800 + $0x28] sm:$0xf]
    %v812 = vld [vmem:[%s800 + $0x2c] sm:$0xf]
    %v813 = vld [vmem:[%s800 + $0x30] sm:$0xf]
    %v814 = vld [vmem:[%s800 + $0x34] sm:$0xf]
    %v815 = vld [vmem:[%s800 + $0x38] sm:$0xf]
    %v816 = vld [vmem:[%s800 + $0x3c] sm:$0xf]
    %v817 = vpack.c.bf16 %v798, %v796
    %v834 = vunpack.c.l.b16 %v801
    %v835 = vunpack.c.l.b16 %v802
    %v836 = vunpack.c.l.b16 %v803
    %v837 = vunpack.c.l.b16 %v804
    %v838 = vunpack.c.l.b16 %v805
    %v839 = vunpack.c.l.b16 %v806
    %v840 = vunpack.c.l.b16 %v807
    %v841 = vunpack.c.l.b16 %v808
    %v842 = vunpack.c.l.b16 %v809
    %v843 = vunpack.c.l.b16 %v810
    %v844 = vunpack.c.l.b16 %v811
    %v845 = vunpack.c.l.b16 %v812
    %v846 = vunpack.c.l.b16 %v813
    %v847 = vunpack.c.l.b16 %v814
    %v848 = vunpack.c.l.b16 %v815
    %v849 = vunpack.c.l.b16 %v816
    %v850 = vpack.c.b16 %v835, %v834
    %v851 = vpack.c.b16 %v837, %v836
    %v852 = vpack.c.b16 %v839, %v838
    %v853 = vpack.c.b16 %v841, %v840
    %v854 = vpack.c.b16 %v843, %v842
    %v855 = vpack.c.b16 %v845, %v844
    %v856 = vpack.c.b16 %v847, %v846
    %v857 = vpack.c.b16 %v849, %v848
    %866 = vmatpush.bf16.msra.mxu0 %v857
    %867 = vmatpush.bf16.msra.mxu0 %v856
    %868 = vmatpush.bf16.msra.mxu0 %v855
    %869 = vmatpush.bf16.msra.mxu0 %v854
    %870 = vmatpush.bf16.msra.mxu0 %v853
    %871 = vmatpush.bf16.msra.mxu0 %v852
    %872 = vmatpush.bf16.msra.mxu0 %v851
    %873 = vmatpush.bf16.msra.mxu0 %v850
    %874 = vmatmul.bf16.gmra.mxu0 %v817
    %v875 = vpop.f32.mrf.mxu0
    %v876 = vadd.f32 0.0, %v875
    %v877 = vpop.f32.mrf.mxu0
    %v878 = vadd.f32 0.0, %v877
    %879 = vdwg.mxu0
    %v880 = vadd.f32 %v773, %v876
    %v881 = vadd.f32 %v774, %v878
    %v882 = vadd.f32 %v880, %v881
    %v883 = vrot.slane %v882, 4
    %v884 = vadd.f32 %v882, %v883
    %v885 = vrot.slane %v884, 2
    %v886 = vadd.f32 %v884, %v885
    %v887 = vrot.slane %v886, 1
    %v888 = vadd.f32 %v886, %v887
    %v889 = vld [vmem:[%s6] sm:$0xff]
    %v890 = vld [vmem:[%s6 + $0x8] sm:$0xff]
    %v891 = vld [vmem:[%s6 + $0x10] sm:$0xff]
    %v892 = vld [vmem:[%s6 + $0x18] sm:$0xff]
    %v893 = vld [vmem:[%s6 + $0x20] sm:$0xff]
    %v894 = vld [vmem:[%s6 + $0x28] sm:$0xff]
    %v895 = vld [vmem:[%s6 + $0x30] sm:$0xff]
    %v896 = vld [vmem:[%s6 + $0x38] sm:$0xff]
    %v897 = vld [vmem:[%s6 + $0x40] sm:$0xff]
    %v898 = vld [vmem:[%s6 + $0x48] sm:$0xff]
    %v899 = vld [vmem:[%s6 + $0x50] sm:$0xff]
    %v900 = vld [vmem:[%s6 + $0x58] sm:$0xff]
    %v901 = vld [vmem:[%s6 + $0x60] sm:$0xff]
    %v902 = vld [vmem:[%s6 + $0x68] sm:$0xff]
    %v903 = vld [vmem:[%s6 + $0x70] sm:$0xff]
    %v904 = vld [vmem:[%s6 + $0x78] sm:$0xff]
    %905 = vmatpush.msra.mxu0 %v904
    %906 = vmatpush.msra.mxu0 %v903
    %907 = vmatpush.msra.mxu0 %v902
    %908 = vmatpush.msra.mxu0 %v901
    %909 = vmatpush.msra.mxu0 %v900
    %910 = vmatpush.msra.mxu0 %v899
    %911 = vmatpush.msra.mxu0 %v898
    %912 = vmatpush.msra.mxu0 %v897
    %913 = vmatpush.msra.mxu0 %v896
    %914 = vmatpush.msra.mxu0 %v895
    %915 = vmatpush.msra.mxu0 %v894
    %916 = vmatpush.msra.mxu0 %v893
    %917 = vmatpush.msra.mxu0 %v892
    %918 = vmatpush.msra.mxu0 %v891
    %919 = vmatpush.msra.mxu0 %v890
    %920 = vmatpush.msra.mxu0 %v889
    %921 = vmatmul.f32.gmra.mxu0 %v888
    %v922 = vpop.f32.mrf.mxu0
    %v923 = vadd.f32 0.0, %v922
    %924 = vdwg.mxu0
    %v925 = vmul.f32 %v923, 0.0078125
    %v926 = vld [vmem:[%s7] sm:$0xff]
    %v927 = vld [vmem:[%s7 + $0x8] sm:$0xff]
    %vm928 = vcmask 130048
    %v930 = vsel %vm928, %v925, 0
    %932 = vmatpush.msra.mxu0 0.0
    %933 = vmatpush.msra.mxu0 0.0
    %934 = vmatpush.msra.mxu0 0.0
    %935 = vmatpush.msra.mxu0 0.0
    %936 = vmatpush.msra.mxu0 0.0
    %937 = vmatpush.msra.mxu0 0.0
    %938 = vmatpush.msra.mxu0 0.0
    %939 = vmatpush.msra.mxu0 0.0
    %940 = vmatpush.msra.mxu0 0.0
    %941 = vmatpush.msra.mxu0 0.0
    %942 = vmatpush.msra.mxu0 0.0
    %943 = vmatpush.msra.mxu0 0.0
    %944 = vmatpush.msra.mxu0 0.0
    %945 = vmatpush.msra.mxu0 0.0
    %946 = vmatpush.msra.mxu0 %v927
    %947 = vmatpush.msra.mxu0 %v926
    %948 = vmatmul.f32.gmra.mxu0 %v930
    %v949 = vpop.f32.mrf.mxu0
    %v950 = vadd.f32 0.0, %v949
    %951 = vdwg.mxu0
    %v952 = vperm.slane %v950, 0
    %v953 = vsub.f32 %v880, %v952
    %v954 = vsub.f32 %v881, %v952
    %v955 = vmul.f32 %v953, %v953
    %v956 = vmul.f32 %v954, %v954
    %v957 = vadd.f32 %v955, %v956
    %v958 = vrot.slane %v957, 4
    %v959 = vadd.f32 %v957, %v958
    %v960 = vrot.slane %v959, 2
    %v961 = vadd.f32 %v959, %v960
    %v962 = vrot.slane %v961, 1
    %v963 = vadd.f32 %v961, %v962
    %964 = vmatpush.msra.mxu0 %v904
    %965 = vmatpush.msra.mxu0 %v903
    %966 = vmatpush.msra.mxu0 %v902
    %967 = vmatpush.msra.mxu0 %v901
    %968 = vmatpush.msra.mxu0 %v900
    %969 = vmatpush.msra.mxu0 %v899
    %970 = vmatpush.msra.mxu0 %v898
    %971 = vmatpush.msra.mxu0 %v897
    %972 = vmatpush.msra.mxu0 %v896
    %973 = vmatpush.msra.mxu0 %v895
    %974 = vmatpush.msra.mxu0 %v894
    %975 = vmatpush.msra.mxu0 %v893
    %976 = vmatpush.msra.mxu0 %v892
    %977 = vmatpush.msra.mxu0 %v891
    %978 = vmatpush.msra.mxu0 %v890
    %979 = vmatpush.msra.mxu0 %v889
    %980 = vmatmul.f32.gmra.mxu0 %v963
    %v981 = vpop.f32.mrf.mxu0
    %v982 = vadd.f32 0.0, %v981
    %983 = vdwg.mxu0
    %v984 = vmul.f32 %v982, 0.0078125
    %v985 = vld [vmem:[%s8] sm:$0x1]
    %v986 = vadd.f32 %v984, 1e-05
    %v987 = vrsqrt.pop %v986
    %v988 = vmul.f32 %v987, %v986
    %v989 = vmul.f32 %v988, %v987
    %v990 = vmul.f32 0.5, %v989
    %v991 = vsub.f32 1.5, %v990
    %v992 = vmul.f32 %v987, %v991
    %vm993 = vweird.f32 %v986
    %vm994 = vweird.f32 %v987
    %vm995 = vmor %vm993, %vm994
    %v996 = vsel %vm995, %v987, %v992
    %v997 = vmul.f32 %v985, %v996
    %v998 = vld [vmem:[%s9] sm:$0x1]
    %v999 = vmul.f32 %v925, %v997
    %v1000 = vsub.f32 %v998, %v999
    %v1002 = vsel %vm928, %v997, 0
    %1004 = vmatpush.msra.mxu0 0.0
    %1005 = vmatpush.msra.mxu0 0.0
    %1006 = vmatpush.msra.mxu0 0.0
    %1007 = vmatpush.msra.mxu0 0.0
    %1008 = vmatpush.msra.mxu0 0.0
    %1009 = vmatpush.msra.mxu0 0.0
    %1010 = vmatpush.msra.mxu0 0.0
    %1011 = vmatpush.msra.mxu0 0.0
    %1012 = vmatpush.msra.mxu0 0.0
    %1013 = vmatpush.msra.mxu0 0.0
    %1014 = vmatpush.msra.mxu0 0.0
    %1015 = vmatpush.msra.mxu0 0.0
    %1016 = vmatpush.msra.mxu0 0.0
    %1017 = vmatpush.msra.mxu0 0.0
    %1018 = vmatpush.msra.mxu0 %v927
    %1019 = vmatpush.msra.mxu0 %v926
    %1020 = vmatmul.f32.gmra.mxu0 %v1002
    %v1021 = vpop.f32.mrf.mxu0
    %v1022 = vadd.f32 0.0, %v1021
    %1023 = vdwg.mxu0
    %v1024 = vperm.slane %v1022, 0
    %v1025 = vmul.f32 %v880, %v1024
    %v1026 = vmul.f32 %v881, %v1024
    %v1028 = vsel %vm928, %v1000, 0
    %1030 = vmatpush.msra.mxu0 0.0
    %1031 = vmatpush.msra.mxu0 0.0
    %1032 = vmatpush.msra.mxu0 0.0
    %1033 = vmatpush.msra.mxu0 0.0
    %1034 = vmatpush.msra.mxu0 0.0
    %1035 = vmatpush.msra.mxu0 0.0
    %1036 = vmatpush.msra.mxu0 0.0
    %1037 = vmatpush.msra.mxu0 0.0
    %1038 = vmatpush.msra.mxu0 0.0
    %1039 = vmatpush.msra.mxu0 0.0
    %1040 = vmatpush.msra.mxu0 0.0
    %1041 = vmatpush.msra.mxu0 0.0
    %1042 = vmatpush.msra.mxu0 0.0
    %1043 = vmatpush.msra.mxu0 0.0
    %1044 = vmatpush.msra.mxu0 %v927
    %1045 = vmatpush.msra.mxu0 %v926
    %1046 = vmatmul.f32.gmra.mxu0 %v1028
    %v1047 = vpop.f32.mrf.mxu0
    %v1048 = vadd.f32 0.0, %v1047
    %1049 = vdwg.mxu0
    %v1050 = vperm.slane %v1048, 0
    %v1051 = vadd.f32 %v1025, %v1050
    %v1052 = vadd.f32 %v1026, %v1050
    %vm1053 = vcmp.ge.f32.partialorder %v1051, 0.0
    %vm1054 = vcmp.ge.f32.partialorder %v1052, 0.0
    %v1055 = vmul.f32 %v1051, 0.2
    %v1056 = vmul.f32 %v1052, 0.2
    %v1057 = vsel %vm1053, %v1051, %v1055
    %v1058 = vsel %vm1054, %v1052, %v1056
    %v1059 = vld [vmem:[%s10] sm:$0xf]
    %v1060 = vpack.c.bf16 %v1058, %v1057
    %v1062 = vsel %vm928, %v1059, 0
    %1064 = vmatpush.bf16.msra.mxu0 0
    %1065 = vmatpush.bf16.msra.mxu0 0
    %1066 = vmatpush.bf16.msra.mxu0 0
    %1067 = vmatpush.bf16.msra.mxu0 0
    %1068 = vmatpush.bf16.msra.mxu0 0
    %1069 = vmatpush.bf16.msra.mxu0 0
    %1070 = vmatpush.bf16.msra.mxu0 0
    %1071 = vmatpush.bf16.msra.mxu0 %v1060
    %1072 = vmatmul.bf16.gmra.mxu0 %v1062
    %v1073 = vpop.f32.mrf.mxu0
    %v1074 = vadd.f32 0.0, %v1073
    %v1075 = vpop.f32.mrf.mxu0
    %1076 = vdwg.mxu0
    %v1077 = vld [vmem:[%s11] sm:$0xf]
    %v1078 = vld [vmem:[%s11 + $0x4] sm:$0xf]
    %v1079 = vld [vmem:[%s11 + $0x8] sm:$0xf]
    %v1080 = vld [vmem:[%s11 + $0xc] sm:$0xf]
    %v1081 = vld [vmem:[%s11 + $0x10] sm:$0xf]
    %v1082 = vld [vmem:[%s11 + $0x14] sm:$0xf]
    %v1083 = vld [vmem:[%s11 + $0x18] sm:$0xf]
    %v1084 = vld [vmem:[%s11 + $0x1c] sm:$0xf]
    %v1085 = vld [vmem:[%s11 + $0x20] sm:$0xf]
    %v1086 = vld [vmem:[%s11 + $0x24] sm:$0xf]
    %v1087 = vld [vmem:[%s11 + $0x28] sm:$0xf]
    %v1088 = vld [vmem:[%s11 + $0x2c] sm:$0xf]
    %v1089 = vld [vmem:[%s11 + $0x30] sm:$0xf]
    %v1090 = vld [vmem:[%s11 + $0x34] sm:$0xf]
    %v1091 = vld [vmem:[%s11 + $0x38] sm:$0xf]
    %v1092 = vld [vmem:[%s11 + $0x3c] sm:$0xf]
    %v1093 = vpack.c.bf16 %v1074, %v1074
    %s1094 = scalar_lea.vmem %s10, 4
    %v1095 = vld [vmem:[%s1094] sm:$0xf]
    %v1097 = vsel %vm928, %v1095, 0
    %1099 = vmatpush.bf16.msra.mxu0 0
    %1100 = vmatpush.bf16.msra.mxu0 0
    %1101 = vmatpush.bf16.msra.mxu0 0
    %1102 = vmatpush.bf16.msra.mxu0 0
    %1103 = vmatpush.bf16.msra.mxu0 0
    %1104 = vmatpush.bf16.msra.mxu0 0
    %1105 = vmatpush.bf16.msra.mxu0 0
    %1106 = vmatpush.bf16.msra.mxu0 %v1060
    %1107 = vmatmul.bf16.gmra.mxu0 %v1097
    %v1108 = vpop.f32.mrf.mxu0
    %v1109 = vadd.f32 0.0, %v1108
    %v1110 = vpop.f32.mrf.mxu0
    %1111 = vdwg.mxu0
    %s1112 = scalar_lea.vmem %s11, 64
    %v1113 = vld [vmem:[%s1112] sm:$0xf]
    %v1114 = vld [vmem:[%s1112 + $0x4] sm:$0xf]
    %v1115 = vld [vmem:[%s1112 + $0x8] sm:$0xf]
    %v1116 = vld [vmem:[%s1112 + $0xc] sm:$0xf]
    %v1117 = vld [vmem:[%s1112 + $0x10] sm:$0xf]
    %v1118 = vld [vmem:[%s1112 + $0x14] sm:$0xf]
    %v1119 = vld [vmem:[%s1112 + $0x18] sm:$0xf]
    %v1120 = vld [vmem:[%s1112 + $0x1c] sm:$0xf]
    %v1121 = vld [vmem:[%s1112 + $0x20] sm:$0xf]
    %v1122 = vld [vmem:[%s1112 + $0x24] sm:$0xf]
    %v1123 = vld [vmem:[%s1112 + $0x28] sm:$0xf]
    %v1124 = vld [vmem:[%s1112 + $0x2c] sm:$0xf]
    %v1125 = vld [vmem:[%s1112 + $0x30] sm:$0xf]
    %v1126 = vld [vmem:[%s1112 + $0x34] sm:$0xf]
    %v1127 = vld [vmem:[%s1112 + $0x38] sm:$0xf]
    %v1128 = vld [vmem:[%s1112 + $0x3c] sm:$0xf]
    %v1129 = vpack.c.bf16 %v1109, %v1109
    %v1146 = vunpack.c.l.b16 %v1113
    %v1147 = vunpack.c.l.b16 %v1114
    %v1148 = vunpack.c.l.b16 %v1115
    %v1149 = vunpack.c.l.b16 %v1116
    %v1150 = vunpack.c.l.b16 %v1117
    %v1151 = vunpack.c.l.b16 %v1118
    %v1152 = vunpack.c.l.b16 %v1119
    %v1153 = vunpack.c.l.b16 %v1120
    %v1154 = vunpack.c.l.b16 %v1121
    %v1155 = vunpack.c.l.b16 %v1122
    %v1156 = vunpack.c.l.b16 %v1123
    %v1157 = vunpack.c.l.b16 %v1124
    %v1158 = vunpack.c.l.b16 %v1125
    %v1159 = vunpack.c.l.b16 %v1126
    %v1160 = vunpack.c.l.b16 %v1127
    %v1161 = vunpack.c.l.b16 %v1128
    %v1162 = vpack.c.b16 %v1147, %v1146
    %v1163 = vpack.c.b16 %v1149, %v1148
    %v1164 = vpack.c.b16 %v1151, %v1150
    %v1165 = vpack.c.b16 %v1153, %v1152
    %v1166 = vpack.c.b16 %v1155, %v1154
    %v1167 = vpack.c.b16 %v1157, %v1156
    %v1168 = vpack.c.b16 %v1159, %v1158
    %v1169 = vpack.c.b16 %v1161, %v1160
    %1178 = vmatpush.bf16.msra.mxu0 %v1169
    %1179 = vmatpush.bf16.msra.mxu0 %v1168
    %1180 = vmatpush.bf16.msra.mxu0 %v1167
    %1181 = vmatpush.bf16.msra.mxu0 %v1166
    %1182 = vmatpush.bf16.msra.mxu0 %v1165
    %1183 = vmatpush.bf16.msra.mxu0 %v1164
    %1184 = vmatpush.bf16.msra.mxu0 %v1163
    %1185 = vmatpush.bf16.msra.mxu0 %v1162
    %1186 = vmatmul.bf16.gmra.mxu0 %v1129
    %v1187 = vpop.f32.mrf.mxu0
    %v1188 = vadd.f32 0.0, %v1187
    %v1189 = vpop.f32.mrf.mxu0
    %1190 = vdwg.mxu0
    %v1207 = vunpack.c.l.b16 %v1077
    %v1208 = vunpack.c.l.b16 %v1078
    %v1209 = vunpack.c.l.b16 %v1079
    %v1210 = vunpack.c.l.b16 %v1080
    %v1211 = vunpack.c.l.b16 %v1081
    %v1212 = vunpack.c.l.b16 %v1082
    %v1213 = vunpack.c.l.b16 %v1083
    %v1214 = vunpack.c.l.b16 %v1084
    %v1215 = vunpack.c.l.b16 %v1085
    %v1216 = vunpack.c.l.b16 %v1086
    %v1217 = vunpack.c.l.b16 %v1087
    %v1218 = vunpack.c.l.b16 %v1088
    %v1219 = vunpack.c.l.b16 %v1089
    %v1220 = vunpack.c.l.b16 %v1090
    %v1221 = vunpack.c.l.b16 %v1091
    %v1222 = vunpack.c.l.b16 %v1092
    %v1223 = vpack.c.b16 %v1208, %v1207
    %v1224 = vpack.c.b16 %v1210, %v1209
    %v1225 = vpack.c.b16 %v1212, %v1211
    %v1226 = vpack.c.b16 %v1214, %v1213
    %v1227 = vpack.c.b16 %v1216, %v1215
    %v1228 = vpack.c.b16 %v1218, %v1217
    %v1229 = vpack.c.b16 %v1220, %v1219
    %v1230 = vpack.c.b16 %v1222, %v1221
    %1239 = vmatpush.bf16.msra.mxu0 %v1230
    %1240 = vmatpush.bf16.msra.mxu0 %v1229
    %1241 = vmatpush.bf16.msra.mxu0 %v1228
    %1242 = vmatpush.bf16.msra.mxu0 %v1227
    %1243 = vmatpush.bf16.msra.mxu0 %v1226
    %1244 = vmatpush.bf16.msra.mxu0 %v1225
    %1245 = vmatpush.bf16.msra.mxu0 %v1224
    %1246 = vmatpush.bf16.msra.mxu0 %v1223
    %1247 = vmatmul.bf16.gmra.mxu0 %v1093
    %v1248 = vpop.f32.mrf.mxu0
    %v1249 = vadd.f32 %v1188, %v1248
    %v1250 = vpop.f32.mrf.mxu0
    %1251 = vdwg.mxu0
    %s1252 = scalar_lea.vmem %s10, 8
    %v1253 = vld [vmem:[%s1252] sm:$0xf]
    %v1255 = vsel %vm928, %v1253, 0
    %1257 = vmatpush.bf16.msra.mxu0 0
    %1258 = vmatpush.bf16.msra.mxu0 0
    %1259 = vmatpush.bf16.msra.mxu0 0
    %1260 = vmatpush.bf16.msra.mxu0 0
    %1261 = vmatpush.bf16.msra.mxu0 0
    %1262 = vmatpush.bf16.msra.mxu0 0
    %1263 = vmatpush.bf16.msra.mxu0 0
    %1264 = vmatpush.bf16.msra.mxu0 %v1060
    %1265 = vmatmul.bf16.gmra.mxu0 %v1255
    %v1266 = vpop.f32.mrf.mxu0
    %v1267 = vadd.f32 0.0, %v1266
    %v1268 = vpop.f32.mrf.mxu0
    %1269 = vdwg.mxu0
    %s1270 = scalar_lea.vmem %s11, 128
    %v1271 = vld [vmem:[%s1270] sm:$0xf]
    %v1272 = vld [vmem:[%s1270 + $0x4] sm:$0xf]
    %v1273 = vld [vmem:[%s1270 + $0x8] sm:$0xf]
    %v1274 = vld [vmem:[%s1270 + $0xc] sm:$0xf]
    %v1275 = vld [vmem:[%s1270 + $0x10] sm:$0xf]
    %v1276 = vld [vmem:[%s1270 + $0x14] sm:$0xf]
    %v1277 = vld [vmem:[%s1270 + $0x18] sm:$0xf]
    %v1278 = vld [vmem:[%s1270 + $0x1c] sm:$0xf]
    %v1279 = vld [vmem:[%s1270 + $0x20] sm:$0xf]
    %v1280 = vld [vmem:[%s1270 + $0x24] sm:$0xf]
    %v1281 = vld [vmem:[%s1270 + $0x28] sm:$0xf]
    %v1282 = vld [vmem:[%s1270 + $0x2c] sm:$0xf]
    %v1283 = vld [vmem:[%s1270 + $0x30] sm:$0xf]
    %v1284 = vld [vmem:[%s1270 + $0x34] sm:$0xf]
    %v1285 = vld [vmem:[%s1270 + $0x38] sm:$0xf]
    %v1286 = vld [vmem:[%s1270 + $0x3c] sm:$0xf]
    %v1287 = vpack.c.bf16 %v1267, %v1267
    %v1304 = vunpack.c.l.b16 %v1271
    %v1305 = vunpack.c.l.b16 %v1272
    %v1306 = vunpack.c.l.b16 %v1273
    %v1307 = vunpack.c.l.b16 %v1274
    %v1308 = vunpack.c.l.b16 %v1275
    %v1309 = vunpack.c.l.b16 %v1276
    %v1310 = vunpack.c.l.b16 %v1277
    %v1311 = vunpack.c.l.b16 %v1278
    %v1312 = vunpack.c.l.b16 %v1279
    %v1313 = vunpack.c.l.b16 %v1280
    %v1314 = vunpack.c.l.b16 %v1281
    %v1315 = vunpack.c.l.b16 %v1282
    %v1316 = vunpack.c.l.b16 %v1283
    %v1317 = vunpack.c.l.b16 %v1284
    %v1318 = vunpack.c.l.b16 %v1285
    %v1319 = vunpack.c.l.b16 %v1286
    %v1320 = vpack.c.b16 %v1305, %v1304
    %v1321 = vpack.c.b16 %v1307, %v1306
    %v1322 = vpack.c.b16 %v1309, %v1308
    %v1323 = vpack.c.b16 %v1311, %v1310
    %v1324 = vpack.c.b16 %v1313, %v1312
    %v1325 = vpack.c.b16 %v1315, %v1314
    %v1326 = vpack.c.b16 %v1317, %v1316
    %v1327 = vpack.c.b16 %v1319, %v1318
    %1336 = vmatpush.bf16.msra.mxu0 %v1327
    %1337 = vmatpush.bf16.msra.mxu0 %v1326
    %1338 = vmatpush.bf16.msra.mxu0 %v1325
    %1339 = vmatpush.bf16.msra.mxu0 %v1324
    %1340 = vmatpush.bf16.msra.mxu0 %v1323
    %1341 = vmatpush.bf16.msra.mxu0 %v1322
    %1342 = vmatpush.bf16.msra.mxu0 %v1321
    %1343 = vmatpush.bf16.msra.mxu0 %v1320
    %1344 = vmatmul.bf16.gmra.mxu0 %v1287
    %v1345 = vpop.f32.mrf.mxu0
    %v1346 = vadd.f32 0.0, %v1345
    %v1347 = vpop.f32.mrf.mxu0
    %1348 = vdwg.mxu0
    %v1349 = vadd.f32 %v1249, %v1346
    %s1350 = scalar_lea.vmem %s10, 12
    %v1351 = vld [vmem:[%s1350] sm:$0xf]
    %v1353 = vsel %vm928, %v1351, 0
    %1355 = vmatpush.bf16.msra.mxu0 0
    %1356 = vmatpush.bf16.msra.mxu0 0
    %1357 = vmatpush.bf16.msra.mxu0 0
    %1358 = vmatpush.bf16.msra.mxu0 0
    %1359 = vmatpush.bf16.msra.mxu0 0
    %1360 = vmatpush.bf16.msra.mxu0 0
    %1361 = vmatpush.bf16.msra.mxu0 0
    %1362 = vmatpush.bf16.msra.mxu0 %v1060
    %1363 = vmatmul.bf16.gmra.mxu0 %v1353
    %v1364 = vpop.f32.mrf.mxu0
    %v1365 = vadd.f32 0.0, %v1364
    %v1366 = vpop.f32.mrf.mxu0
    %1367 = vdwg.mxu0
    %s1368 = scalar_lea.vmem %s11, 192
    %v1369 = vld [vmem:[%s1368] sm:$0xf]
    %v1370 = vld [vmem:[%s1368 + $0x4] sm:$0xf]
    %v1371 = vld [vmem:[%s1368 + $0x8] sm:$0xf]
    %v1372 = vld [vmem:[%s1368 + $0xc] sm:$0xf]
    %v1373 = vld [vmem:[%s1368 + $0x10] sm:$0xf]
    %v1374 = vld [vmem:[%s1368 + $0x14] sm:$0xf]
    %v1375 = vld [vmem:[%s1368 + $0x18] sm:$0xf]
    %v1376 = vld [vmem:[%s1368 + $0x1c] sm:$0xf]
    %v1377 = vld [vmem:[%s1368 + $0x20] sm:$0xf]
    %v1378 = vld [vmem:[%s1368 + $0x24] sm:$0xf]
    %v1379 = vld [vmem:[%s1368 + $0x28] sm:$0xf]
    %v1380 = vld [vmem:[%s1368 + $0x2c] sm:$0xf]
    %v1381 = vld [vmem:[%s1368 + $0x30] sm:$0xf]
    %v1382 = vld [vmem:[%s1368 + $0x34] sm:$0xf]
    %v1383 = vld [vmem:[%s1368 + $0x38] sm:$0xf]
    %v1384 = vld [vmem:[%s1368 + $0x3c] sm:$0xf]
    %v1385 = vpack.c.bf16 %v1365, %v1365
    %v1402 = vunpack.c.l.b16 %v1369
    %v1403 = vunpack.c.l.b16 %v1370
    %v1404 = vunpack.c.l.b16 %v1371
    %v1405 = vunpack.c.l.b16 %v1372
    %v1406 = vunpack.c.l.b16 %v1373
    %v1407 = vunpack.c.l.b16 %v1374
    %v1408 = vunpack.c.l.b16 %v1375
    %v1409 = vunpack.c.l.b16 %v1376
    %v1410 = vunpack.c.l.b16 %v1377
    %v1411 = vunpack.c.l.b16 %v1378
    %v1412 = vunpack.c.l.b16 %v1379
    %v1413 = vunpack.c.l.b16 %v1380
    %v1414 = vunpack.c.l.b16 %v1381
    %v1415 = vunpack.c.l.b16 %v1382
    %v1416 = vunpack.c.l.b16 %v1383
    %v1417 = vunpack.c.l.b16 %v1384
    %v1418 = vpack.c.b16 %v1403, %v1402
    %v1419 = vpack.c.b16 %v1405, %v1404
    %v1420 = vpack.c.b16 %v1407, %v1406
    %v1421 = vpack.c.b16 %v1409, %v1408
    %v1422 = vpack.c.b16 %v1411, %v1410
    %v1423 = vpack.c.b16 %v1413, %v1412
    %v1424 = vpack.c.b16 %v1415, %v1414
    %v1425 = vpack.c.b16 %v1417, %v1416
    %1434 = vmatpush.bf16.msra.mxu0 %v1425
    %1435 = vmatpush.bf16.msra.mxu0 %v1424
    %1436 = vmatpush.bf16.msra.mxu0 %v1423
    %1437 = vmatpush.bf16.msra.mxu0 %v1422
    %1438 = vmatpush.bf16.msra.mxu0 %v1421
    %1439 = vmatpush.bf16.msra.mxu0 %v1420
    %1440 = vmatpush.bf16.msra.mxu0 %v1419
    %1441 = vmatpush.bf16.msra.mxu0 %v1418
    %1442 = vmatmul.bf16.gmra.mxu0 %v1385
    %v1443 = vpop.f32.mrf.mxu0
    %v1444 = vadd.f32 0.0, %v1443
    %v1445 = vpop.f32.mrf.mxu0
    %1446 = vdwg.mxu0
    %v1447 = vadd.f32 %v1349, %v1444
    %v1448 = vrot.slane %v1447, 4
    %v1449 = vadd.f32 %v1447, %v1448
    %v1450 = vrot.slane %v1449, 2
    %v1451 = vadd.f32 %v1449, %v1450
    %v1452 = vrot.slane %v1451, 1
    %v1453 = vadd.f32 %v1451, %v1452
    %v1454 = vld [vmem:[%s12] sm:$0xff]
    %v1455 = vld [vmem:[%s12 + $0x8] sm:$0xff]
    %v1456 = vld [vmem:[%s12 + $0x10] sm:$0xff]
    %v1457 = vld [vmem:[%s12 + $0x18] sm:$0xff]
    %v1458 = vld [vmem:[%s12 + $0x20] sm:$0xff]
    %v1459 = vld [vmem:[%s12 + $0x28] sm:$0xff]
    %v1460 = vld [vmem:[%s12 + $0x30] sm:$0xff]
    %v1461 = vld [vmem:[%s12 + $0x38] sm:$0xff]
    %v1462 = vld [vmem:[%s12 + $0x40] sm:$0xff]
    %v1463 = vld [vmem:[%s12 + $0x48] sm:$0xff]
    %v1464 = vld [vmem:[%s12 + $0x50] sm:$0xff]
    %v1465 = vld [vmem:[%s12 + $0x58] sm:$0xff]
    %v1466 = vld [vmem:[%s12 + $0x60] sm:$0xff]
    %v1467 = vld [vmem:[%s12 + $0x68] sm:$0xff]
    %v1468 = vld [vmem:[%s12 + $0x70] sm:$0xff]
    %v1469 = vld [vmem:[%s12 + $0x78] sm:$0xff]
    %1470 = vmatpush.msra.mxu0 %v1469
    %1471 = vmatpush.msra.mxu0 %v1468
    %1472 = vmatpush.msra.mxu0 %v1467
    %1473 = vmatpush.msra.mxu0 %v1466
    %1474 = vmatpush.msra.mxu0 %v1465
    %1475 = vmatpush.msra.mxu0 %v1464
    %1476 = vmatpush.msra.mxu0 %v1463
    %1477 = vmatpush.msra.mxu0 %v1462
    %1478 = vmatpush.msra.mxu0 %v1461
    %1479 = vmatpush.msra.mxu0 %v1460
    %1480 = vmatpush.msra.mxu0 %v1459
    %1481 = vmatpush.msra.mxu0 %v1458
    %1482 = vmatpush.msra.mxu0 %v1457
    %1483 = vmatpush.msra.mxu0 %v1456
    %1484 = vmatpush.msra.mxu0 %v1455
    %1485 = vmatpush.msra.mxu0 %v1454
    %1486 = vmatmul.f32.gmra.mxu0 %v1453
    %v1487 = vpop.f32.mrf.mxu0
    %v1488 = vadd.f32 0.0, %v1487
    %1489 = vdwg.mxu0
    %v1490 = vmul.f32 %v1488, 0.03125
    %v1491 = vld [vmem:[%s13] sm:$0xff]
    %v1492 = vld [vmem:[%s13 + $0x8] sm:$0xff]
    %v1493 = vld [vmem:[%s13 + $0x10] sm:$0xff]
    %v1494 = vld [vmem:[%s13 + $0x18] sm:$0xff]
    %v1496 = vsel %vm199, %v1490, 0
    %1498 = vmatpush.msra.mxu0 0.0
    %1499 = vmatpush.msra.mxu0 0.0
    %1500 = vmatpush.msra.mxu0 0.0
    %1501 = vmatpush.msra.mxu0 0.0
    %1502 = vmatpush.msra.mxu0 0.0
    %1503 = vmatpush.msra.mxu0 0.0
    %1504 = vmatpush.msra.mxu0 0.0
    %1505 = vmatpush.msra.mxu0 0.0
    %1506 = vmatpush.msra.mxu0 0.0
    %1507 = vmatpush.msra.mxu0 0.0
    %1508 = vmatpush.msra.mxu0 0.0
    %1509 = vmatpush.msra.mxu0 0.0
    %1510 = vmatpush.msra.mxu0 %v1494
    %1511 = vmatpush.msra.mxu0 %v1493
    %1512 = vmatpush.msra.mxu0 %v1492
    %1513 = vmatpush.msra.mxu0 %v1491
    %1514 = vmatmul.f32.gmra.mxu0 %v1496
    %v1515 = vpop.f32.mrf.mxu0
    %v1516 = vadd.f32 0.0, %v1515
    %1517 = vdwg.mxu0
    %v1518 = vperm.slane %v1516, 0
    %v1519 = vsub.f32 %v1447, %v1518
    %v1520 = vmul.f32 %v1519, %v1519
    %v1521 = vrot.slane %v1520, 4
    %v1522 = vadd.f32 %v1520, %v1521
    %v1523 = vrot.slane %v1522, 2
    %v1524 = vadd.f32 %v1522, %v1523
    %v1525 = vrot.slane %v1524, 1
    %v1526 = vadd.f32 %v1524, %v1525
    %1527 = vmatpush.msra.mxu0 %v1469
    %1528 = vmatpush.msra.mxu0 %v1468
    %1529 = vmatpush.msra.mxu0 %v1467
    %1530 = vmatpush.msra.mxu0 %v1466
    %1531 = vmatpush.msra.mxu0 %v1465
    %1532 = vmatpush.msra.mxu0 %v1464
    %1533 = vmatpush.msra.mxu0 %v1463
    %1534 = vmatpush.msra.mxu0 %v1462
    %1535 = vmatpush.msra.mxu0 %v1461
    %1536 = vmatpush.msra.mxu0 %v1460
    %1537 = vmatpush.msra.mxu0 %v1459
    %1538 = vmatpush.msra.mxu0 %v1458
    %1539 = vmatpush.msra.mxu0 %v1457
    %1540 = vmatpush.msra.mxu0 %v1456
    %1541 = vmatpush.msra.mxu0 %v1455
    %1542 = vmatpush.msra.mxu0 %v1454
    %1543 = vmatmul.f32.gmra.mxu0 %v1526
    %v1544 = vpop.f32.mrf.mxu0
    %v1545 = vadd.f32 0.0, %v1544
    %1546 = vdwg.mxu0
    %v1547 = vmul.f32 %v1545, 0.03125
    %v1548 = vld [vmem:[%s14] sm:$0x1]
    %v1549 = vadd.f32 %v1547, 1e-05
    %v1550 = vrsqrt.pop %v1549
    %v1551 = vmul.f32 %v1550, %v1549
    %v1552 = vmul.f32 %v1551, %v1550
    %v1553 = vmul.f32 0.5, %v1552
    %v1554 = vsub.f32 1.5, %v1553
    %v1555 = vmul.f32 %v1550, %v1554
    %vm1556 = vweird.f32 %v1549
    %vm1557 = vweird.f32 %v1550
    %vm1558 = vmor %vm1556, %vm1557
    %v1559 = vsel %vm1558, %v1550, %v1555
    %v1560 = vmul.f32 %v1548, %v1559
    %v1561 = vld [vmem:[%s15] sm:$0x1]
    %v1562 = vmul.f32 %v1490, %v1560
    %v1563 = vsub.f32 %v1561, %v1562
    %v1565 = vsel %vm199, %v1560, 0
    %1567 = vmatpush.msra.mxu0 0.0
    %1568 = vmatpush.msra.mxu0 0.0
    %1569 = vmatpush.msra.mxu0 0.0
    %1570 = vmatpush.msra.mxu0 0.0
    %1571 = vmatpush.msra.mxu0 0.0
    %1572 = vmatpush.msra.mxu0 0.0
    %1573 = vmatpush.msra.mxu0 0.0
    %1574 = vmatpush.msra.mxu0 0.0
    %1575 = vmatpush.msra.mxu0 0.0
    %1576 = vmatpush.msra.mxu0 0.0
    %1577 = vmatpush.msra.mxu0 0.0
    %1578 = vmatpush.msra.mxu0 0.0
    %1579 = vmatpush.msra.mxu0 %v1494
    %1580 = vmatpush.msra.mxu0 %v1493
    %1581 = vmatpush.msra.mxu0 %v1492
    %1582 = vmatpush.msra.mxu0 %v1491
    %1583 = vmatmul.f32.gmra.mxu0 %v1565
    %v1584 = vpop.f32.mrf.mxu0
    %v1585 = vadd.f32 0.0, %v1584
    %1586 = vdwg.mxu0
    %v1587 = vperm.slane %v1585, 0
    %v1588 = vmul.f32 %v1447, %v1587
    %v1590 = vsel %vm199, %v1563, 0
    %1592 = vmatpush.msra.mxu0 0.0
    %1593 = vmatpush.msra.mxu0 0.0
    %1594 = vmatpush.msra.mxu0 0.0
    %1595 = vmatpush.msra.mxu0 0.0
    %1596 = vmatpush.msra.mxu0 0.0
    %1597 = vmatpush.msra.mxu0 0.0
    %1598 = vmatpush.msra.mxu0 0.0
    %1599 = vmatpush.msra.mxu0 0.0
    %1600 = vmatpush.msra.mxu0 0.0
    %1601 = vmatpush.msra.mxu0 0.0
    %1602 = vmatpush.msra.mxu0 0.0
    %1603 = vmatpush.msra.mxu0 0.0
    %1604 = vmatpush.msra.mxu0 %v1494
    %1605 = vmatpush.msra.mxu0 %v1493
    %1606 = vmatpush.msra.mxu0 %v1492
    %1607 = vmatpush.msra.mxu0 %v1491
    %1608 = vmatmul.f32.gmra.mxu0 %v1590
    %v1609 = vpop.f32.mrf.mxu0
    %v1610 = vadd.f32 0.0, %v1609
    %1611 = vdwg.mxu0
    %v1612 = vperm.slane %v1610, 0
    %v1613 = vadd.f32 %v1588, %v1612
    %vm1614 = vcmp.ge.f32.partialorder %v1613, 0.0
    %v1615 = vmul.f32 %v1613, 0.2
    %v1616 = vsel %vm1614, %v1613, %v1615
    %v1617 = vld [vmem:[%s16] sm:$0x7]
    %v1618 = vpack.c.bf16 %v1616, %v1616
    %vm1619 = vcmask 64512
    %v1621 = vsel %vm1619, %v1617, 0
    %vm1623 = vcmask 1043456
    %v1625 = vsel %vm1623, %v1618, 0
    %1627 = vmatpush.bf16.msra.mxu0 0
    %1628 = vmatpush.bf16.msra.mxu0 0
    %1629 = vmatpush.bf16.msra.mxu0 0
    %1630 = vmatpush.bf16.msra.mxu0 0
    %1631 = vmatpush.bf16.msra.mxu0 0
    %1632 = vmatpush.bf16.msra.mxu0 0
    %1633 = vmatpush.bf16.msra.mxu0 0
    %1634 = vmatpush.bf16.msra.mxu0 %v1625
    %1635 = vmatmul.bf16.gmra.mxu0 %v1621
    %v1636 = vpop.f32.mrf.mxu0
    %v1637 = vadd.f32 0.0, %v1636
    %v1638 = vpop.f32.mrf.mxu0
    %1639 = vdwg.mxu0
    %v1640 = vld [vmem:[%s17] sm:$0xff]
    %v1641 = vld [vmem:[%s17 + $0x8] sm:$0xff]
    %v1642 = vld [vmem:[%s17 + $0x10] sm:$0xff]
    %v1643 = vld [vmem:[%s17 + $0x18] sm:$0xff]
    %v1644 = vld [vmem:[%s17 + $0x20] sm:$0xff]
    %v1645 = vld [vmem:[%s17 + $0x28] sm:$0xff]
    %v1646 = vld [vmem:[%s17 + $0x30] sm:$0xff]
    %v1647 = vld [vmem:[%s17 + $0x38] sm:$0xff]
    %v1648 = vld [vmem:[%s17 + $0x40] sm:$0xff]
    %v1649 = vld [vmem:[%s17 + $0x48] sm:$0xff]
    %v1650 = vld [vmem:[%s17 + $0x50] sm:$0xff]
    %v1651 = vld [vmem:[%s17 + $0x58] sm:$0xff]
    %v1652 = vld [vmem:[%s17 + $0x60] sm:$0xff]
    %v1653 = vld [vmem:[%s17 + $0x68] sm:$0xff]
    %v1654 = vld [vmem:[%s17 + $0x70] sm:$0xff]
    %v1655 = vld [vmem:[%s17 + $0x78] sm:$0xff]
    %v1656 = vpack.c.bf16 %v1637, %v1637
    %s1657 = scalar_lea.vmem %s16, 4
    %v1658 = vld [vmem:[%s1657] sm:$0x7]
    %v1660 = vsel %vm1619, %v1658, 0
    %1662 = vmatpush.bf16.msra.mxu0 0
    %1663 = vmatpush.bf16.msra.mxu0 0
    %1664 = vmatpush.bf16.msra.mxu0 0
    %1665 = vmatpush.bf16.msra.mxu0 0
    %1666 = vmatpush.bf16.msra.mxu0 0
    %1667 = vmatpush.bf16.msra.mxu0 0
    %1668 = vmatpush.bf16.msra.mxu0 0
    %1669 = vmatpush.bf16.msra.mxu0 %v1625
    %1670 = vmatmul.bf16.gmra.mxu0 %v1660
    %v1671 = vpop.f32.mrf.mxu0
    %v1672 = vadd.f32 0.0, %v1671
    %v1673 = vpop.f32.mrf.mxu0
    %1674 = vdwg.mxu0
    %s1675 = scalar_lea.vmem %s17, 128
    %v1676 = vld [vmem:[%s1675] sm:$0xff]
    %v1677 = vld [vmem:[%s1675 + $0x8] sm:$0xff]
    %v1678 = vld [vmem:[%s1675 + $0x10] sm:$0xff]
    %v1679 = vld [vmem:[%s1675 + $0x18] sm:$0xff]
    %v1680 = vld [vmem:[%s1675 + $0x20] sm:$0xff]
    %v1681 = vld [vmem:[%s1675 + $0x28] sm:$0xff]
    %v1682 = vld [vmem:[%s1675 + $0x30] sm:$0xff]
    %v1683 = vld [vmem:[%s1675 + $0x38] sm:$0xff]
    %v1684 = vld [vmem:[%s1675 + $0x40] sm:$0xff]
    %v1685 = vld [vmem:[%s1675 + $0x48] sm:$0xff]
    %v1686 = vld [vmem:[%s1675 + $0x50] sm:$0xff]
    %v1687 = vld [vmem:[%s1675 + $0x58] sm:$0xff]
    %v1688 = vld [vmem:[%s1675 + $0x60] sm:$0xff]
    %v1689 = vld [vmem:[%s1675 + $0x68] sm:$0xff]
    %v1690 = vld [vmem:[%s1675 + $0x70] sm:$0xff]
    %v1691 = vld [vmem:[%s1675 + $0x78] sm:$0xff]
    %v1692 = vpack.c.bf16 %v1672, %v1672
    %v1709 = vunpack.c.l.b16 %v1676
    %v1710 = vunpack.c.h.b16 %v1676
    %v1711 = vunpack.c.l.b16 %v1677
    %v1712 = vunpack.c.h.b16 %v1677
    %v1713 = vunpack.c.l.b16 %v1678
    %v1714 = vunpack.c.h.b16 %v1678
    %v1715 = vunpack.c.l.b16 %v1679
    %v1716 = vunpack.c.h.b16 %v1679
    %v1717 = vunpack.c.l.b16 %v1680
    %v1718 = vunpack.c.h.b16 %v1680
    %v1719 = vunpack.c.l.b16 %v1681
    %v1720 = vunpack.c.h.b16 %v1681
    %v1721 = vunpack.c.l.b16 %v1682
    %v1722 = vunpack.c.h.b16 %v1682
    %v1723 = vunpack.c.l.b16 %v1683
    %v1724 = vunpack.c.h.b16 %v1683
    %v1725 = vunpack.c.l.b16 %v1684
    %v1726 = vunpack.c.h.b16 %v1684
    %v1727 = vunpack.c.l.b16 %v1685
    %v1728 = vunpack.c.h.b16 %v1685
    %v1729 = vunpack.c.l.b16 %v1686
    %v1730 = vunpack.c.h.b16 %v1686
    %v1731 = vunpack.c.l.b16 %v1687
    %v1732 = vunpack.c.h.b16 %v1687
    %v1733 = vunpack.c.l.b16 %v1688
    %v1734 = vunpack.c.h.b16 %v1688
    %v1735 = vunpack.c.l.b16 %v1689
    %v1736 = vunpack.c.h.b16 %v1689
    %v1737 = vunpack.c.l.b16 %v1690
    %v1738 = vunpack.c.h.b16 %v1690
    %v1739 = vunpack.c.l.b16 %v1691
    %v1740 = vunpack.c.h.b16 %v1691
    %v1741 = vpack.c.b16 %v1711, %v1709
    %v1742 = vpack.c.b16 %v1712, %v1710
    %v1743 = vpack.c.b16 %v1715, %v1713
    %v1744 = vpack.c.b16 %v1716, %v1714
    %v1745 = vpack.c.b16 %v1719, %v1717
    %v1746 = vpack.c.b16 %v1720, %v1718
    %v1747 = vpack.c.b16 %v1723, %v1721
    %v1748 = vpack.c.b16 %v1724, %v1722
    %v1749 = vpack.c.b16 %v1727, %v1725
    %v1750 = vpack.c.b16 %v1728, %v1726
    %v1751 = vpack.c.b16 %v1731, %v1729
    %v1752 = vpack.c.b16 %v1732, %v1730
    %v1753 = vpack.c.b16 %v1735, %v1733
    %v1754 = vpack.c.b16 %v1736, %v1734
    %v1755 = vpack.c.b16 %v1739, %v1737
    %v1756 = vpack.c.b16 %v1740, %v1738
    %1773 = vmatpush.bf16.msra.mxu0 %v1755
    %1774 = vmatpush.bf16.msra.mxu0 %v1753
    %1775 = vmatpush.bf16.msra.mxu0 %v1751
    %1776 = vmatpush.bf16.msra.mxu0 %v1749
    %1777 = vmatpush.bf16.msra.mxu0 %v1747
    %1778 = vmatpush.bf16.msra.mxu0 %v1745
    %1779 = vmatpush.bf16.msra.mxu0 %v1743
    %1780 = vmatpush.bf16.msra.mxu0 %v1741
    %1781 = vmatmul.bf16.gmra.mxu0 %v1692
    %v1782 = vpop.f32.mrf.mxu0
    %v1783 = vadd.f32 0.0, %v1782
    %v1784 = vpop.f32.mrf.mxu0
    %1785 = vdwg.mxu0
    %1786 = vmatpush.bf16.msra.mxu0 %v1756
    %1787 = vmatpush.bf16.msra.mxu0 %v1754
    %1788 = vmatpush.bf16.msra.mxu0 %v1752
    %1789 = vmatpush.bf16.msra.mxu0 %v1750
    %1790 = vmatpush.bf16.msra.mxu0 %v1748
    %1791 = vmatpush.bf16.msra.mxu0 %v1746
    %1792 = vmatpush.bf16.msra.mxu0 %v1744
    %1793 = vmatpush.bf16.msra.mxu0 %v1742
    %1794 = vmatmul.bf16.gmra.mxu0 %v1692
    %v1795 = vpop.f32.mrf.mxu0
    %v1796 = vadd.f32 0.0, %v1795
    %v1797 = vpop.f32.mrf.mxu0
    %1798 = vdwg.mxu0
    %v1815 = vunpack.c.l.b16 %v1640
    %v1816 = vunpack.c.h.b16 %v1640
    %v1817 = vunpack.c.l.b16 %v1641
    %v1818 = vunpack.c.h.b16 %v1641
    %v1819 = vunpack.c.l.b16 %v1642
    %v1820 = vunpack.c.h.b16 %v1642
    %v1821 = vunpack.c.l.b16 %v1643
    %v1822 = vunpack.c.h.b16 %v1643
    %v1823 = vunpack.c.l.b16 %v1644
    %v1824 = vunpack.c.h.b16 %v1644
    %v1825 = vunpack.c.l.b16 %v1645
    %v1826 = vunpack.c.h.b16 %v1645
    %v1827 = vunpack.c.l.b16 %v1646
    %v1828 = vunpack.c.h.b16 %v1646
    %v1829 = vunpack.c.l.b16 %v1647
    %v1830 = vunpack.c.h.b16 %v1647
    %v1831 = vunpack.c.l.b16 %v1648
    %v1832 = vunpack.c.h.b16 %v1648
    %v1833 = vunpack.c.l.b16 %v1649
    %v1834 = vunpack.c.h.b16 %v1649
    %v1835 = vunpack.c.l.b16 %v1650
    %v1836 = vunpack.c.h.b16 %v1650
    %v1837 = vunpack.c.l.b16 %v1651
    %v1838 = vunpack.c.h.b16 %v1651
    %v1839 = vunpack.c.l.b16 %v1652
    %v1840 = vunpack.c.h.b16 %v1652
    %v1841 = vunpack.c.l.b16 %v1653
    %v1842 = vunpack.c.h.b16 %v1653
    %v1843 = vunpack.c.l.b16 %v1654
    %v1844 = vunpack.c.h.b16 %v1654
    %v1845 = vunpack.c.l.b16 %v1655
    %v1846 = vunpack.c.h.b16 %v1655
    %v1847 = vpack.c.b16 %v1817, %v1815
    %v1848 = vpack.c.b16 %v1818, %v1816
    %v1849 = vpack.c.b16 %v1821, %v1819
    %v1850 = vpack.c.b16 %v1822, %v1820
    %v1851 = vpack.c.b16 %v1825, %v1823
    %v1852 = vpack.c.b16 %v1826, %v1824
    %v1853 = vpack.c.b16 %v1829, %v1827
    %v1854 = vpack.c.b16 %v1830, %v1828
    %v1855 = vpack.c.b16 %v1833, %v1831
    %v1856 = vpack.c.b16 %v1834, %v1832
    %v1857 = vpack.c.b16 %v1837, %v1835
    %v1858 = vpack.c.b16 %v1838, %v1836
    %v1859 = vpack.c.b16 %v1841, %v1839
    %v1860 = vpack.c.b16 %v1842, %v1840
    %v1861 = vpack.c.b16 %v1845, %v1843
    %v1862 = vpack.c.b16 %v1846, %v1844
    %1879 = vmatpush.bf16.msra.mxu0 %v1861
    %1880 = vmatpush.bf16.msra.mxu0 %v1859
    %1881 = vmatpush.bf16.msra.mxu0 %v1857
    %1882 = vmatpush.bf16.msra.mxu0 %v1855
    %1883 = vmatpush.bf16.msra.mxu0 %v1853
    %1884 = vmatpush.bf16.msra.mxu0 %v1851
    %1885 = vmatpush.bf16.msra.mxu0 %v1849
    %1886 = vmatpush.bf16.msra.mxu0 %v1847
    %1887 = vmatmul.bf16.gmra.mxu0 %v1656
    %v1888 = vpop.f32.mrf.mxu0
    %v1889 = vadd.f32 %v1783, %v1888
    %v1890 = vpop.f32.mrf.mxu0
    %1891 = vdwg.mxu0
    %1892 = vmatpush.bf16.msra.mxu0 %v1862
    %1893 = vmatpush.bf16.msra.mxu0 %v1860
    %1894 = vmatpush.bf16.msra.mxu0 %v1858
    %1895 = vmatpush.bf16.msra.mxu0 %v1856
    %1896 = vmatpush.bf16.msra.mxu0 %v1854
    %1897 = vmatpush.bf16.msra.mxu0 %v1852
    %1898 = vmatpush.bf16.msra.mxu0 %v1850
    %1899 = vmatpush.bf16.msra.mxu0 %v1848
    %1900 = vmatmul.bf16.gmra.mxu0 %v1656
    %v1901 = vpop.f32.mrf.mxu0
    %v1902 = vadd.f32 %v1796, %v1901
    %v1903 = vpop.f32.mrf.mxu0
    %1904 = vdwg.mxu0
    %s1905 = scalar_lea.vmem %s16, 8
    %v1906 = vld [vmem:[%s1905] sm:$0x7]
    %v1908 = vsel %vm1619, %v1906, 0
    %1910 = vmatpush.bf16.msra.mxu0 0
    %1911 = vmatpush.bf16.msra.mxu0 0
    %1912 = vmatpush.bf16.msra.mxu0 0
    %1913 = vmatpush.bf16.msra.mxu0 0
    %1914 = vmatpush.bf16.msra.mxu0 0
    %1915 = vmatpush.bf16.msra.mxu0 0
    %1916 = vmatpush.bf16.msra.mxu0 0
    %1917 = vmatpush.bf16.msra.mxu0 %v1625
    %1918 = vmatmul.bf16.gmra.mxu0 %v1908
    %v1919 = vpop.f32.mrf.mxu0
    %v1920 = vadd.f32 0.0, %v1919
    %v1921 = vpop.f32.mrf.mxu0
    %1922 = vdwg.mxu0
    %s1923 = scalar_lea.vmem %s17, 256
    %v1924 = vld [vmem:[%s1923] sm:$0xff]
    %v1925 = vld [vmem:[%s1923 + $0x8] sm:$0xff]
    %v1926 = vld [vmem:[%s1923 + $0x10] sm:$0xff]
    %v1927 = vld [vmem:[%s1923 + $0x18] sm:$0xff]
    %v1928 = vld [vmem:[%s1923 + $0x20] sm:$0xff]
    %v1929 = vld [vmem:[%s1923 + $0x28] sm:$0xff]
    %v1930 = vld [vmem:[%s1923 + $0x30] sm:$0xff]
    %v1931 = vld [vmem:[%s1923 + $0x38] sm:$0xff]
    %v1932 = vld [vmem:[%s1923 + $0x40] sm:$0xff]
    %v1933 = vld [vmem:[%s1923 + $0x48] sm:$0xff]
    %v1934 = vld [vmem:[%s1923 + $0x50] sm:$0xff]
    %v1935 = vld [vmem:[%s1923 + $0x58] sm:$0xff]
    %v1936 = vld [vmem:[%s1923 + $0x60] sm:$0xff]
    %v1937 = vld [vmem:[%s1923 + $0x68] sm:$0xff]
    %v1938 = vld [vmem:[%s1923 + $0x70] sm:$0xff]
    %v1939 = vld [vmem:[%s1923 + $0x78] sm:$0xff]
    %v1940 = vpack.c.bf16 %v1920, %v1920
    %v1957 = vunpack.c.l.b16 %v1924
    %v1958 = vunpack.c.h.b16 %v1924
    %v1959 = vunpack.c.l.b16 %v1925
    %v1960 = vunpack.c.h.b16 %v1925
    %v1961 = vunpack.c.l.b16 %v1926
    %v1962 = vunpack.c.h.b16 %v1926
    %v1963 = vunpack.c.l.b16 %v1927
    %v1964 = vunpack.c.h.b16 %v1927
    %v1965 = vunpack.c.l.b16 %v1928
    %v1966 = vunpack.c.h.b16 %v1928
    %v1967 = vunpack.c.l.b16 %v1929
    %v1968 = vunpack.c.h.b16 %v1929
    %v1969 = vunpack.c.l.b16 %v1930
    %v1970 = vunpack.c.h.b16 %v1930
    %v1971 = vunpack.c.l.b16 %v1931
    %v1972 = vunpack.c.h.b16 %v1931
    %v1973 = vunpack.c.l.b16 %v1932
    %v1974 = vunpack.c.h.b16 %v1932
    %v1975 = vunpack.c.l.b16 %v1933
    %v1976 = vunpack.c.h.b16 %v1933
    %v1977 = vunpack.c.l.b16 %v1934
    %v1978 = vunpack.c.h.b16 %v1934
    %v1979 = vunpack.c.l.b16 %v1935
    %v1980 = vunpack.c.h.b16 %v1935
    %v1981 = vunpack.c.l.b16 %v1936
    %v1982 = vunpack.c.h.b16 %v1936
    %v1983 = vunpack.c.l.b16 %v1937
    %v1984 = vunpack.c.h.b16 %v1937
    %v1985 = vunpack.c.l.b16 %v1938
    %v1986 = vunpack.c.h.b16 %v1938
    %v1987 = vunpack.c.l.b16 %v1939
    %v1988 = vunpack.c.h.b16 %v1939
    %v1989 = vpack.c.b16 %v1959, %v1957
    %v1990 = vpack.c.b16 %v1960, %v1958
    %v1991 = vpack.c.b16 %v1963, %v1961
    %v1992 = vpack.c.b16 %v1964, %v1962
    %v1993 = vpack.c.b16 %v1967, %v1965
    %v1994 = vpack.c.b16 %v1968, %v1966
    %v1995 = vpack.c.b16 %v1971, %v1969
    %v1996 = vpack.c.b16 %v1972, %v1970
    %v1997 = vpack.c.b16 %v1975, %v1973
    %v1998 = vpack.c.b16 %v1976, %v1974
    %v1999 = vpack.c.b16 %v1979, %v1977
    %v2000 = vpack.c.b16 %v1980, %v1978
    %v2001 = vpack.c.b16 %v1983, %v1981
    %v2002 = vpack.c.b16 %v1984, %v1982
    %v2003 = vpack.c.b16 %v1987, %v1985
    %v2004 = vpack.c.b16 %v1988, %v1986
    %2021 = vmatpush.bf16.msra.mxu0 %v2003
    %2022 = vmatpush.bf16.msra.mxu0 %v2001
    %2023 = vmatpush.bf16.msra.mxu0 %v1999
    %2024 = vmatpush.bf16.msra.mxu0 %v1997
    %2025 = vmatpush.bf16.msra.mxu0 %v1995
    %2026 = vmatpush.bf16.msra.mxu0 %v1993
    %2027 = vmatpush.bf16.msra.mxu0 %v1991
    %2028 = vmatpush.bf16.msra.mxu0 %v1989
    %2029 = vmatmul.bf16.gmra.mxu0 %v1940
    %v2030 = vpop.f32.mrf.mxu0
    %v2031 = vadd.f32 0.0, %v2030
    %v2032 = vpop.f32.mrf.mxu0
    %2033 = vdwg.mxu0
    %2034 = vmatpush.bf16.msra.mxu0 %v2004
    %2035 = vmatpush.bf16.msra.mxu0 %v2002
    %2036 = vmatpush.bf16.msra.mxu0 %v2000
    %2037 = vmatpush.bf16.msra.mxu0 %v1998
    %2038 = vmatpush.bf16.msra.mxu0 %v1996
    %2039 = vmatpush.bf16.msra.mxu0 %v1994
    %2040 = vmatpush.bf16.msra.mxu0 %v1992
    %2041 = vmatpush.bf16.msra.mxu0 %v1990
    %2042 = vmatmul.bf16.gmra.mxu0 %v1940
    %v2043 = vpop.f32.mrf.mxu0
    %v2044 = vadd.f32 0.0, %v2043
    %v2045 = vpop.f32.mrf.mxu0
    %2046 = vdwg.mxu0
    %v2047 = vadd.f32 %v1889, %v2031
    %v2048 = vadd.f32 %v1902, %v2044
    %s2049 = scalar_lea.vmem %s16, 12
    %v2050 = vld [vmem:[%s2049] sm:$0x7]
    %v2052 = vsel %vm1619, %v2050, 0
    %2054 = vmatpush.bf16.msra.mxu0 0
    %2055 = vmatpush.bf16.msra.mxu0 0
    %2056 = vmatpush.bf16.msra.mxu0 0
    %2057 = vmatpush.bf16.msra.mxu0 0
    %2058 = vmatpush.bf16.msra.mxu0 0
    %2059 = vmatpush.bf16.msra.mxu0 0
    %2060 = vmatpush.bf16.msra.mxu0 0
    %2061 = vmatpush.bf16.msra.mxu0 %v1625
    %2062 = vmatmul.bf16.gmra.mxu0 %v2052
    %v2063 = vpop.f32.mrf.mxu0
    %v2064 = vadd.f32 0.0, %v2063
    %v2065 = vpop.f32.mrf.mxu0
    %2066 = vdwg.mxu0
    %s2067 = scalar_lea.vmem %s17, 384
    %v2068 = vld [vmem:[%s2067] sm:$0xff]
    %v2069 = vld [vmem:[%s2067 + $0x8] sm:$0xff]
    %v2070 = vld [vmem:[%s2067 + $0x10] sm:$0xff]
    %v2071 = vld [vmem:[%s2067 + $0x18] sm:$0xff]
    %v2072 = vld [vmem:[%s2067 + $0x20] sm:$0xff]
    %v2073 = vld [vmem:[%s2067 + $0x28] sm:$0xff]
    %v2074 = vld [vmem:[%s2067 + $0x30] sm:$0xff]
    %v2075 = vld [vmem:[%s2067 + $0x38] sm:$0xff]
    %v2076 = vld [vmem:[%s2067 + $0x40] sm:$0xff]
    %v2077 = vld [vmem:[%s2067 + $0x48] sm:$0xff]
    %v2078 = vld [vmem:[%s2067 + $0x50] sm:$0xff]
    %v2079 = vld [vmem:[%s2067 + $0x58] sm:$0xff]
    %v2080 = vld [vmem:[%s2067 + $0x60] sm:$0xff]
    %v2081 = vld [vmem:[%s2067 + $0x68] sm:$0xff]
    %v2082 = vld [vmem:[%s2067 + $0x70] sm:$0xff]
    %v2083 = vld [vmem:[%s2067 + $0x78] sm:$0xff]
    %v2084 = vpack.c.bf16 %v2064, %v2064
    %v2101 = vunpack.c.l.b16 %v2068
    %v2102 = vunpack.c.h.b16 %v2068
    %v2103 = vunpack.c.l.b16 %v2069
    %v2104 = vunpack.c.h.b16 %v2069
    %v2105 = vunpack.c.l.b16 %v2070
    %v2106 = vunpack.c.h.b16 %v2070
    %v2107 = vunpack.c.l.b16 %v2071
    %v2108 = vunpack.c.h.b16 %v2071
    %v2109 = vunpack.c.l.b16 %v2072
    %v2110 = vunpack.c.h.b16 %v2072
    %v2111 = vunpack.c.l.b16 %v2073
    %v2112 = vunpack.c.h.b16 %v2073
    %v2113 = vunpack.c.l.b16 %v2074
    %v2114 = vunpack.c.h.b16 %v2074
    %v2115 = vunpack.c.l.b16 %v2075
    %v2116 = vunpack.c.h.b16 %v2075
    %v2117 = vunpack.c.l.b16 %v2076
    %v2118 = vunpack.c.h.b16 %v2076
    %v2119 = vunpack.c.l.b16 %v2077
    %v2120 = vunpack.c.h.b16 %v2077
    %v2121 = vunpack.c.l.b16 %v2078
    %v2122 = vunpack.c.h.b16 %v2078
    %v2123 = vunpack.c.l.b16 %v2079
    %v2124 = vunpack.c.h.b16 %v2079
    %v2125 = vunpack.c.l.b16 %v2080
    %v2126 = vunpack.c.h.b16 %v2080
    %v2127 = vunpack.c.l.b16 %v2081
    %v2128 = vunpack.c.h.b16 %v2081
    %v2129 = vunpack.c.l.b16 %v2082
    %v2130 = vunpack.c.h.b16 %v2082
    %v2131 = vunpack.c.l.b16 %v2083
    %v2132 = vunpack.c.h.b16 %v2083
    %v2133 = vpack.c.b16 %v2103, %v2101
    %v2134 = vpack.c.b16 %v2104, %v2102
    %v2135 = vpack.c.b16 %v2107, %v2105
    %v2136 = vpack.c.b16 %v2108, %v2106
    %v2137 = vpack.c.b16 %v2111, %v2109
    %v2138 = vpack.c.b16 %v2112, %v2110
    %v2139 = vpack.c.b16 %v2115, %v2113
    %v2140 = vpack.c.b16 %v2116, %v2114
    %v2141 = vpack.c.b16 %v2119, %v2117
    %v2142 = vpack.c.b16 %v2120, %v2118
    %v2143 = vpack.c.b16 %v2123, %v2121
    %v2144 = vpack.c.b16 %v2124, %v2122
    %v2145 = vpack.c.b16 %v2127, %v2125
    %v2146 = vpack.c.b16 %v2128, %v2126
    %v2147 = vpack.c.b16 %v2131, %v2129
    %v2148 = vpack.c.b16 %v2132, %v2130
    %2165 = vmatpush.bf16.msra.mxu0 %v2147
    %2166 = vmatpush.bf16.msra.mxu0 %v2145
    %2167 = vmatpush.bf16.msra.mxu0 %v2143
    %2168 = vmatpush.bf16.msra.mxu0 %v2141
    %2169 = vmatpush.bf16.msra.mxu0 %v2139
    %2170 = vmatpush.bf16.msra.mxu0 %v2137
    %2171 = vmatpush.bf16.msra.mxu0 %v2135
    %2172 = vmatpush.bf16.msra.mxu0 %v2133
    %2173 = vmatmul.bf16.gmra.mxu0 %v2084
    %v2174 = vpop.f32.mrf.mxu0
    %v2175 = vadd.f32 0.0, %v2174
    %v2176 = vpop.f32.mrf.mxu0
    %2177 = vdwg.mxu0
    %2178 = vmatpush.bf16.msra.mxu0 %v2148
    %2179 = vmatpush.bf16.msra.mxu0 %v2146
    %2180 = vmatpush.bf16.msra.mxu0 %v2144
    %2181 = vmatpush.bf16.msra.mxu0 %v2142
    %2182 = vmatpush.bf16.msra.mxu0 %v2140
    %2183 = vmatpush.bf16.msra.mxu0 %v2138
    %2184 = vmatpush.bf16.msra.mxu0 %v2136
    %2185 = vmatpush.bf16.msra.mxu0 %v2134
    %2186 = vmatmul.bf16.gmra.mxu0 %v2084
    %v2187 = vpop.f32.mrf.mxu0
    %v2188 = vadd.f32 0.0, %v2187
    %v2189 = vpop.f32.mrf.mxu0
    %2190 = vdwg.mxu0
    %v2191 = vadd.f32 %v2047, %v2175
    %v2192 = vadd.f32 %v2048, %v2188
    %vm2193 = vcmask 1045504
    %v2194 = vsel %vm2193, %v2191, 0.0
    %v2195 = vrot.slane %v2194, 4
    %v2196 = vadd.f32 %v2194, %v2195
    %v2197 = vrot.slane %v2196, 2
    %v2198 = vadd.f32 %v2196, %v2197
    %v2199 = vrot.slane %v2198, 1
    %v2200 = vadd.f32 %v2198, %v2199
    %vm2201 = vcmask 521216
    %v2202 = vsel %vm2201, %v2192, 0.0
    %v2203 = vrot.slane %v2202, 4
    %v2204 = vadd.f32 %v2202, %v2203
    %v2205 = vrot.slane %v2204, 2
    %v2206 = vadd.f32 %v2204, %v2205
    %v2207 = vrot.slane %v2206, 1
    %v2208 = vadd.f32 %v2206, %v2207
    %v2209 = vld [vmem:[%s18] sm:$0xff]
    %v2210 = vld [vmem:[%s18 + $0x8] sm:$0xff]
    %v2211 = vld [vmem:[%s18 + $0x10] sm:$0xff]
    %v2212 = vld [vmem:[%s18 + $0x18] sm:$0xff]
    %v2213 = vld [vmem:[%s18 + $0x20] sm:$0xff]
    %v2214 = vld [vmem:[%s18 + $0x28] sm:$0xff]
    %v2215 = vld [vmem:[%s18 + $0x30] sm:$0xff]
    %v2216 = vld [vmem:[%s18 + $0x38] sm:$0xff]
    %v2217 = vld [vmem:[%s18 + $0x40] sm:$0xff]
    %v2218 = vld [vmem:[%s18 + $0x48] sm:$0xff]
    %v2219 = vld [vmem:[%s18 + $0x50] sm:$0xff]
    %v2220 = vld [vmem:[%s18 + $0x58] sm:$0xff]
    %v2221 = vld [vmem:[%s18 + $0x60] sm:$0xff]
    %v2222 = vld [vmem:[%s18 + $0x68] sm:$0xff]
    %v2223 = vld [vmem:[%s18 + $0x70] sm:$0xff]
    %v2224 = vld [vmem:[%s18 + $0x78] sm:$0xff]
    %v2225 = vld [vmem:[%s18 + $0x80] sm:$0xff]
    %v2226 = vld [vmem:[%s18 + $0x88] sm:$0xff]
    %v2227 = vld [vmem:[%s18 + $0x90] sm:$0xff]
    %v2228 = vld [vmem:[%s18 + $0x98] sm:$0xff]
    %v2229 = vld [vmem:[%s18 + $0xa0] sm:$0xff]
    %v2230 = vld [vmem:[%s18 + $0xa8] sm:$0xff]
    %v2231 = vld [vmem:[%s18 + $0xb0] sm:$0xff]
    %v2232 = vld [vmem:[%s18 + $0xb8] sm:$0xff]
    %v2234 = vsel %vm108, %v2208, 0
    %2236 = vmatpush.msra.mxu0 %v2224
    %2237 = vmatpush.msra.mxu0 %v2223
    %2238 = vmatpush.msra.mxu0 %v2222
    %2239 = vmatpush.msra.mxu0 %v2221
    %2240 = vmatpush.msra.mxu0 %v2220
    %2241 = vmatpush.msra.mxu0 %v2219
    %2242 = vmatpush.msra.mxu0 %v2218
    %2243 = vmatpush.msra.mxu0 %v2217
    %2244 = vmatpush.msra.mxu0 %v2216
    %2245 = vmatpush.msra.mxu0 %v2215
    %2246 = vmatpush.msra.mxu0 %v2214
    %2247 = vmatpush.msra.mxu0 %v2213
    %2248 = vmatpush.msra.mxu0 %v2212
    %2249 = vmatpush.msra.mxu0 %v2211
    %2250 = vmatpush.msra.mxu0 %v2210
    %2251 = vmatpush.msra.mxu0 %v2209
    %2252 = vmatmul.f32.gmra.mxu0 %v2200
    %v2253 = vpop.f32.mrf.mxu0
    %v2254 = vadd.f32 0.0, %v2253
    %2255 = vdwg.mxu0
    %2256 = vmatpush.msra.mxu0 0.0
    %2257 = vmatpush.msra.mxu0 0.0
    %2258 = vmatpush.msra.mxu0 0.0
    %2259 = vmatpush.msra.mxu0 0.0
    %2260 = vmatpush.msra.mxu0 0.0
    %2261 = vmatpush.msra.mxu0 0.0
    %2262 = vmatpush.msra.mxu0 0.0
    %2263 = vmatpush.msra.mxu0 0.0
    %2264 = vmatpush.msra.mxu0 %v2232
    %2265 = vmatpush.msra.mxu0 %v2231
    %2266 = vmatpush.msra.mxu0 %v2230
    %2267 = vmatpush.msra.mxu0 %v2229
    %2268 = vmatpush.msra.mxu0 %v2228
    %2269 = vmatpush.msra.mxu0 %v2227
    %2270 = vmatpush.msra.mxu0 %v2226
    %2271 = vmatpush.msra.mxu0 %v2225
    %2272 = vmatmul.f32.gmra.mxu0 %v2234
    %v2273 = vpop.f32.mrf.mxu0
    %v2274 = vadd.f32 %v2254, %v2273
    %2275 = vdwg.mxu0
    %v2276 = vmul.f32 %v2274, 0.055555556
    %v2277 = vld [vmem:[%s19] sm:$0xff]
    %v2278 = vld [vmem:[%s19 + $0x8] sm:$0xff]
    %v2279 = vld [vmem:[%s19 + $0x10] sm:$0xff]
    %v2280 = vld [vmem:[%s19 + $0x18] sm:$0xff]
    %v2281 = vld [vmem:[%s19 + $0x20] sm:$0xff]
    %v2282 = vld [vmem:[%s19 + $0x28] sm:$0xff]
    %v2283 = vld [vmem:[%s19 + $0x30] sm:$0xff]
    %v2284 = vld [vmem:[%s19 + $0x38] sm:$0xff]
    %v2285 = vld [vmem:[%s19 + $0x40] sm:$0xff]
    %v2286 = vld [vmem:[%s19 + $0x48] sm:$0xff]
    %v2287 = vld [vmem:[%s19 + $0x50] sm:$0xff]
    %v2288 = vld [vmem:[%s19 + $0x58] sm:$0xff]
    %v2289 = vld [vmem:[%s19 + $0x60] sm:$0xff]
    %v2290 = vld [vmem:[%s19 + $0x68] sm:$0xff]
    %v2291 = vld [vmem:[%s19 + $0x70] sm:$0xff]
    %v2292 = vld [vmem:[%s19 + $0x78] sm:$0xff]
    %v2294 = vsel %vm108, %v2276, 0
    %2296 = vmatpush.msra.mxu0 0.0
    %2297 = vmatpush.msra.mxu0 0.0
    %2298 = vmatpush.msra.mxu0 0.0
    %2299 = vmatpush.msra.mxu0 0.0
    %2300 = vmatpush.msra.mxu0 0.0
    %2301 = vmatpush.msra.mxu0 0.0
    %2302 = vmatpush.msra.mxu0 0.0
    %2303 = vmatpush.msra.mxu0 0.0
    %2304 = vmatpush.msra.mxu0 %v2291
    %2305 = vmatpush.msra.mxu0 %v2289
    %2306 = vmatpush.msra.mxu0 %v2287
    %2307 = vmatpush.msra.mxu0 %v2285
    %2308 = vmatpush.msra.mxu0 %v2283
    %2309 = vmatpush.msra.mxu0 %v2281
    %2310 = vmatpush.msra.mxu0 %v2279
    %2311 = vmatpush.msra.mxu0 %v2277
    %2312 = vmatmul.f32.gmra.mxu0 %v2294
    %v2313 = vpop.f32.mrf.mxu0
    %v2314 = vadd.f32 0.0, %v2313
    %2315 = vdwg.mxu0
    %2316 = vmatpush.msra.mxu0 0.0
    %2317 = vmatpush.msra.mxu0 0.0
    %2318 = vmatpush.msra.mxu0 0.0
    %2319 = vmatpush.msra.mxu0 0.0
    %2320 = vmatpush.msra.mxu0 0.0
    %2321 = vmatpush.msra.mxu0 0.0
    %2322 = vmatpush.msra.mxu0 0.0
    %2323 = vmatpush.msra.mxu0 0.0
    %2324 = vmatpush.msra.mxu0 %v2292
    %2325 = vmatpush.msra.mxu0 %v2290
    %2326 = vmatpush.msra.mxu0 %v2288
    %2327 = vmatpush.msra.mxu0 %v2286
    %2328 = vmatpush.msra.mxu0 %v2284
    %2329 = vmatpush.msra.mxu0 %v2282
    %2330 = vmatpush.msra.mxu0 %v2280
    %2331 = vmatpush.msra.mxu0 %v2278
    %2332 = vmatmul.f32.gmra.mxu0 %v2294
    %v2333 = vpop.f32.mrf.mxu0
    %v2334 = vadd.f32 0.0, %v2333
    %2335 = vdwg.mxu0
    %v2336 = vperm.slane %v2314, 0
    %v2337 = vperm.slane %v2334, 0
    %v2338 = vsub.f32 %v2191, %v2336
    %v2339 = vsub.f32 %v2192, %v2337
    %v2340 = vmul.f32 %v2338, %v2338
    %v2341 = vmul.f32 %v2339, %v2339
    %v2342 = vsel %vm2193, %v2340, 0.0
    %v2343 = vrot.slane %v2342, 4
    %v2344 = vadd.f32 %v2342, %v2343
    %v2345 = vrot.slane %v2344, 2
    %v2346 = vadd.f32 %v2344, %v2345
    %v2347 = vrot.slane %v2346, 1
    %v2348 = vadd.f32 %v2346, %v2347
    %v2349 = vsel %vm2201, %v2341, 0.0
    %v2350 = vrot.slane %v2349, 4
    %v2351 = vadd.f32 %v2349, %v2350
    %v2352 = vrot.slane %v2351, 2
    %v2353 = vadd.f32 %v2351, %v2352
    %v2354 = vrot.slane %v2353, 1
    %v2355 = vadd.f32 %v2353, %v2354
    %v2357 = vsel %vm108, %v2355, 0
    %2359 = vmatpush.msra.mxu0 %v2224
    %2360 = vmatpush.msra.mxu0 %v2223
    %2361 = vmatpush.msra.mxu0 %v2222
    %2362 = vmatpush.msra.mxu0 %v2221
    %2363 = vmatpush.msra.mxu0 %v2220
    %2364 = vmatpush.msra.mxu0 %v2219
    %2365 = vmatpush.msra.mxu0 %v2218
    %2366 = vmatpush.msra.mxu0 %v2217
    %2367 = vmatpush.msra.mxu0 %v2216
    %2368 = vmatpush.msra.mxu0 %v2215
    %2369 = vmatpush.msra.mxu0 %v2214
    %2370 = vmatpush.msra.mxu0 %v2213
    %2371 = vmatpush.msra.mxu0 %v2212
    %2372 = vmatpush.msra.mxu0 %v2211
    %2373 = vmatpush.msra.mxu0 %v2210
    %2374 = vmatpush.msra.mxu0 %v2209
    %2375 = vmatmul.f32.gmra.mxu0 %v2348
    %v2376 = vpop.f32.mrf.mxu0
    %v2377 = vadd.f32 0.0, %v2376
    %2378 = vdwg.mxu0
    %2379 = vmatpush.msra.mxu0 0.0
    %2380 = vmatpush.msra.mxu0 0.0
    %2381 = vmatpush.msra.mxu0 0.0
    %2382 = vmatpush.msra.mxu0 0.0
    %2383 = vmatpush.msra.mxu0 0.0
    %2384 = vmatpush.msra.mxu0 0.0
    %2385 = vmatpush.msra.mxu0 0.0
    %2386 = vmatpush.msra.mxu0 0.0
    %2387 = vmatpush.msra.mxu0 %v2232
    %2388 = vmatpush.msra.mxu0 %v2231
    %2389 = vmatpush.msra.mxu0 %v2230
    %2390 = vmatpush.msra.mxu0 %v2229
    %2391 = vmatpush.msra.mxu0 %v2228
    %2392 = vmatpush.msra.mxu0 %v2227
    %2393 = vmatpush.msra.mxu0 %v2226
    %2394 = vmatpush.msra.mxu0 %v2225
    %2395 = vmatmul.f32.gmra.mxu0 %v2357
    %v2396 = vpop.f32.mrf.mxu0
    %v2397 = vadd.f32 %v2377, %v2396
    %2398 = vdwg.mxu0
    %v2399 = vmul.f32 %v2397, 0.055555556
    %v2400 = vld [vmem:[%s20] sm:$0x1]
    %v2401 = vadd.f32 %v2399, 1e-05
    %v2402 = vrsqrt.pop %v2401
    %v2403 = vmul.f32 %v2402, %v2401
    %v2404 = vmul.f32 %v2403, %v2402
    %v2405 = vmul.f32 0.5, %v2404
    %v2406 = vsub.f32 1.5, %v2405
    %v2407 = vmul.f32 %v2402, %v2406
    %vm2408 = vweird.f32 %v2401
    %vm2409 = vweird.f32 %v2402
    %vm2410 = vmor %vm2408, %vm2409
    %v2411 = vsel %vm2410, %v2402, %v2407
    %v2412 = vmul.f32 %v2400, %v2411
    %v2413 = vld [vmem:[%s21] sm:$0x1]
    %v2414 = vmul.f32 %v2276, %v2412
    %v2415 = vsub.f32 %v2413, %v2414
    %v2417 = vsel %vm108, %v2412, 0
    %2419 = vmatpush.msra.mxu0 0.0
    %2420 = vmatpush.msra.mxu0 0.0
    %2421 = vmatpush.msra.mxu0 0.0
    %2422 = vmatpush.msra.mxu0 0.0
    %2423 = vmatpush.msra.mxu0 0.0
    %2424 = vmatpush.msra.mxu0 0.0
    %2425 = vmatpush.msra.mxu0 0.0
    %2426 = vmatpush.msra.mxu0 0.0
    %2427 = vmatpush.msra.mxu0 %v2291
    %2428 = vmatpush.msra.mxu0 %v2289
    %2429 = vmatpush.msra.mxu0 %v2287
    %2430 = vmatpush.msra.mxu0 %v2285
    %2431 = vmatpush.msra.mxu0 %v2283
    %2432 = vmatpush.msra.mxu0 %v2281
    %2433 = vmatpush.msra.mxu0 %v2279
    %2434 = vmatpush.msra.mxu0 %v2277
    %2435 = vmatmul.f32.gmra.mxu0 %v2417
    %v2436 = vpop.f32.mrf.mxu0
    %v2437 = vadd.f32 0.0, %v2436
    %2438 = vdwg.mxu0
    %2439 = vmatpush.msra.mxu0 0.0
    %2440 = vmatpush.msra.mxu0 0.0
    %2441 = vmatpush.msra.mxu0 0.0
    %2442 = vmatpush.msra.mxu0 0.0
    %2443 = vmatpush.msra.mxu0 0.0
    %2444 = vmatpush.msra.mxu0 0.0
    %2445 = vmatpush.msra.mxu0 0.0
    %2446 = vmatpush.msra.mxu0 0.0
    %2447 = vmatpush.msra.mxu0 %v2292
    %2448 = vmatpush.msra.mxu0 %v2290
    %2449 = vmatpush.msra.mxu0 %v2288
    %2450 = vmatpush.msra.mxu0 %v2286
    %2451 = vmatpush.msra.mxu0 %v2284
    %2452 = vmatpush.msra.mxu0 %v2282
    %2453 = vmatpush.msra.mxu0 %v2280
    %2454 = vmatpush.msra.mxu0 %v2278
    %2455 = vmatmul.f32.gmra.mxu0 %v2417
    %v2456 = vpop.f32.mrf.mxu0
    %v2457 = vadd.f32 0.0, %v2456
    %2458 = vdwg.mxu0
    %v2459 = vperm.slane %v2437, 0
    %v2460 = vperm.slane %v2457, 0
    %v2461 = vmul.f32 %v2191, %v2459
    %v2462 = vmul.f32 %v2192, %v2460
    %v2464 = vsel %vm108, %v2415, 0
    %2466 = vmatpush.msra.mxu0 0.0
    %2467 = vmatpush.msra.mxu0 0.0
    %2468 = vmatpush.msra.mxu0 0.0
    %2469 = vmatpush.msra.mxu0 0.0
    %2470 = vmatpush.msra.mxu0 0.0
    %2471 = vmatpush.msra.mxu0 0.0
    %2472 = vmatpush.msra.mxu0 0.0
    %2473 = vmatpush.msra.mxu0 0.0
    %2474 = vmatpush.msra.mxu0 %v2291
    %2475 = vmatpush.msra.mxu0 %v2289
    %2476 = vmatpush.msra.mxu0 %v2287
    %2477 = vmatpush.msra.mxu0 %v2285
    %2478 = vmatpush.msra.mxu0 %v2283
    %2479 = vmatpush.msra.mxu0 %v2281
    %2480 = vmatpush.msra.mxu0 %v2279
    %2481 = vmatpush.msra.mxu0 %v2277
    %2482 = vmatmul.f32.gmra.mxu0 %v2464
    %v2483 = vpop.f32.mrf.mxu0
    %v2484 = vadd.f32 0.0, %v2483
    %2485 = vdwg.mxu0
    %2486 = vmatpush.msra.mxu0 0.0
    %2487 = vmatpush.msra.mxu0 0.0
    %2488 = vmatpush.msra.mxu0 0.0
    %2489 = vmatpush.msra.mxu0 0.0
    %2490 = vmatpush.msra.mxu0 0.0
    %2491 = vmatpush.msra.mxu0 0.0
    %2492 = vmatpush.msra.mxu0 0.0
    %2493 = vmatpush.msra.mxu0 0.0
    %2494 = vmatpush.msra.mxu0 %v2292
    %2495 = vmatpush.msra.mxu0 %v2290
    %2496 = vmatpush.msra.mxu0 %v2288
    %2497 = vmatpush.msra.mxu0 %v2286
    %2498 = vmatpush.msra.mxu0 %v2284
    %2499 = vmatpush.msra.mxu0 %v2282
    %2500 = vmatpush.msra.mxu0 %v2280
    %2501 = vmatpush.msra.mxu0 %v2278
    %2502 = vmatmul.f32.gmra.mxu0 %v2464
    %v2503 = vpop.f32.mrf.mxu0
    %v2504 = vadd.f32 0.0, %v2503
    %2505 = vdwg.mxu0
    %v2506 = vperm.slane %v2484, 0
    %v2507 = vperm.slane %v2504, 0
    %v2508 = vadd.f32 %v2461, %v2506
    %v2509 = vadd.f32 %v2462, %v2507
    %vm2510 = vcmp.ge.f32.partialorder %v2508, 0.0
    %vm2511 = vcmp.ge.f32.partialorder %v2509, 0.0
    %v2512 = vmul.f32 %v2508, 0.2
    %v2513 = vmul.f32 %v2509, 0.2
    %v2514 = vsel %vm2510, %v2508, %v2512
    %v2515 = vsel %vm2511, %v2509, %v2513
    %v2516 = vld [vmem:[%s22] sm:$0x3]
    %v2517 = vpack.c.bf16 %v2514, %v2514
    %v2518 = vpack.c.bf16 %v2515, %v2515
    %vm2519 = vcmask 48128
    %v2521 = vsel %vm2519, %v2516, 0
    %vm2523 = vcmask 1042432
    %v2525 = vsel %vm2523, %v2517, 0
    %v2528 = vsel %vm2523, %v2518, 0
    %2530 = vmatpush.bf16.msra.mxu0 0
    %2531 = vmatpush.bf16.msra.mxu0 0
    %2532 = vmatpush.bf16.msra.mxu0 0
    %2533 = vmatpush.bf16.msra.mxu0 0
    %2534 = vmatpush.bf16.msra.mxu0 0
    %2535 = vmatpush.bf16.msra.mxu0 0
    %2536 = vmatpush.bf16.msra.mxu0 0
    %2537 = vmatpush.bf16.msra.mxu0 %v2525
    %2538 = vmatmul.bf16.gmra.mxu0 %v2521
    %v2539 = vpop.f32.mrf.mxu0
    %v2540 = vadd.f32 0.0, %v2539
    %v2541 = vpop.f32.mrf.mxu0
    %2542 = vdwg.mxu0
    %2543 = vmatpush.bf16.msra.mxu0 0
    %2544 = vmatpush.bf16.msra.mxu0 0
    %2545 = vmatpush.bf16.msra.mxu0 0
    %2546 = vmatpush.bf16.msra.mxu0 0
    %2547 = vmatpush.bf16.msra.mxu0 0
    %2548 = vmatpush.bf16.msra.mxu0 0
    %2549 = vmatpush.bf16.msra.mxu0 0
    %2550 = vmatpush.bf16.msra.mxu0 %v2528
    %2551 = vmatmul.bf16.gmra.mxu0 %v2521
    %v2552 = vpop.f32.mrf.mxu0
    %v2553 = vadd.f32 0.0, %v2552
    %v2554 = vpop.f32.mrf.mxu0
    %2555 = vdwg.mxu0
    %v2556 = vld [vmem:[%s23] sm:$0xf]
    %v2557 = vld [vmem:[%s23 + $0x4] sm:$0xf]
    %v2558 = vld [vmem:[%s23 + $0x8] sm:$0xf]
    %v2559 = vld [vmem:[%s23 + $0xc] sm:$0xf]
    %v2560 = vld [vmem:[%s23 + $0x10] sm:$0xf]
    %v2561 = vld [vmem:[%s23 + $0x14] sm:$0xf]
    %v2562 = vld [vmem:[%s23 + $0x18] sm:$0xf]
    %v2563 = vld [vmem:[%s23 + $0x1c] sm:$0xf]
    %v2564 = vld [vmem:[%s23 + $0x20] sm:$0xf]
    %v2565 = vld [vmem:[%s23 + $0x24] sm:$0xf]
    %v2566 = vld [vmem:[%s23 + $0x28] sm:$0xf]
    %v2567 = vld [vmem:[%s23 + $0x2c] sm:$0xf]
    %v2568 = vld [vmem:[%s23 + $0x30] sm:$0xf]
    %v2569 = vld [vmem:[%s23 + $0x34] sm:$0xf]
    %v2570 = vld [vmem:[%s23 + $0x38] sm:$0xf]
    %v2571 = vld [vmem:[%s23 + $0x3c] sm:$0xf]
    %v2572 = vld [vmem:[%s23 + $0x40] sm:$0xf]
    %v2573 = vld [vmem:[%s23 + $0x44] sm:$0xf]
    %v2574 = vld [vmem:[%s23 + $0x48] sm:$0xf]
    %v2575 = vld [vmem:[%s23 + $0x4c] sm:$0xf]
    %v2576 = vld [vmem:[%s23 + $0x50] sm:$0xf]
    %v2577 = vld [vmem:[%s23 + $0x54] sm:$0xf]
    %v2578 = vld [vmem:[%s23 + $0x58] sm:$0xf]
    %v2579 = vld [vmem:[%s23 + $0x5c] sm:$0xf]
    %v2580 = vpack.c.bf16 %v2540, %v2540
    %v2581 = vpack.c.bf16 %v2553, %v2553
    %s2582 = scalar_lea.vmem %s22, 2
    %v2583 = vld [vmem:[%s2582] sm:$0x3]
    %v2585 = vsel %vm2519, %v2583, 0
    %2587 = vmatpush.bf16.msra.mxu0 0
    %2588 = vmatpush.bf16.msra.mxu0 0
    %2589 = vmatpush.bf16.msra.mxu0 0
    %2590 = vmatpush.bf16.msra.mxu0 0
    %2591 = vmatpush.bf16.msra.mxu0 0
    %2592 = vmatpush.bf16.msra.mxu0 0
    %2593 = vmatpush.bf16.msra.mxu0 0
    %2594 = vmatpush.bf16.msra.mxu0 %v2525
    %2595 = vmatmul.bf16.gmra.mxu0 %v2585
    %v2596 = vpop.f32.mrf.mxu0
    %v2597 = vadd.f32 0.0, %v2596
    %v2598 = vpop.f32.mrf.mxu0
    %2599 = vdwg.mxu0
    %2600 = vmatpush.bf16.msra.mxu0 0
    %2601 = vmatpush.bf16.msra.mxu0 0
    %2602 = vmatpush.bf16.msra.mxu0 0
    %2603 = vmatpush.bf16.msra.mxu0 0
    %2604 = vmatpush.bf16.msra.mxu0 0
    %2605 = vmatpush.bf16.msra.mxu0 0
    %2606 = vmatpush.bf16.msra.mxu0 0
    %2607 = vmatpush.bf16.msra.mxu0 %v2528
    %2608 = vmatmul.bf16.gmra.mxu0 %v2585
    %v2609 = vpop.f32.mrf.mxu0
    %v2610 = vadd.f32 0.0, %v2609
    %v2611 = vpop.f32.mrf.mxu0
    %2612 = vdwg.mxu0
    %s2613 = scalar_lea.vmem %s23, 96
    %v2614 = vld [vmem:[%s2613] sm:$0xf]
    %v2615 = vld [vmem:[%s2613 + $0x4] sm:$0xf]
    %v2616 = vld [vmem:[%s2613 + $0x8] sm:$0xf]
    %v2617 = vld [vmem:[%s2613 + $0xc] sm:$0xf]
    %v2618 = vld [vmem:[%s2613 + $0x10] sm:$0xf]
    %v2619 = vld [vmem:[%s2613 + $0x14] sm:$0xf]
    %v2620 = vld [vmem:[%s2613 + $0x18] sm:$0xf]
    %v2621 = vld [vmem:[%s2613 + $0x1c] sm:$0xf]
    %v2622 = vld [vmem:[%s2613 + $0x20] sm:$0xf]
    %v2623 = vld [vmem:[%s2613 + $0x24] sm:$0xf]
    %v2624 = vld [vmem:[%s2613 + $0x28] sm:$0xf]
    %v2625 = vld [vmem:[%s2613 + $0x2c] sm:$0xf]
    %v2626 = vld [vmem:[%s2613 + $0x30] sm:$0xf]
    %v2627 = vld [vmem:[%s2613 + $0x34] sm:$0xf]
    %v2628 = vld [vmem:[%s2613 + $0x38] sm:$0xf]
    %v2629 = vld [vmem:[%s2613 + $0x3c] sm:$0xf]
    %v2630 = vld [vmem:[%s2613 + $0x40] sm:$0xf]
    %v2631 = vld [vmem:[%s2613 + $0x44] sm:$0xf]
    %v2632 = vld [vmem:[%s2613 + $0x48] sm:$0xf]
    %v2633 = vld [vmem:[%s2613 + $0x4c] sm:$0xf]
    %v2634 = vld [vmem:[%s2613 + $0x50] sm:$0xf]
    %v2635 = vld [vmem:[%s2613 + $0x54] sm:$0xf]
    %v2636 = vld [vmem:[%s2613 + $0x58] sm:$0xf]
    %v2637 = vld [vmem:[%s2613 + $0x5c] sm:$0xf]
    %v2638 = vpack.c.bf16 %v2597, %v2597
    %v2639 = vpack.c.bf16 %v2610, %v2610
    %v2664 = vunpack.c.l.b16 %v2614
    %v2665 = vunpack.c.l.b16 %v2615
    %v2666 = vunpack.c.l.b16 %v2616
    %v2667 = vunpack.c.l.b16 %v2617
    %v2668 = vunpack.c.l.b16 %v2618
    %v2669 = vunpack.c.l.b16 %v2619
    %v2670 = vunpack.c.l.b16 %v2620
    %v2671 = vunpack.c.l.b16 %v2621
    %v2672 = vunpack.c.l.b16 %v2622
    %v2673 = vunpack.c.l.b16 %v2623
    %v2674 = vunpack.c.l.b16 %v2624
    %v2675 = vunpack.c.l.b16 %v2625
    %v2676 = vunpack.c.l.b16 %v2626
    %v2677 = vunpack.c.l.b16 %v2627
    %v2678 = vunpack.c.l.b16 %v2628
    %v2679 = vunpack.c.l.b16 %v2629
    %v2680 = vunpack.c.l.b16 %v2630
    %v2681 = vunpack.c.l.b16 %v2631
    %v2682 = vunpack.c.l.b16 %v2632
    %v2683 = vunpack.c.l.b16 %v2633
    %v2684 = vunpack.c.l.b16 %v2634
    %v2685 = vunpack.c.l.b16 %v2635
    %v2686 = vunpack.c.l.b16 %v2636
    %v2687 = vunpack.c.l.b16 %v2637
    %v2688 = vpack.c.b16 %v2665, %v2664
    %v2689 = vpack.c.b16 %v2667, %v2666
    %v2690 = vpack.c.b16 %v2669, %v2668
    %v2691 = vpack.c.b16 %v2671, %v2670
    %v2692 = vpack.c.b16 %v2673, %v2672
    %v2693 = vpack.c.b16 %v2675, %v2674
    %v2694 = vpack.c.b16 %v2677, %v2676
    %v2695 = vpack.c.b16 %v2679, %v2678
    %v2696 = vpack.c.b16 %v2681, %v2680
    %v2697 = vpack.c.b16 %v2683, %v2682
    %v2698 = vpack.c.b16 %v2685, %v2684
    %v2699 = vpack.c.b16 %v2687, %v2686
    %v2713 = vsel %vm108, %v2639, 0
    %2715 = vmatpush.bf16.msra.mxu0 %v2695
    %2716 = vmatpush.bf16.msra.mxu0 %v2694
    %2717 = vmatpush.bf16.msra.mxu0 %v2693
    %2718 = vmatpush.bf16.msra.mxu0 %v2692
    %2719 = vmatpush.bf16.msra.mxu0 %v2691
    %2720 = vmatpush.bf16.msra.mxu0 %v2690
    %2721 = vmatpush.bf16.msra.mxu0 %v2689
    %2722 = vmatpush.bf16.msra.mxu0 %v2688
    %2723 = vmatmul.bf16.gmra.mxu0 %v2638
    %v2724 = vpop.f32.mrf.mxu0
    %v2725 = vadd.f32 0.0, %v2724
    %v2726 = vpop.f32.mrf.mxu0
    %2727 = vdwg.mxu0
    %2728 = vmatpush.bf16.msra.mxu0 0
    %2729 = vmatpush.bf16.msra.mxu0 0
    %2730 = vmatpush.bf16.msra.mxu0 0
    %2731 = vmatpush.bf16.msra.mxu0 0
    %2732 = vmatpush.bf16.msra.mxu0 %v2699
    %2733 = vmatpush.bf16.msra.mxu0 %v2698
    %2734 = vmatpush.bf16.msra.mxu0 %v2697
    %2735 = vmatpush.bf16.msra.mxu0 %v2696
    %2736 = vmatmul.bf16.gmra.mxu0 %v2713
    %v2737 = vpop.f32.mrf.mxu0
    %v2738 = vadd.f32 %v2725, %v2737
    %v2739 = vpop.f32.mrf.mxu0
    %2740 = vdwg.mxu0
    %v2765 = vunpack.c.l.b16 %v2556
    %v2766 = vunpack.c.l.b16 %v2557
    %v2767 = vunpack.c.l.b16 %v2558
    %v2768 = vunpack.c.l.b16 %v2559
    %v2769 = vunpack.c.l.b16 %v2560
    %v2770 = vunpack.c.l.b16 %v2561
    %v2771 = vunpack.c.l.b16 %v2562
    %v2772 = vunpack.c.l.b16 %v2563
    %v2773 = vunpack.c.l.b16 %v2564
    %v2774 = vunpack.c.l.b16 %v2565
    %v2775 = vunpack.c.l.b16 %v2566
    %v2776 = vunpack.c.l.b16 %v2567
    %v2777 = vunpack.c.l.b16 %v2568
    %v2778 = vunpack.c.l.b16 %v2569
    %v2779 = vunpack.c.l.b16 %v2570
    %v2780 = vunpack.c.l.b16 %v2571
    %v2781 = vunpack.c.l.b16 %v2572
    %v2782 = vunpack.c.l.b16 %v2573
    %v2783 = vunpack.c.l.b16 %v2574
    %v2784 = vunpack.c.l.b16 %v2575
    %v2785 = vunpack.c.l.b16 %v2576
    %v2786 = vunpack.c.l.b16 %v2577
    %v2787 = vunpack.c.l.b16 %v2578
    %v2788 = vunpack.c.l.b16 %v2579
    %v2789 = vpack.c.b16 %v2766, %v2765
    %v2790 = vpack.c.b16 %v2768, %v2767
    %v2791 = vpack.c.b16 %v2770, %v2769
    %v2792 = vpack.c.b16 %v2772, %v2771
    %v2793 = vpack.c.b16 %v2774, %v2773
    %v2794 = vpack.c.b16 %v2776, %v2775
    %v2795 = vpack.c.b16 %v2778, %v2777
    %v2796 = vpack.c.b16 %v2780, %v2779
    %v2797 = vpack.c.b16 %v2782, %v2781
    %v2798 = vpack.c.b16 %v2784, %v2783
    %v2799 = vpack.c.b16 %v2786, %v2785
    %v2800 = vpack.c.b16 %v2788, %v2787
    %v2814 = vsel %vm108, %v2581, 0
    %2816 = vmatpush.bf16.msra.mxu0 %v2796
    %2817 = vmatpush.bf16.msra.mxu0 %v2795
    %2818 = vmatpush.bf16.msra.mxu0 %v2794
    %2819 = vmatpush.bf16.msra.mxu0 %v2793
    %2820 = vmatpush.bf16.msra.mxu0 %v2792
    %2821 = vmatpush.bf16.msra.mxu0 %v2791
    %2822 = vmatpush.bf16.msra.mxu0 %v2790
    %2823 = vmatpush.bf16.msra.mxu0 %v2789
    %2824 = vmatmul.bf16.gmra.mxu0 %v2580
    %v2825 = vpop.f32.mrf.mxu0
    %v2826 = vadd.f32 %v2738, %v2825
    %v2827 = vpop.f32.mrf.mxu0
    %2828 = vdwg.mxu0
    %2829 = vmatpush.bf16.msra.mxu0 0
    %2830 = vmatpush.bf16.msra.mxu0 0
    %2831 = vmatpush.bf16.msra.mxu0 0
    %2832 = vmatpush.bf16.msra.mxu0 0
    %2833 = vmatpush.bf16.msra.mxu0 %v2800
    %2834 = vmatpush.bf16.msra.mxu0 %v2799
    %2835 = vmatpush.bf16.msra.mxu0 %v2798
    %2836 = vmatpush.bf16.msra.mxu0 %v2797
    %2837 = vmatmul.bf16.gmra.mxu0 %v2814
    %v2838 = vpop.f32.mrf.mxu0
    %v2839 = vadd.f32 %v2826, %v2838
    %v2840 = vpop.f32.mrf.mxu0
    %2841 = vdwg.mxu0
    %s2842 = scalar_lea.vmem %s22, 4
    %v2843 = vld [vmem:[%s2842] sm:$0x3]
    %v2845 = vsel %vm2519, %v2843, 0
    %2847 = vmatpush.bf16.msra.mxu0 0
    %2848 = vmatpush.bf16.msra.mxu0 0
    %2849 = vmatpush.bf16.msra.mxu0 0
    %2850 = vmatpush.bf16.msra.mxu0 0
    %2851 = vmatpush.bf16.msra.mxu0 0
    %2852 = vmatpush.bf16.msra.mxu0 0
    %2853 = vmatpush.bf16.msra.mxu0 0
    %2854 = vmatpush.bf16.msra.mxu0 %v2525
    %2855 = vmatmul.bf16.gmra.mxu0 %v2845
    %v2856 = vpop.f32.mrf.mxu0
    %v2857 = vadd.f32 0.0, %v2856
    %v2858 = vpop.f32.mrf.mxu0
    %2859 = vdwg.mxu0
    %2860 = vmatpush.bf16.msra.mxu0 0
    %2861 = vmatpush.bf16.msra.mxu0 0
    %2862 = vmatpush.bf16.msra.mxu0 0
    %2863 = vmatpush.bf16.msra.mxu0 0
    %2864 = vmatpush.bf16.msra.mxu0 0
    %2865 = vmatpush.bf16.msra.mxu0 0
    %2866 = vmatpush.bf16.msra.mxu0 0
    %2867 = vmatpush.bf16.msra.mxu0 %v2528
    %2868 = vmatmul.bf16.gmra.mxu0 %v2845
    %v2869 = vpop.f32.mrf.mxu0
    %v2870 = vadd.f32 0.0, %v2869
    %v2871 = vpop.f32.mrf.mxu0
    %2872 = vdwg.mxu0
    %s2873 = scalar_lea.vmem %s23, 192
    %v2874 = vld [vmem:[%s2873] sm:$0xf]
    %v2875 = vld [vmem:[%s2873 + $0x4] sm:$0xf]
    %v2876 = vld [vmem:[%s2873 + $0x8] sm:$0xf]
    %v2877 = vld [vmem:[%s2873 + $0xc] sm:$0xf]
    %v2878 = vld [vmem:[%s2873 + $0x10] sm:$0xf]
    %v2879 = vld [vmem:[%s2873 + $0x14] sm:$0xf]
    %v2880 = vld [vmem:[%s2873 + $0x18] sm:$0xf]
    %v2881 = vld [vmem:[%s2873 + $0x1c] sm:$0xf]
    %v2882 = vld [vmem:[%s2873 + $0x20] sm:$0xf]
    %v2883 = vld [vmem:[%s2873 + $0x24] sm:$0xf]
    %v2884 = vld [vmem:[%s2873 + $0x28] sm:$0xf]
    %v2885 = vld [vmem:[%s2873 + $0x2c] sm:$0xf]
    %v2886 = vld [vmem:[%s2873 + $0x30] sm:$0xf]
    %v2887 = vld [vmem:[%s2873 + $0x34] sm:$0xf]
    %v2888 = vld [vmem:[%s2873 + $0x38] sm:$0xf]
    %v2889 = vld [vmem:[%s2873 + $0x3c] sm:$0xf]
    %v2890 = vld [vmem:[%s2873 + $0x40] sm:$0xf]
    %v2891 = vld [vmem:[%s2873 + $0x44] sm:$0xf]
    %v2892 = vld [vmem:[%s2873 + $0x48] sm:$0xf]
    %v2893 = vld [vmem:[%s2873 + $0x4c] sm:$0xf]
    %v2894 = vld [vmem:[%s2873 + $0x50] sm:$0xf]
    %v2895 = vld [vmem:[%s2873 + $0x54] sm:$0xf]
    %v2896 = vld [vmem:[%s2873 + $0x58] sm:$0xf]
    %v2897 = vld [vmem:[%s2873 + $0x5c] sm:$0xf]
    %v2898 = vpack.c.bf16 %v2857, %v2857
    %v2899 = vpack.c.bf16 %v2870, %v2870
    %v2924 = vunpack.c.l.b16 %v2874
    %v2925 = vunpack.c.l.b16 %v2875
    %v2926 = vunpack.c.l.b16 %v2876
    %v2927 = vunpack.c.l.b16 %v2877
    %v2928 = vunpack.c.l.b16 %v2878
    %v2929 = vunpack.c.l.b16 %v2879
    %v2930 = vunpack.c.l.b16 %v2880
    %v2931 = vunpack.c.l.b16 %v2881
    %v2932 = vunpack.c.l.b16 %v2882
    %v2933 = vunpack.c.l.b16 %v2883
    %v2934 = vunpack.c.l.b16 %v2884
    %v2935 = vunpack.c.l.b16 %v2885
    %v2936 = vunpack.c.l.b16 %v2886
    %v2937 = vunpack.c.l.b16 %v2887
    %v2938 = vunpack.c.l.b16 %v2888
    %v2939 = vunpack.c.l.b16 %v2889
    %v2940 = vunpack.c.l.b16 %v2890
    %v2941 = vunpack.c.l.b16 %v2891
    %v2942 = vunpack.c.l.b16 %v2892
    %v2943 = vunpack.c.l.b16 %v2893
    %v2944 = vunpack.c.l.b16 %v2894
    %v2945 = vunpack.c.l.b16 %v2895
    %v2946 = vunpack.c.l.b16 %v2896
    %v2947 = vunpack.c.l.b16 %v2897
    %v2948 = vpack.c.b16 %v2925, %v2924
    %v2949 = vpack.c.b16 %v2927, %v2926
    %v2950 = vpack.c.b16 %v2929, %v2928
    %v2951 = vpack.c.b16 %v2931, %v2930
    %v2952 = vpack.c.b16 %v2933, %v2932
    %v2953 = vpack.c.b16 %v2935, %v2934
    %v2954 = vpack.c.b16 %v2937, %v2936
    %v2955 = vpack.c.b16 %v2939, %v2938
    %v2956 = vpack.c.b16 %v2941, %v2940
    %v2957 = vpack.c.b16 %v2943, %v2942
    %v2958 = vpack.c.b16 %v2945, %v2944
    %v2959 = vpack.c.b16 %v2947, %v2946
    %v2973 = vsel %vm108, %v2899, 0
    %2975 = vmatpush.bf16.msra.mxu0 %v2955
    %2976 = vmatpush.bf16.msra.mxu0 %v2954
    %2977 = vmatpush.bf16.msra.mxu0 %v2953
    %2978 = vmatpush.bf16.msra.mxu0 %v2952
    %2979 = vmatpush.bf16.msra.mxu0 %v2951
    %2980 = vmatpush.bf16.msra.mxu0 %v2950
    %2981 = vmatpush.bf16.msra.mxu0 %v2949
    %2982 = vmatpush.bf16.msra.mxu0 %v2948
    %2983 = vmatmul.bf16.gmra.mxu0 %v2898
    %v2984 = vpop.f32.mrf.mxu0
    %v2985 = vadd.f32 0.0, %v2984
    %v2986 = vpop.f32.mrf.mxu0
    %2987 = vdwg.mxu0
    %2988 = vmatpush.bf16.msra.mxu0 0
    %2989 = vmatpush.bf16.msra.mxu0 0
    %2990 = vmatpush.bf16.msra.mxu0 0
    %2991 = vmatpush.bf16.msra.mxu0 0
    %2992 = vmatpush.bf16.msra.mxu0 %v2959
    %2993 = vmatpush.bf16.msra.mxu0 %v2958
    %2994 = vmatpush.bf16.msra.mxu0 %v2957
    %2995 = vmatpush.bf16.msra.mxu0 %v2956
    %2996 = vmatmul.bf16.gmra.mxu0 %v2973
    %v2997 = vpop.f32.mrf.mxu0
    %v2998 = vadd.f32 %v2985, %v2997
    %v2999 = vpop.f32.mrf.mxu0
    %3000 = vdwg.mxu0
    %v3001 = vadd.f32 %v2839, %v2998
    %s3002 = scalar_lea.vmem %s22, 6
    %v3003 = vld [vmem:[%s3002] sm:$0x3]
    %v3005 = vsel %vm2519, %v3003, 0
    %3007 = vmatpush.bf16.msra.mxu0 0
    %3008 = vmatpush.bf16.msra.mxu0 0
    %3009 = vmatpush.bf16.msra.mxu0 0
    %3010 = vmatpush.bf16.msra.mxu0 0
    %3011 = vmatpush.bf16.msra.mxu0 0
    %3012 = vmatpush.bf16.msra.mxu0 0
    %3013 = vmatpush.bf16.msra.mxu0 0
    %3014 = vmatpush.bf16.msra.mxu0 %v2525
    %3015 = vmatmul.bf16.gmra.mxu0 %v3005
    %v3016 = vpop.f32.mrf.mxu0
    %v3017 = vadd.f32 0.0, %v3016
    %v3018 = vpop.f32.mrf.mxu0
    %3019 = vdwg.mxu0
    %3020 = vmatpush.bf16.msra.mxu0 0
    %3021 = vmatpush.bf16.msra.mxu0 0
    %3022 = vmatpush.bf16.msra.mxu0 0
    %3023 = vmatpush.bf16.msra.mxu0 0
    %3024 = vmatpush.bf16.msra.mxu0 0
    %3025 = vmatpush.bf16.msra.mxu0 0
    %3026 = vmatpush.bf16.msra.mxu0 0
    %3027 = vmatpush.bf16.msra.mxu0 %v2528
    %3028 = vmatmul.bf16.gmra.mxu0 %v3005
    %v3029 = vpop.f32.mrf.mxu0
    %v3030 = vadd.f32 0.0, %v3029
    %v3031 = vpop.f32.mrf.mxu0
    %3032 = vdwg.mxu0
    %s3033 = scalar_lea.vmem %s23, 288
    %v3034 = vld [vmem:[%s3033] sm:$0xf]
    %v3035 = vld [vmem:[%s3033 + $0x4] sm:$0xf]
    %v3036 = vld [vmem:[%s3033 + $0x8] sm:$0xf]
    %v3037 = vld [vmem:[%s3033 + $0xc] sm:$0xf]
    %v3038 = vld [vmem:[%s3033 + $0x10] sm:$0xf]
    %v3039 = vld [vmem:[%s3033 + $0x14] sm:$0xf]
    %v3040 = vld [vmem:[%s3033 + $0x18] sm:$0xf]
    %v3041 = vld [vmem:[%s3033 + $0x1c] sm:$0xf]
    %v3042 = vld [vmem:[%s3033 + $0x20] sm:$0xf]
    %v3043 = vld [vmem:[%s3033 + $0x24] sm:$0xf]
    %v3044 = vld [vmem:[%s3033 + $0x28] sm:$0xf]
    %v3045 = vld [vmem:[%s3033 + $0x2c] sm:$0xf]
    %v3046 = vld [vmem:[%s3033 + $0x30] sm:$0xf]
    %v3047 = vld [vmem:[%s3033 + $0x34] sm:$0xf]
    %v3048 = vld [vmem:[%s3033 + $0x38] sm:$0xf]
    %v3049 = vld [vmem:[%s3033 + $0x3c] sm:$0xf]
    %v3050 = vld [vmem:[%s3033 + $0x40] sm:$0xf]
    %v3051 = vld [vmem:[%s3033 + $0x44] sm:$0xf]
    %v3052 = vld [vmem:[%s3033 + $0x48] sm:$0xf]
    %v3053 = vld [vmem:[%s3033 + $0x4c] sm:$0xf]
    %v3054 = vld [vmem:[%s3033 + $0x50] sm:$0xf]
    %v3055 = vld [vmem:[%s3033 + $0x54] sm:$0xf]
    %v3056 = vld [vmem:[%s3033 + $0x58] sm:$0xf]
    %v3057 = vld [vmem:[%s3033 + $0x5c] sm:$0xf]
    %v3058 = vpack.c.bf16 %v3017, %v3017
    %v3059 = vpack.c.bf16 %v3030, %v3030
    %v3084 = vunpack.c.l.b16 %v3034
    %v3085 = vunpack.c.l.b16 %v3035
    %v3086 = vunpack.c.l.b16 %v3036
    %v3087 = vunpack.c.l.b16 %v3037
    %v3088 = vunpack.c.l.b16 %v3038
    %v3089 = vunpack.c.l.b16 %v3039
    %v3090 = vunpack.c.l.b16 %v3040
    %v3091 = vunpack.c.l.b16 %v3041
    %v3092 = vunpack.c.l.b16 %v3042
    %v3093 = vunpack.c.l.b16 %v3043
    %v3094 = vunpack.c.l.b16 %v3044
    %v3095 = vunpack.c.l.b16 %v3045
    %v3096 = vunpack.c.l.b16 %v3046
    %v3097 = vunpack.c.l.b16 %v3047
    %v3098 = vunpack.c.l.b16 %v3048
    %v3099 = vunpack.c.l.b16 %v3049
    %v3100 = vunpack.c.l.b16 %v3050
    %v3101 = vunpack.c.l.b16 %v3051
    %v3102 = vunpack.c.l.b16 %v3052
    %v3103 = vunpack.c.l.b16 %v3053
    %v3104 = vunpack.c.l.b16 %v3054
    %v3105 = vunpack.c.l.b16 %v3055
    %v3106 = vunpack.c.l.b16 %v3056
    %v3107 = vunpack.c.l.b16 %v3057
    %v3108 = vpack.c.b16 %v3085, %v3084
    %v3109 = vpack.c.b16 %v3087, %v3086
    %v3110 = vpack.c.b16 %v3089, %v3088
    %v3111 = vpack.c.b16 %v3091, %v3090
    %v3112 = vpack.c.b16 %v3093, %v3092
    %v3113 = vpack.c.b16 %v3095, %v3094
    %v3114 = vpack.c.b16 %v3097, %v3096
    %v3115 = vpack.c.b16 %v3099, %v3098
    %v3116 = vpack.c.b16 %v3101, %v3100
    %v3117 = vpack.c.b16 %v3103, %v3102
    %v3118 = vpack.c.b16 %v3105, %v3104
    %v3119 = vpack.c.b16 %v3107, %v3106
    %v3133 = vsel %vm108, %v3059, 0
    %3135 = vmatpush.bf16.msra.mxu0 %v3115
    %3136 = vmatpush.bf16.msra.mxu0 %v3114
    %3137 = vmatpush.bf16.msra.mxu0 %v3113
    %3138 = vmatpush.bf16.msra.mxu0 %v3112
    %3139 = vmatpush.bf16.msra.mxu0 %v3111
    %3140 = vmatpush.bf16.msra.mxu0 %v3110
    %3141 = vmatpush.bf16.msra.mxu0 %v3109
    %3142 = vmatpush.bf16.msra.mxu0 %v3108
    %3143 = vmatmul.bf16.gmra.mxu0 %v3058
    %v3144 = vpop.f32.mrf.mxu0
    %v3145 = vadd.f32 0.0, %v3144
    %v3146 = vpop.f32.mrf.mxu0
    %3147 = vdwg.mxu0
    %3148 = vmatpush.bf16.msra.mxu0 0
    %3149 = vmatpush.bf16.msra.mxu0 0
    %3150 = vmatpush.bf16.msra.mxu0 0
    %3151 = vmatpush.bf16.msra.mxu0 0
    %3152 = vmatpush.bf16.msra.mxu0 %v3119
    %3153 = vmatpush.bf16.msra.mxu0 %v3118
    %3154 = vmatpush.bf16.msra.mxu0 %v3117
    %3155 = vmatpush.bf16.msra.mxu0 %v3116
    %3156 = vmatmul.bf16.gmra.mxu0 %v3133
    %v3157 = vpop.f32.mrf.mxu0
    %v3158 = vadd.f32 %v3145, %v3157
    %v3159 = vpop.f32.mrf.mxu0
    %3160 = vdwg.mxu0
    %v3161 = vadd.f32 %v3001, %v3158
    %v3162 = vld [vmem:[%s24] sm:$0x1]
    %v3164 = vperm.slane %v3162, 0
    %v3166 = vadd.f32 %v3161, %v3164
    %vm3167 = vcmask 11264
    %3168 = vst.msk [vmem:[#allocation2] sm:$0xf] %vm3167, %v3166
    // Predicated region
    $region102: #{_forward.1} parent=1 // pred_check
      _
    $region103: #{_forward.1} parent=1 // pred_check_branch
      %3170 = sbr.rel (0) target = $region105
    $region104: #{_forward.1} parent=1 // pred_region
      %3172 = vsyncadd [#allocation3], 0
      %s3174 = sshll.u32 [#allocation2], 4
      %s3175 = int_to_ptr.vmem [resolvable:$true] %s3174
      %s3176 = sshll.u32 %s25, 4
      %s3177 = int_to_ptr.hbm [resolvable:$true] %s3176
      %3179 = dma.vmem_to_hbm [thread:$0]  %s3175, 64, %s3177, [#allocation3]
    $region105: #{_forward.1} parent=1 // pred_fallthru
      _
    // Predicated region
    $region106: #{_forward.1} parent=1 // pred_check
      _
    $region107: #{_forward.1} parent=1 // pred_check_branch
      %3181 = sbr.rel (0) target = $region109
    $region108: #{_forward.1} parent=1 // pred_region
      %3183 = dma.done [#allocation3], 64
    $region109: #{_forward.1} parent=1 // pred_fallthru
      _
    %3184 = vsyncpa [#allocation3], 1

</llo_original>
